<compile_context>
chip_gen: v7x
topology: tpu7x:2x2x1
jax: 0.10.0
libtpu: 0.0.40
codegen_flags: <defaults>
</compile_context>

<pallas_src>
import functools

import jax
import jax.numpy as jnp
import numpy as np
from jax import lax
from jax.experimental import pallas as pl
from jax.experimental.pallas import tpu as pltpu

VMEM = pltpu.MemorySpace.VMEM
SMEM = pltpu.MemorySpace.SMEM


# ----------------------------------------------------------------------------
# Fused Pallas kernel
# ----------------------------------------------------------------------------
def _fused_forward_kernel(*refs, num_layers, heads, edge_feats, layer_channels,
                          w1_offsets):
    """Entire GNNResModel forward.

    refs layout (inputs..., out_ref):
      [0]  coeff      (SMEM)  flat [L*Fe*H]   edge-attention coefficients
      [1]  x          (VMEM)  [N, Fin]
      [2]  adj        (VMEM)  [N, N]       1.0 where edge src->tgt (incl self loops)
      [3]  a_norm     (VMEM)  [N, N]       GCN-normalized adjacency
      [4]  pool       (VMEM)  [G, N]       global_mean_pool matrix
      [5]  dense_ea   (VMEM)  [Fe, N, N]   dense per-feature edge-attr maps
      per GAT layer (3 refs): W_aug [Fin_l, H*C+H], att_src_blk [H, H*C], bias [1, C]
      GCN:  Wg [C, Cg], bg [1, Cg]
      FCN:  W1 [d_cat, F1], bn_pack [3, F1] (b1/gamma/beta), W2, b2, Wd, bd
      last: out_ref [G, T]
    """
    coeff_ref = refs[0]
    x_ref, adj_ref, anorm_ref, pool_ref, ea_ref = refs[1:6]
    li = 6
    gcn_i = li + 3 * num_layers
    fcn_i = gcn_i + 2
    wg_ref, bg_ref = refs[gcn_i], refs[gcn_i + 1]
    w1_ref, bn_ref, w2_ref, b2_ref, wd_ref, bd_ref = refs[fcn_i:fcn_i + 6]
    out_ref = refs[-1]

    x = x_ref[...]
    adj = adj_ref[...]
    neg = jnp.float32(-1e30)

    # Dense edge-attribute slabs: loaded once, reused by every layer/head.
    ea_slabs = [ea_ref[f] for f in range(edge_feats)]          # each [N, N]

    bn = bn_ref[...]                                           # rows: b1, gamma, beta
    b1, gamma, beta = bn[0:1, :], bn[1:2, :], bn[2:3, :]

    def w1_block(i):                                           # static sublane-aligned slice
        o0, o1 = w1_offsets[i], w1_offsets[i + 1]
        return w1_ref[pl.ds(o0, o1 - o0), :]

    # First FCN Linear accumulator: the feature concat is folded here; each block's
    # partial product is added as soon as that block is produced (no live each_step).
    h1 = jnp.dot(x, w1_block(0), preferred_element_type=jnp.float32) + b1

    h = x
    for l in range(num_layers):
        w_ref, asrc_ref, bias_ref = refs[li + 3 * l: li + 3 * l + 3]
        c = layer_channels[l]
        hc = heads * c

        # One matmul for all heads; the att_dst projection is folded into W_aug's
        # trailing H columns, so xp_aug = [ x@W | x@W@att_dst_blk^T ].
        xp_aug = jnp.dot(h, w_ref[...], preferred_element_type=jnp.float32)   # [N, H*C+H]
        a_dst_all = xp_aug[:, hc:hc + heads]                                  # [N, H]
        a_src_all = lax.dot_general(                                          # [H, N]
            asrc_ref[...], xp_aug[:, :hc],
            dimension_numbers=(((1,), (1,)), ((), ())),
            preferred_element_type=jnp.float32)

        # Per-(layer, head) edge-attention maps: linear combination of the dense
        # edge-attr slabs with SMEM scalar coefficients (no [H,N,N] ever hits HBM).
        # TODO(synk): at realistic N move this Fe-contraction onto the MXU
        # ([H,Fe] x [Fe, N*N]) instead of the Fe*H VPU FMA chain.
        alpha_heads = []
        for hd in range(heads):
            a = coeff_ref[(l * edge_feats) * heads + hd] * ea_slabs[0]
            for f in range(1, edge_feats):
                a = a + coeff_ref[(l * edge_feats + f) * heads + hd] * ea_slabs[f]
            alpha_heads.append(a)

        # Per-head attention softmax + aggregation; accumulate the over-heads sum
        # directly (no concat, no relayout).
        agg = None
        for hd in range(heads):
            logits = alpha_heads[hd] + a_dst_all[:, hd:hd + 1] + a_src_all[hd:hd + 1, :]
            leaky = jnp.where(logits > 0, logits, 0.2 * logits)   # LeakyReLU(0.2)
            # Invariant: adj has self loops, so every row has >= 1 unmasked entry and
            # masked (-1e30) logits underflow to exactly 0 after the max-shifted exp.
            logits = jnp.where(adj > 0, leaky, neg)
            m = jnp.max(logits, axis=1, keepdims=True)
            e = jnp.exp(logits - m)
            attn = e * pl.reciprocal(jnp.sum(e, axis=1, keepdims=True), approx=True)
            part = jnp.dot(attn, xp_aug[:, hd * c:(hd + 1) * c],
                           preferred_element_type=jnp.float32)
            agg = part if agg is None else agg + part

        h = jnp.maximum(agg * (1.0 / heads) + bias_ref[...], 0.0)  # mean heads + bias + ReLU
        h1 = h1 + jnp.dot(h, w1_block(l + 1), preferred_element_type=jnp.float32)

    # GCNConv: hg = A_norm @ (h Wg) + bg; it only feeds the folded concat.
    xw = jnp.dot(h, wg_ref[...], preferred_element_type=jnp.float32)
    hg = jnp.dot(anorm_ref[...], xw, preferred_element_type=jnp.float32) + bg_ref[...]
    h1 = h1 + jnp.dot(hg, w1_block(num_layers + 1), preferred_element_type=jnp.float32)

    # fcn_head: ReLU -> BatchNorm1d (training-mode biased batch stats, eps=1e-5)
    #           -> Linear -> ReLU ; then global_mean_pool -> decoder Linear.
    h1 = jnp.maximum(h1, 0.0)
    mean = jnp.mean(h1, axis=0, keepdims=True)
    var = jnp.mean((h1 - mean) ** 2, axis=0, keepdims=True)
    hn = (h1 - mean) * lax.rsqrt(var + 1e-5) * gamma + beta        # exact rsqrt (EUP)
    emb = jnp.maximum(jnp.dot(hn, w2_ref[...], preferred_element_type=jnp.float32)
                      + b2_ref[...], 0.0)
    pooled = jnp.dot(pool_ref[...], emb, preferred_element_type=jnp.float32)
    out_ref[...] = jnp.dot(pooled, wd_ref[...],
                           preferred_element_type=jnp.float32) + bd_ref[...]


# ----------------------------------------------------------------------------
# Glue: graph densification + parameter packing
# ----------------------------------------------------------------------------
def graph_prep(edge_index, batch, num_nodes, num_graphs):
    src, tgt = edge_index[0], edge_index[1]
    diag = jnp.arange(num_nodes)
    adj = jnp.zeros((num_nodes, num_nodes), jnp.float32).at[tgt, src].set(1.0)
    adj = adj.at[diag, diag].set(1.0)                       # add self loops
    deg = jnp.sum(adj, axis=1)                              # in-degree (incl. self loop)
    dinv = 1.0 / jnp.sqrt(deg)
    a_norm = adj * dinv[:, None] * dinv[None, :]            # GCN symmetric normalization
    onehot = (batch[None, :] == jnp.arange(num_graphs)[:, None]).astype(jnp.float32)
    pool = onehot / jnp.maximum(jnp.sum(onehot, axis=1, keepdims=True), 1.0)
    return adj, a_norm, pool


def dense_edge_attr_maps(edge_attr, src, tgt, num_nodes):
    """Dense [Fe, N, N] per-feature edge-attribute maps; self loops use per-target mean."""
    fe = edge_attr.shape[1]
    dense = jnp.zeros((fe, num_nodes, num_nodes), jnp.float32).at[:, tgt, src].set(edge_attr.T)
    sums = jnp.zeros((num_nodes, fe), jnp.float32).at[tgt].add(edge_attr)
    cnts = jnp.zeros((num_nodes,), jnp.float32).at[tgt].add(1.0)
    loop_attr = sums / jnp.maximum(cnts, 1.0)[:, None]      # fill_value='mean' per target node
    diag = jnp.arange(num_nodes)
    return dense.at[:, diag, diag].set(loop_attr.T)


def edge_coeff(w_edge, att_edge):
    """coeff[f, h] = sum_c W_edge[f, h*C + c] * att_edge[h, c] (edge-attention is linear)."""
    h, c = att_edge.shape
    fe = w_edge.shape[0]
    return jnp.einsum("fhc,hc->fh", w_edge.reshape(fe, h, c), att_edge)


def block_diag_heads(att):
    """[H, C] -> block-diagonal [H, H*C] with att[h] in columns h*C:(h+1)*C of row h."""
    h, c = att.shape
    eye = jnp.eye(h, dtype=att.dtype)
    return (eye[:, :, None] * att[None, :, :]).reshape(h, h * c)


def dense_edge_alpha(edge_attr, src, tgt, num_nodes, w_edge, att_edge):
    """Reference-path helper: per-head dense edge-attention logits [H, N, N]."""
    h, c = att_edge.shape
    e = edge_attr.shape[0]
    ee = (edge_attr @ w_edge).reshape(e, h, c)
    alpha_e = jnp.sum(ee * att_edge[None], axis=-1)         # [E, H]
    sums = jnp.zeros((num_nodes, edge_attr.shape[1]), jnp.float32).at[tgt].add(edge_attr)
    cnts = jnp.zeros((num_nodes,), jnp.float32).at[tgt].add(1.0)
    loop_attr = sums / jnp.maximum(cnts, 1.0)[:, None]
    le = (loop_attr @ w_edge).reshape(num_nodes, h, c)
    alpha_loop = jnp.sum(le * att_edge[None], axis=-1)      # [N, H]
    dense = jnp.zeros((h, num_nodes, num_nodes), jnp.float32)
    dense = dense.at[:, tgt, src].set(alpha_e.T)
    diag = jnp.arange(num_nodes)
    dense = dense.at[:, diag, diag].set(alpha_loop.T)
    return dense


def init_params(key, input_features, edge_features, out_targets, hidden_size,
                fcn_hidden_dim, embedding_dim, gnn_output_dim, heads):
    keys = iter(jax.random.split(key, 64))

    def rnd(shape, scale=0.1):
        return (scale * jax.random.normal(next(keys), shape)).astype(jnp.float32)

    gat_layers = []
    last = input_features
    all_hss = 0
    for hs in hidden_size:
        gat_layers.append(dict(
            W=rnd((last, heads * hs)),
            att_src=rnd((heads, hs)),
            att_dst=rnd((heads, hs)),
            W_edge=rnd((edge_features, heads * hs)),
            att_edge=rnd((heads, hs)),
            bias=rnd((1, hs)),
        ))
        last = hs
        all_hss += hs
    gcn_p = dict(W=rnd((last, gnn_output_dim)), bias=rnd((1, gnn_output_dim)))
    all_hss += gnn_output_dim
    d_cat = input_features + all_hss
    fcn = dict(
        W1=rnd((d_cat, fcn_hidden_dim)), b1=rnd((1, fcn_hidden_dim)),
        gamma=jnp.ones((1, fcn_hidden_dim), jnp.float32),
        beta=jnp.zeros((1, fcn_hidden_dim), jnp.float32),
        W2=rnd((fcn_hidden_dim, embedding_dim)), b2=rnd((1, embedding_dim)),
    )
    dec = dict(W=rnd((embedding_dim, out_targets)), b=rnd((1, out_targets)))
    return dict(gat_layers=gat_layers, gcn=gcn_p, fcn=fcn, dec=dec)


# ----------------------------------------------------------------------------
# Forward (single fused Pallas call) and pure-JAX reference
# ----------------------------------------------------------------------------
def forward(params, x, edge_index, edge_attr, batch, num_graphs):
    n, fin = x.shape
    src, tgt = edge_index[0], edge_index[1]
    adj, a_norm, pool = graph_prep(edge_index, batch, n, num_graphs)
    dense_ea = dense_edge_attr_maps(edge_attr, src, tgt, n)

    gat_layers = params["gat_layers"]
    num_layers = len(gat_layers)
    heads, _ = gat_layers[0]["att_src"].shape
    fe = edge_attr.shape[1]
    layer_channels = tuple(lp["att_src"].shape[1] for lp in gat_layers)
    gnn_out = params["gcn"]["W"].shape[1]

    # Scalar edge-attention coefficients (SMEM), one per (layer, edge-feature, head).
    coeff_flat = jnp.stack(
        [edge_coeff(lp["W_edge"], lp["att_edge"]) for lp in gat_layers]).reshape(-1)

    inputs = [coeff_flat, x, adj, a_norm, pool, dense_ea]
    for lp in gat_layers:
        # Fold the att_dst projection into W: xp_aug = [ x@W | x@W@att_dst_blk^T ].
        w_aug = jnp.concatenate(
            [lp["W"], lp["W"] @ block_diag_heads(lp["att_dst"]).T], axis=1)
        inputs += [w_aug, block_diag_heads(lp["att_src"]), lp["bias"]]
    inputs += [params["gcn"]["W"], params["gcn"]["bias"]]

    fp = params["fcn"]
    split_sizes = [fin] + list(layer_channels) + [gnn_out]
    w1_offsets = tuple(int(v) for v in np.cumsum([0] + split_sizes))
    bn_pack = jnp.concatenate([fp["b1"], fp["gamma"], fp["beta"]], axis=0)  # [3, F1]
    inputs += [fp["W1"], bn_pack, fp["W2"], fp["b2"],
               params["dec"]["W"], params["dec"]["b"]]

    out_targets = params["dec"]["W"].shape[1]
    kern = functools.partial(_fused_forward_kernel, num_layers=num_layers,
                             heads=heads, edge_feats=fe,
                             layer_channels=layer_channels, w1_offsets=w1_offsets)
    in_specs = ([pl.BlockSpec(memory_space=SMEM)]
                + [pl.BlockSpec(memory_space=VMEM)] * (len(inputs) - 1))
    return pl.pallas_call(
        kern,
        out_shape=jax.ShapeDtypeStruct((num_graphs, out_targets), jnp.float32),
        in_specs=in_specs,
        out_specs=pl.BlockSpec(memory_space=VMEM),
        compiler_params=pltpu.CompilerParams(vmem_limit_bytes=32 * 1024 * 1024),
    )(*inputs)


def ref_forward(params, x, edge_index, edge_attr, batch, num_graphs):
    n = x.shape[0]
    adj, a_norm, pool = graph_prep(edge_index, batch, n, num_graphs)
    src, tgt = edge_index[0], edge_index[1]
    each_step = [x]
    out = x
    for lp in params["gat_layers"]:
        h, c = lp["att_src"].shape
        alpha_e = dense_edge_alpha(edge_attr, src, tgt, n, lp["W_edge"], lp["att_edge"])
        xp = (out @ lp["W"]).reshape(n, h, c)
        a_src = jnp.einsum("nhc,hc->nh", xp, lp["att_src"])
        a_dst = jnp.einsum("nhc,hc->nh", xp, lp["att_dst"])
        logits = alpha_e + a_dst.T[:, :, None] + a_src.T[:, None, :]
        logits = jnp.where(logits > 0, logits, 0.2 * logits)
        logits = jnp.where(adj[None] > 0, logits, -1e30)
        e = jnp.exp(logits - logits.max(axis=2, keepdims=True))
        e = jnp.where(adj[None] > 0, e, 0.0)
        attn = e / e.sum(axis=2, keepdims=True)
        agg = jnp.einsum("hij,jhc->hic", attn, xp)
        out = jnp.maximum(agg.mean(axis=0) + lp["bias"], 0.0)
        each_step.append(out)
    out = a_norm @ (out @ params["gcn"]["W"]) + params["gcn"]["bias"]
    each_step.append(out)
    feat = jnp.concatenate(each_step, axis=1)
    f, d = params["fcn"], params["dec"]
    h1 = jnp.maximum(feat @ f["W1"] + f["b1"], 0.0)
    mean = h1.mean(0, keepdims=True)
    var = ((h1 - mean) ** 2).mean(0, keepdims=True)
    hn = (h1 - mean) / jnp.sqrt(var + 1e-5) * f["gamma"] + f["beta"]
    emb = jnp.maximum(hn @ f["W2"] + f["b2"], 0.0)
    return pool @ emb @ d["W"] + d["b"]


# ----------------------------------------------------------------------------
if __name__ == "__main__":
    key = jax.random.PRNGKey(0)
    input_features, edge_features, out_targets = 8, 4, 3
    hidden_size = (16, 16)
    fcn_hidden_dim, embedding_dim, gnn_output_dim, heads = 32, 16, 16, 2
    nodes_per_graph, num_graphs = 64, 2            # N = 128 nodes: lane-dense operands
    n_nodes = nodes_per_graph * num_graphs

    k_param, k_x, k_e = jax.random.split(key, 3)
    params = init_params(k_param, input_features, edge_features, out_targets,
                         hidden_size, fcn_hidden_dim, embedding_dim,
                         gnn_output_dim, heads)
    x = jax.random.normal(k_x, (n_nodes, input_features), dtype=jnp.float32)

    # Two graphs of 64 nodes each; bidirectional ring edges (no self loops / duplicates).
    src_list, tgt_list = [], []
    for g in range(num_graphs):
        for i in range(nodes_per_graph):
            a = g * nodes_per_graph + i
            b = g * nodes_per_graph + (i + 1) % nodes_per_graph
            src_list += [a, b]
            tgt_list += [b, a]
    edge_index = jnp.array([src_list, tgt_list], dtype=jnp.int32)
    edge_attr = jax.random.normal(k_e, (edge_index.shape[1], edge_features), dtype=jnp.float32)
    batch = jnp.repeat(jnp.arange(num_graphs, dtype=jnp.int32), nodes_per_graph)

    out = forward(params, x, edge_index, edge_attr, batch, num_graphs)
    out = jax.block_until_ready(out)
    assert out.shape == (num_graphs, out_targets)

    ref = ref_forward(params, x, edge_index, edge_attr, batch, num_graphs)
    # Tolerance tightened vs. previous version (BN now uses exact rsqrt); the only
    # approximate op left is the EUP reciprocal on the softmax denominators.
    np.testing.assert_allclose(np.asarray(out), np.asarray(ref), rtol=5e-3, atol=5e-3)

    print("KERNEL_OK")
</pallas_src>

<mosaic_0001>
module attributes {stable_mosaic.version = 11 : i64} {
  func.func @_fused_forward_kernel(%arg0: memref<16xf32, #tpu.memory_space<smem>>, %arg1: memref<128x8xf32, #tpu.memory_space<vmem>>, %arg2: memref<128x128xf32, #tpu.memory_space<vmem>>, %arg3: memref<128x128xf32, #tpu.memory_space<vmem>>, %arg4: memref<2x128xf32, #tpu.memory_space<vmem>>, %arg5: memref<4x128x128xf32, #tpu.memory_space<vmem>>, %arg6: memref<8x34xf32, #tpu.memory_space<vmem>>, %arg7: memref<2x32xf32, #tpu.memory_space<vmem>>, %arg8: memref<1x16xf32, #tpu.memory_space<vmem>>, %arg9: memref<16x34xf32, #tpu.memory_space<vmem>>, %arg10: memref<2x32xf32, #tpu.memory_space<vmem>>, %arg11: memref<1x16xf32, #tpu.memory_space<vmem>>, %arg12: memref<16x16xf32, #tpu.memory_space<vmem>>, %arg13: memref<1x16xf32, #tpu.memory_space<vmem>>, %arg14: memref<56x32xf32, #tpu.memory_space<vmem>>, %arg15: memref<3x32xf32, #tpu.memory_space<vmem>>, %arg16: memref<32x16xf32, #tpu.memory_space<vmem>>, %arg17: memref<1x16xf32, #tpu.memory_space<vmem>>, %arg18: memref<16x3xf32, #tpu.memory_space<vmem>>, %arg19: memref<1x3xf32, #tpu.memory_space<vmem>>, %arg20: memref<2x3xf32, #tpu.memory_space<vmem>>) attributes {dimension_semantics = [], scalar_prefetch = 0 : i64, scratch_operands = 0 : i64, tpu.core_type = #tpu.core_type<tc>} {
    %c0 = arith.constant 0 : index
    %c0_0 = arith.constant 0 : index
    %0 = vector.load %arg1[%c0, %c0_0] : memref<128x8xf32, #tpu.memory_space<vmem>>, vector<128x8xf32>
    %c0_1 = arith.constant 0 : index
    %c0_2 = arith.constant 0 : index
    %1 = vector.load %arg2[%c0_1, %c0_2] : memref<128x128xf32, #tpu.memory_space<vmem>>, vector<128x128xf32>
    %c0_3 = arith.constant 0 : index
    %c0_4 = arith.constant 0 : index
    %c0_5 = arith.constant 0 : index
    %2 = vector.load %arg5[%c0_3, %c0_4, %c0_5] : memref<4x128x128xf32, #tpu.memory_space<vmem>>, vector<1x128x128xf32>
    %3 = vector.shape_cast %2 : vector<1x128x128xf32> to vector<128x128xf32>
    %c1 = arith.constant 1 : index
    %c0_6 = arith.constant 0 : index
    %c0_7 = arith.constant 0 : index
    %4 = vector.load %arg5[%c1, %c0_6, %c0_7] : memref<4x128x128xf32, #tpu.memory_space<vmem>>, vector<1x128x128xf32>
    %5 = vector.shape_cast %4 : vector<1x128x128xf32> to vector<128x128xf32>
    %c2 = arith.constant 2 : index
    %c0_8 = arith.constant 0 : index
    %c0_9 = arith.constant 0 : index
    %6 = vector.load %arg5[%c2, %c0_8, %c0_9] : memref<4x128x128xf32, #tpu.memory_space<vmem>>, vector<1x128x128xf32>
    %7 = vector.shape_cast %6 : vector<1x128x128xf32> to vector<128x128xf32>
    %c3 = arith.constant 3 : index
    %c0_10 = arith.constant 0 : index
    %c0_11 = arith.constant 0 : index
    %8 = vector.load %arg5[%c3, %c0_10, %c0_11] : memref<4x128x128xf32, #tpu.memory_space<vmem>>, vector<1x128x128xf32>
    %9 = vector.shape_cast %8 : vector<1x128x128xf32> to vector<128x128xf32>
    %c0_12 = arith.constant 0 : index
    %c0_13 = arith.constant 0 : index
    %10 = vector.load %arg15[%c0_12, %c0_13] : memref<3x32xf32, #tpu.memory_space<vmem>>, vector<3x32xf32>
    %11 = vector.extract_strided_slice %10 {offsets = [0, 0], sizes = [1, 32], strides = [1, 1]} : vector<3x32xf32> to vector<1x32xf32>
    %12 = vector.extract_strided_slice %10 {offsets = [1, 0], sizes = [1, 32], strides = [1, 1]} : vector<3x32xf32> to vector<1x32xf32>
    %13 = vector.extract_strided_slice %10 {offsets = [2, 0], sizes = [1, 32], strides = [1, 1]} : vector<3x32xf32> to vector<1x32xf32>
    %c0_14 = arith.constant 0 : index
    %c0_15 = arith.constant 0 : index
    %14 = vector.load %arg14[%c0_14, %c0_15] : memref<56x32xf32, #tpu.memory_space<vmem>>, vector<8x32xf32>
    %cst = arith.constant dense<0.000000e+00> : vector<128x32xf32>
    %15 = tpu.matmul %0, %14, %cst {dimension_numbers = #tpu.dot_dimension_numbers<[1], [0], [0], [1], [0, 0, 1, 1], [], []>} : vector<128x8xf32>, vector<8x32xf32>, vector<128x32xf32> -> vector<128x32xf32>
    %16 = vector.broadcast %11 : vector<1x32xf32> to vector<128x32xf32>
    %17 = arith.addf %15, %16 : vector<128x32xf32>
    %c0_16 = arith.constant 0 : index
    %c0_17 = arith.constant 0 : index
    %18 = vector.load %arg6[%c0_16, %c0_17] : memref<8x34xf32, #tpu.memory_space<vmem>>, vector<8x34xf32>
    %cst_18 = arith.constant dense<0.000000e+00> : vector<128x34xf32>
    %19 = tpu.matmul %0, %18, %cst_18 {dimension_numbers = #tpu.dot_dimension_numbers<[1], [0], [0], [1], [0, 0, 1, 1], [], []>} : vector<128x8xf32>, vector<8x34xf32>, vector<128x34xf32> -> vector<128x34xf32>
    %20 = vector.extract_strided_slice %19 {offsets = [0, 32], sizes = [128, 2], strides = [1, 1]} : vector<128x34xf32> to vector<128x2xf32>
    %c0_19 = arith.constant 0 : index
    %c0_20 = arith.constant 0 : index
    %21 = vector.load %arg7[%c0_19, %c0_20] : memref<2x32xf32, #tpu.memory_space<vmem>>, vector<2x32xf32>
    %22 = vector.extract_strided_slice %19 {offsets = [0, 0], sizes = [128, 32], strides = [1, 1]} : vector<128x34xf32> to vector<128x32xf32>
    %cst_21 = arith.constant dense<0.000000e+00> : vector<2x128xf32>
    %23 = tpu.matmul %21, %22, %cst_21 {dimension_numbers = #tpu.dot_dimension_numbers<[1], [1], [0], [0], [0, 0, 1, 0], [], []>} : vector<2x32xf32>, vector<128x32xf32>, vector<2x128xf32> -> vector<2x128xf32>
    %c0_22 = arith.constant 0 : index
    %24 = memref.load %arg0[%c0_22] : memref<16xf32, #tpu.memory_space<smem>>
    %25 = vector.broadcast %24 : f32 to vector<128x128xf32>
    %26 = arith.mulf %25, %3 : vector<128x128xf32>
    %c2_23 = arith.constant 2 : index
    %27 = memref.load %arg0[%c2_23] : memref<16xf32, #tpu.memory_space<smem>>
    %28 = vector.broadcast %27 : f32 to vector<128x128xf32>
    %29 = arith.mulf %28, %5 : vector<128x128xf32>
    %30 = arith.addf %26, %29 : vector<128x128xf32>
    %c4 = arith.constant 4 : index
    %31 = memref.load %arg0[%c4] : memref<16xf32, #tpu.memory_space<smem>>
    %32 = vector.broadcast %31 : f32 to vector<128x128xf32>
    %33 = arith.mulf %32, %7 : vector<128x128xf32>
    %34 = arith.addf %30, %33 : vector<128x128xf32>
    %c6 = arith.constant 6 : index
    %35 = memref.load %arg0[%c6] : memref<16xf32, #tpu.memory_space<smem>>
    %36 = vector.broadcast %35 : f32 to vector<128x128xf32>
    %37 = arith.mulf %36, %9 : vector<128x128xf32>
    %38 = arith.addf %34, %37 : vector<128x128xf32>
    %c1_24 = arith.constant 1 : index
    %39 = memref.load %arg0[%c1_24] : memref<16xf32, #tpu.memory_space<smem>>
    %40 = vector.broadcast %39 : f32 to vector<128x128xf32>
    %41 = arith.mulf %40, %3 : vector<128x128xf32>
    %c3_25 = arith.constant 3 : index
    %42 = memref.load %arg0[%c3_25] : memref<16xf32, #tpu.memory_space<smem>>
    %43 = vector.broadcast %42 : f32 to vector<128x128xf32>
    %44 = arith.mulf %43, %5 : vector<128x128xf32>
    %45 = arith.addf %41, %44 : vector<128x128xf32>
    %c5 = arith.constant 5 : index
    %46 = memref.load %arg0[%c5] : memref<16xf32, #tpu.memory_space<smem>>
    %47 = vector.broadcast %46 : f32 to vector<128x128xf32>
    %48 = arith.mulf %47, %7 : vector<128x128xf32>
    %49 = arith.addf %45, %48 : vector<128x128xf32>
    %c7 = arith.constant 7 : index
    %50 = memref.load %arg0[%c7] : memref<16xf32, #tpu.memory_space<smem>>
    %51 = vector.broadcast %50 : f32 to vector<128x128xf32>
    %52 = arith.mulf %51, %9 : vector<128x128xf32>
    %53 = arith.addf %49, %52 : vector<128x128xf32>
    %54 = vector.extract_strided_slice %20 {offsets = [0, 0], sizes = [128, 1], strides = [1, 1]} : vector<128x2xf32> to vector<128x1xf32>
    %55 = vector.broadcast %54 : vector<128x1xf32> to vector<128x128xf32>
    %56 = arith.addf %38, %55 : vector<128x128xf32>
    %57 = vector.extract_strided_slice %23 {offsets = [0, 0], sizes = [1, 128], strides = [1, 1]} : vector<2x128xf32> to vector<1x128xf32>
    %58 = vector.broadcast %57 : vector<1x128xf32> to vector<128x128xf32>
    %59 = arith.addf %56, %58 : vector<128x128xf32>
    %cst_26 = arith.constant 0.000000e+00 : f32
    %60 = vector.broadcast %cst_26 : f32 to vector<128x128xf32>
    %61 = arith.cmpf ogt, %59, %60 : vector<128x128xf32>
    %cst_27 = arith.constant 2.000000e-01 : f32
    %62 = vector.broadcast %cst_27 : f32 to vector<128x128xf32>
    %63 = arith.mulf %62, %59 : vector<128x128xf32>
    %64 = arith.select %61, %59, %63 : vector<128x128xi1>, vector<128x128xf32>
    %cst_28 = arith.constant 0.000000e+00 : f32
    %65 = vector.broadcast %cst_28 : f32 to vector<128x128xf32>
    %66 = arith.cmpf ogt, %1, %65 : vector<128x128xf32>
    %cst_29 = arith.constant -1.000000e+30 : f32
    %67 = vector.broadcast %cst_29 : f32 to vector<128x128xf32>
    %68 = arith.select %66, %64, %67 : vector<128x128xi1>, vector<128x128xf32>
    %cst_30 = arith.constant dense<0xFF800000> : vector<128xf32>
    %69 = vector.multi_reduction <maximumf>, %68, %cst_30 [1] : vector<128x128xf32> to vector<128xf32>
    %70 = vector.shape_cast %69 : vector<128xf32> to vector<128x1xf32>
    %71 = vector.broadcast %70 : vector<128x1xf32> to vector<128x128xf32>
    %72 = arith.subf %68, %71 : vector<128x128xf32>
    %73 = math.exp %72 : vector<128x128xf32>
    %cst_31 = arith.constant dense<0.000000e+00> : vector<128xf32>
    %74 = vector.multi_reduction <add>, %73, %cst_31 [1] : vector<128x128xf32> to vector<128xf32>
    %75 = vector.shape_cast %74 : vector<128xf32> to vector<128x1xf32>
    %76 = tpu.reciprocal %75 {approx = true} : vector<128x1xf32> -> vector<128x1xf32>
    %77 = vector.broadcast %76 : vector<128x1xf32> to vector<128x128xf32>
    %78 = arith.mulf %73, %77 : vector<128x128xf32>
    %79 = vector.extract_strided_slice %19 {offsets = [0, 0], sizes = [128, 16], strides = [1, 1]} : vector<128x34xf32> to vector<128x16xf32>
    %cst_32 = arith.constant dense<0.000000e+00> : vector<128x16xf32>
    %80 = tpu.matmul %78, %79, %cst_32 {dimension_numbers = #tpu.dot_dimension_numbers<[1], [0], [0], [1], [0, 0, 1, 1], [], []>} : vector<128x128xf32>, vector<128x16xf32>, vector<128x16xf32> -> vector<128x16xf32>
    %81 = vector.extract_strided_slice %20 {offsets = [0, 1], sizes = [128, 1], strides = [1, 1]} : vector<128x2xf32> to vector<128x1xf32>
    %82 = vector.broadcast %81 : vector<128x1xf32> to vector<128x128xf32>
    %83 = arith.addf %53, %82 : vector<128x128xf32>
    %84 = vector.extract_strided_slice %23 {offsets = [1, 0], sizes = [1, 128], strides = [1, 1]} : vector<2x128xf32> to vector<1x128xf32>
    %85 = vector.broadcast %84 : vector<1x128xf32> to vector<128x128xf32>
    %86 = arith.addf %83, %85 : vector<128x128xf32>
    %cst_33 = arith.constant 0.000000e+00 : f32
    %87 = vector.broadcast %cst_33 : f32 to vector<128x128xf32>
    %88 = arith.cmpf ogt, %86, %87 : vector<128x128xf32>
    %cst_34 = arith.constant 2.000000e-01 : f32
    %89 = vector.broadcast %cst_34 : f32 to vector<128x128xf32>
    %90 = arith.mulf %89, %86 : vector<128x128xf32>
    %91 = arith.select %88, %86, %90 : vector<128x128xi1>, vector<128x128xf32>
    %cst_35 = arith.constant 0.000000e+00 : f32
    %92 = vector.broadcast %cst_35 : f32 to vector<128x128xf32>
    %93 = arith.cmpf ogt, %1, %92 : vector<128x128xf32>
    %cst_36 = arith.constant -1.000000e+30 : f32
    %94 = vector.broadcast %cst_36 : f32 to vector<128x128xf32>
    %95 = arith.select %93, %91, %94 : vector<128x128xi1>, vector<128x128xf32>
    %cst_37 = arith.constant dense<0xFF800000> : vector<128xf32>
    %96 = vector.multi_reduction <maximumf>, %95, %cst_37 [1] : vector<128x128xf32> to vector<128xf32>
    %97 = vector.shape_cast %96 : vector<128xf32> to vector<128x1xf32>
    %98 = vector.broadcast %97 : vector<128x1xf32> to vector<128x128xf32>
    %99 = arith.subf %95, %98 : vector<128x128xf32>
    %100 = math.exp %99 : vector<128x128xf32>
    %cst_38 = arith.constant dense<0.000000e+00> : vector<128xf32>
    %101 = vector.multi_reduction <add>, %100, %cst_38 [1] : vector<128x128xf32> to vector<128xf32>
    %102 = vector.shape_cast %101 : vector<128xf32> to vector<128x1xf32>
    %103 = tpu.reciprocal %102 {approx = true} : vector<128x1xf32> -> vector<128x1xf32>
    %104 = vector.broadcast %103 : vector<128x1xf32> to vector<128x128xf32>
    %105 = arith.mulf %100, %104 : vector<128x128xf32>
    %106 = vector.extract_strided_slice %19 {offsets = [0, 16], sizes = [128, 16], strides = [1, 1]} : vector<128x34xf32> to vector<128x16xf32>
    %cst_39 = arith.constant dense<0.000000e+00> : vector<128x16xf32>
    %107 = tpu.matmul %105, %106, %cst_39 {dimension_numbers = #tpu.dot_dimension_numbers<[1], [0], [0], [1], [0, 0, 1, 1], [], []>} : vector<128x128xf32>, vector<128x16xf32>, vector<128x16xf32> -> vector<128x16xf32>
    %108 = arith.addf %80, %107 : vector<128x16xf32>
    %cst_40 = arith.constant 5.000000e-01 : f32
    %109 = vector.broadcast %cst_40 : f32 to vector<128x16xf32>
    %110 = arith.mulf %108, %109 : vector<128x16xf32>
    %c0_41 = arith.constant 0 : index
    %c0_42 = arith.constant 0 : index
    %111 = vector.load %arg8[%c0_41, %c0_42] : memref<1x16xf32, #tpu.memory_space<vmem>>, vector<1x16xf32>
    %112 = vector.broadcast %111 : vector<1x16xf32> to vector<128x16xf32>
    %113 = arith.addf %110, %112 : vector<128x16xf32>
    %cst_43 = arith.constant 0.000000e+00 : f32
    %114 = vector.broadcast %cst_43 : f32 to vector<128x16xf32>
    %115 = arith.maximumf %113, %114 : vector<128x16xf32>
    %c8 = arith.constant 8 : index
    %c0_44 = arith.constant 0 : index
    %116 = vector.load %arg14[%c8, %c0_44] : memref<56x32xf32, #tpu.memory_space<vmem>>, vector<16x32xf32>
    %cst_45 = arith.constant dense<0.000000e+00> : vector<128x32xf32>
    %117 = tpu.matmul %115, %116, %cst_45 {dimension_numbers = #tpu.dot_dimension_numbers<[1], [0], [0], [1], [0, 0, 1, 1], [], []>} : vector<128x16xf32>, vector<16x32xf32>, vector<128x32xf32> -> vector<128x32xf32>
    %118 = arith.addf %17, %117 : vector<128x32xf32>
    %c0_46 = arith.constant 0 : index
    %c0_47 = arith.constant 0 : index
    %119 = vector.load %arg9[%c0_46, %c0_47] : memref<16x34xf32, #tpu.memory_space<vmem>>, vector<16x34xf32>
    %cst_48 = arith.constant dense<0.000000e+00> : vector<128x34xf32>
    %120 = tpu.matmul %115, %119, %cst_48 {dimension_numbers = #tpu.dot_dimension_numbers<[1], [0], [0], [1], [0, 0, 1, 1], [], []>} : vector<128x16xf32>, vector<16x34xf32>, vector<128x34xf32> -> vector<128x34xf32>
    %121 = vector.extract_strided_slice %120 {offsets = [0, 32], sizes = [128, 2], strides = [1, 1]} : vector<128x34xf32> to vector<128x2xf32>
    %c0_49 = arith.constant 0 : index
    %c0_50 = arith.constant 0 : index
    %122 = vector.load %arg10[%c0_49, %c0_50] : memref<2x32xf32, #tpu.memory_space<vmem>>, vector<2x32xf32>
    %123 = vector.extract_strided_slice %120 {offsets = [0, 0], sizes = [128, 32], strides = [1, 1]} : vector<128x34xf32> to vector<128x32xf32>
    %cst_51 = arith.constant dense<0.000000e+00> : vector<2x128xf32>
    %124 = tpu.matmul %122, %123, %cst_51 {dimension_numbers = #tpu.dot_dimension_numbers<[1], [1], [0], [0], [0, 0, 1, 0], [], []>} : vector<2x32xf32>, vector<128x32xf32>, vector<2x128xf32> -> vector<2x128xf32>
    %c8_52 = arith.constant 8 : index
    %125 = memref.load %arg0[%c8_52] : memref<16xf32, #tpu.memory_space<smem>>
    %126 = vector.broadcast %125 : f32 to vector<128x128xf32>
    %127 = arith.mulf %126, %3 : vector<128x128xf32>
    %c10 = arith.constant 10 : index
    %128 = memref.load %arg0[%c10] : memref<16xf32, #tpu.memory_space<smem>>
    %129 = vector.broadcast %128 : f32 to vector<128x128xf32>
    %130 = arith.mulf %129, %5 : vector<128x128xf32>
    %131 = arith.addf %127, %130 : vector<128x128xf32>
    %c12 = arith.constant 12 : index
    %132 = memref.load %arg0[%c12] : memref<16xf32, #tpu.memory_space<smem>>
    %133 = vector.broadcast %132 : f32 to vector<128x128xf32>
    %134 = arith.mulf %133, %7 : vector<128x128xf32>
    %135 = arith.addf %131, %134 : vector<128x128xf32>
    %c14 = arith.constant 14 : index
    %136 = memref.load %arg0[%c14] : memref<16xf32, #tpu.memory_space<smem>>
    %137 = vector.broadcast %136 : f32 to vector<128x128xf32>
    %138 = arith.mulf %137, %9 : vector<128x128xf32>
    %139 = arith.addf %135, %138 : vector<128x128xf32>
    %c9 = arith.constant 9 : index
    %140 = memref.load %arg0[%c9] : memref<16xf32, #tpu.memory_space<smem>>
    %141 = vector.broadcast %140 : f32 to vector<128x128xf32>
    %142 = arith.mulf %141, %3 : vector<128x128xf32>
    %c11 = arith.constant 11 : index
    %143 = memref.load %arg0[%c11] : memref<16xf32, #tpu.memory_space<smem>>
    %144 = vector.broadcast %143 : f32 to vector<128x128xf32>
    %145 = arith.mulf %144, %5 : vector<128x128xf32>
    %146 = arith.addf %142, %145 : vector<128x128xf32>
    %c13 = arith.constant 13 : index
    %147 = memref.load %arg0[%c13] : memref<16xf32, #tpu.memory_space<smem>>
    %148 = vector.broadcast %147 : f32 to vector<128x128xf32>
    %149 = arith.mulf %148, %7 : vector<128x128xf32>
    %150 = arith.addf %146, %149 : vector<128x128xf32>
    %c15 = arith.constant 15 : index
    %151 = memref.load %arg0[%c15] : memref<16xf32, #tpu.memory_space<smem>>
    %152 = vector.broadcast %151 : f32 to vector<128x128xf32>
    %153 = arith.mulf %152, %9 : vector<128x128xf32>
    %154 = arith.addf %150, %153 : vector<128x128xf32>
    %155 = vector.extract_strided_slice %121 {offsets = [0, 0], sizes = [128, 1], strides = [1, 1]} : vector<128x2xf32> to vector<128x1xf32>
    %156 = vector.broadcast %155 : vector<128x1xf32> to vector<128x128xf32>
    %157 = arith.addf %139, %156 : vector<128x128xf32>
    %158 = vector.extract_strided_slice %124 {offsets = [0, 0], sizes = [1, 128], strides = [1, 1]} : vector<2x128xf32> to vector<1x128xf32>
    %159 = vector.broadcast %158 : vector<1x128xf32> to vector<128x128xf32>
    %160 = arith.addf %157, %159 : vector<128x128xf32>
    %cst_53 = arith.constant 0.000000e+00 : f32
    %161 = vector.broadcast %cst_53 : f32 to vector<128x128xf32>
    %162 = arith.cmpf ogt, %160, %161 : vector<128x128xf32>
    %cst_54 = arith.constant 2.000000e-01 : f32
    %163 = vector.broadcast %cst_54 : f32 to vector<128x128xf32>
    %164 = arith.mulf %163, %160 : vector<128x128xf32>
    %165 = arith.select %162, %160, %164 : vector<128x128xi1>, vector<128x128xf32>
    %cst_55 = arith.constant 0.000000e+00 : f32
    %166 = vector.broadcast %cst_55 : f32 to vector<128x128xf32>
    %167 = arith.cmpf ogt, %1, %166 : vector<128x128xf32>
    %cst_56 = arith.constant -1.000000e+30 : f32
    %168 = vector.broadcast %cst_56 : f32 to vector<128x128xf32>
    %169 = arith.select %167, %165, %168 : vector<128x128xi1>, vector<128x128xf32>
    %cst_57 = arith.constant dense<0xFF800000> : vector<128xf32>
    %170 = vector.multi_reduction <maximumf>, %169, %cst_57 [1] : vector<128x128xf32> to vector<128xf32>
    %171 = vector.shape_cast %170 : vector<128xf32> to vector<128x1xf32>
    %172 = vector.broadcast %171 : vector<128x1xf32> to vector<128x128xf32>
    %173 = arith.subf %169, %172 : vector<128x128xf32>
    %174 = math.exp %173 : vector<128x128xf32>
    %cst_58 = arith.constant dense<0.000000e+00> : vector<128xf32>
    %175 = vector.multi_reduction <add>, %174, %cst_58 [1] : vector<128x128xf32> to vector<128xf32>
    %176 = vector.shape_cast %175 : vector<128xf32> to vector<128x1xf32>
    %177 = tpu.reciprocal %176 {approx = true} : vector<128x1xf32> -> vector<128x1xf32>
    %178 = vector.broadcast %177 : vector<128x1xf32> to vector<128x128xf32>
    %179 = arith.mulf %174, %178 : vector<128x128xf32>
    %180 = vector.extract_strided_slice %120 {offsets = [0, 0], sizes = [128, 16], strides = [1, 1]} : vector<128x34xf32> to vector<128x16xf32>
    %cst_59 = arith.constant dense<0.000000e+00> : vector<128x16xf32>
    %181 = tpu.matmul %179, %180, %cst_59 {dimension_numbers = #tpu.dot_dimension_numbers<[1], [0], [0], [1], [0, 0, 1, 1], [], []>} : vector<128x128xf32>, vector<128x16xf32>, vector<128x16xf32> -> vector<128x16xf32>
    %182 = vector.extract_strided_slice %121 {offsets = [0, 1], sizes = [128, 1], strides = [1, 1]} : vector<128x2xf32> to vector<128x1xf32>
    %183 = vector.broadcast %182 : vector<128x1xf32> to vector<128x128xf32>
    %184 = arith.addf %154, %183 : vector<128x128xf32>
    %185 = vector.extract_strided_slice %124 {offsets = [1, 0], sizes = [1, 128], strides = [1, 1]} : vector<2x128xf32> to vector<1x128xf32>
    %186 = vector.broadcast %185 : vector<1x128xf32> to vector<128x128xf32>
    %187 = arith.addf %184, %186 : vector<128x128xf32>
    %cst_60 = arith.constant 0.000000e+00 : f32
    %188 = vector.broadcast %cst_60 : f32 to vector<128x128xf32>
    %189 = arith.cmpf ogt, %187, %188 : vector<128x128xf32>
    %cst_61 = arith.constant 2.000000e-01 : f32
    %190 = vector.broadcast %cst_61 : f32 to vector<128x128xf32>
    %191 = arith.mulf %190, %187 : vector<128x128xf32>
    %192 = arith.select %189, %187, %191 : vector<128x128xi1>, vector<128x128xf32>
    %cst_62 = arith.constant 0.000000e+00 : f32
    %193 = vector.broadcast %cst_62 : f32 to vector<128x128xf32>
    %194 = arith.cmpf ogt, %1, %193 : vector<128x128xf32>
    %cst_63 = arith.constant -1.000000e+30 : f32
    %195 = vector.broadcast %cst_63 : f32 to vector<128x128xf32>
    %196 = arith.select %194, %192, %195 : vector<128x128xi1>, vector<128x128xf32>
    %cst_64 = arith.constant dense<0xFF800000> : vector<128xf32>
    %197 = vector.multi_reduction <maximumf>, %196, %cst_64 [1] : vector<128x128xf32> to vector<128xf32>
    %198 = vector.shape_cast %197 : vector<128xf32> to vector<128x1xf32>
    %199 = vector.broadcast %198 : vector<128x1xf32> to vector<128x128xf32>
    %200 = arith.subf %196, %199 : vector<128x128xf32>
    %201 = math.exp %200 : vector<128x128xf32>
    %cst_65 = arith.constant dense<0.000000e+00> : vector<128xf32>
    %202 = vector.multi_reduction <add>, %201, %cst_65 [1] : vector<128x128xf32> to vector<128xf32>
    %203 = vector.shape_cast %202 : vector<128xf32> to vector<128x1xf32>
    %204 = tpu.reciprocal %203 {approx = true} : vector<128x1xf32> -> vector<128x1xf32>
    %205 = vector.broadcast %204 : vector<128x1xf32> to vector<128x128xf32>
    %206 = arith.mulf %201, %205 : vector<128x128xf32>
    %207 = vector.extract_strided_slice %120 {offsets = [0, 16], sizes = [128, 16], strides = [1, 1]} : vector<128x34xf32> to vector<128x16xf32>
    %cst_66 = arith.constant dense<0.000000e+00> : vector<128x16xf32>
    %208 = tpu.matmul %206, %207, %cst_66 {dimension_numbers = #tpu.dot_dimension_numbers<[1], [0], [0], [1], [0, 0, 1, 1], [], []>} : vector<128x128xf32>, vector<128x16xf32>, vector<128x16xf32> -> vector<128x16xf32>
    %209 = arith.addf %181, %208 : vector<128x16xf32>
    %cst_67 = arith.constant 5.000000e-01 : f32
    %210 = vector.broadcast %cst_67 : f32 to vector<128x16xf32>
    %211 = arith.mulf %209, %210 : vector<128x16xf32>
    %c0_68 = arith.constant 0 : index
    %c0_69 = arith.constant 0 : index
    %212 = vector.load %arg11[%c0_68, %c0_69] : memref<1x16xf32, #tpu.memory_space<vmem>>, vector<1x16xf32>
    %213 = vector.broadcast %212 : vector<1x16xf32> to vector<128x16xf32>
    %214 = arith.addf %211, %213 : vector<128x16xf32>
    %cst_70 = arith.constant 0.000000e+00 : f32
    %215 = vector.broadcast %cst_70 : f32 to vector<128x16xf32>
    %216 = arith.maximumf %214, %215 : vector<128x16xf32>
    %c24 = arith.constant 24 : index
    %c0_71 = arith.constant 0 : index
    %217 = vector.load %arg14[%c24, %c0_71] : memref<56x32xf32, #tpu.memory_space<vmem>>, vector<16x32xf32>
    %cst_72 = arith.constant dense<0.000000e+00> : vector<128x32xf32>
    %218 = tpu.matmul %216, %217, %cst_72 {dimension_numbers = #tpu.dot_dimension_numbers<[1], [0], [0], [1], [0, 0, 1, 1], [], []>} : vector<128x16xf32>, vector<16x32xf32>, vector<128x32xf32> -> vector<128x32xf32>
    %219 = arith.addf %118, %218 : vector<128x32xf32>
    %c0_73 = arith.constant 0 : index
    %c0_74 = arith.constant 0 : index
    %220 = vector.load %arg12[%c0_73, %c0_74] : memref<16x16xf32, #tpu.memory_space<vmem>>, vector<16x16xf32>
    %cst_75 = arith.constant dense<0.000000e+00> : vector<128x16xf32>
    %221 = tpu.matmul %216, %220, %cst_75 {dimension_numbers = #tpu.dot_dimension_numbers<[1], [0], [0], [1], [0, 0, 1, 1], [], []>} : vector<128x16xf32>, vector<16x16xf32>, vector<128x16xf32> -> vector<128x16xf32>
    %c0_76 = arith.constant 0 : index
    %c0_77 = arith.constant 0 : index
    %222 = vector.load %arg3[%c0_76, %c0_77] : memref<128x128xf32, #tpu.memory_space<vmem>>, vector<128x128xf32>
    %cst_78 = arith.constant dense<0.000000e+00> : vector<128x16xf32>
    %223 = tpu.matmul %222, %221, %cst_78 {dimension_numbers = #tpu.dot_dimension_numbers<[1], [0], [0], [1], [0, 0, 1, 1], [], []>} : vector<128x128xf32>, vector<128x16xf32>, vector<128x16xf32> -> vector<128x16xf32>
    %c0_79 = arith.constant 0 : index
    %c0_80 = arith.constant 0 : index
    %224 = vector.load %arg13[%c0_79, %c0_80] : memref<1x16xf32, #tpu.memory_space<vmem>>, vector<1x16xf32>
    %225 = vector.broadcast %224 : vector<1x16xf32> to vector<128x16xf32>
    %226 = arith.addf %223, %225 : vector<128x16xf32>
    %c40 = arith.constant 40 : index
    %c0_81 = arith.constant 0 : index
    %227 = vector.load %arg14[%c40, %c0_81] : memref<56x32xf32, #tpu.memory_space<vmem>>, vector<16x32xf32>
    %cst_82 = arith.constant dense<0.000000e+00> : vector<128x32xf32>
    %228 = tpu.matmul %226, %227, %cst_82 {dimension_numbers = #tpu.dot_dimension_numbers<[1], [0], [0], [1], [0, 0, 1, 1], [], []>} : vector<128x16xf32>, vector<16x32xf32>, vector<128x32xf32> -> vector<128x32xf32>
    %229 = arith.addf %219, %228 : vector<128x32xf32>
    %cst_83 = arith.constant 0.000000e+00 : f32
    %230 = vector.broadcast %cst_83 : f32 to vector<128x32xf32>
    %231 = arith.maximumf %229, %230 : vector<128x32xf32>
    %cst_84 = arith.constant dense<0.000000e+00> : vector<32xf32>
    %232 = vector.multi_reduction <add>, %231, %cst_84 [0] : vector<128x32xf32> to vector<32xf32>
    %233 = vector.shape_cast %232 : vector<32xf32> to vector<1x32xf32>
    %cst_85 = arith.constant 1.280000e+02 : f32
    %234 = vector.broadcast %cst_85 : f32 to vector<1x32xf32>
    %235 = arith.divf %233, %234 : vector<1x32xf32>
    %236 = vector.broadcast %235 : vector<1x32xf32> to vector<128x32xf32>
    %237 = arith.subf %231, %236 : vector<128x32xf32>
    %238 = arith.mulf %237, %237 : vector<128x32xf32>
    %cst_86 = arith.constant dense<0.000000e+00> : vector<32xf32>
    %239 = vector.multi_reduction <add>, %238, %cst_86 [0] : vector<128x32xf32> to vector<32xf32>
    %240 = vector.shape_cast %239 : vector<32xf32> to vector<1x32xf32>
    %cst_87 = arith.constant 1.280000e+02 : f32
    %241 = vector.broadcast %cst_87 : f32 to vector<1x32xf32>
    %242 = arith.divf %240, %241 : vector<1x32xf32>
    %243 = vector.broadcast %235 : vector<1x32xf32> to vector<128x32xf32>
    %244 = arith.subf %231, %243 : vector<128x32xf32>
    %cst_88 = arith.constant 9.99999974E-6 : f32
    %245 = vector.broadcast %cst_88 : f32 to vector<1x32xf32>
    %246 = arith.addf %242, %245 : vector<1x32xf32>
    %247 = math.rsqrt %246 : vector<1x32xf32>
    %248 = vector.broadcast %247 : vector<1x32xf32> to vector<128x32xf32>
    %249 = arith.mulf %244, %248 : vector<128x32xf32>
    %250 = vector.broadcast %12 : vector<1x32xf32> to vector<128x32xf32>
    %251 = arith.mulf %249, %250 : vector<128x32xf32>
    %252 = vector.broadcast %13 : vector<1x32xf32> to vector<128x32xf32>
    %253 = arith.addf %251, %252 : vector<128x32xf32>
    %c0_89 = arith.constant 0 : index
    %c0_90 = arith.constant 0 : index
    %254 = vector.load %arg16[%c0_89, %c0_90] : memref<32x16xf32, #tpu.memory_space<vmem>>, vector<32x16xf32>
    %cst_91 = arith.constant dense<0.000000e+00> : vector<128x16xf32>
    %255 = tpu.matmul %253, %254, %cst_91 {dimension_numbers = #tpu.dot_dimension_numbers<[1], [0], [0], [1], [0, 0, 1, 1], [], []>} : vector<128x32xf32>, vector<32x16xf32>, vector<128x16xf32> -> vector<128x16xf32>
    %c0_92 = arith.constant 0 : index
    %c0_93 = arith.constant 0 : index
    %256 = vector.load %arg17[%c0_92, %c0_93] : memref<1x16xf32, #tpu.memory_space<vmem>>, vector<1x16xf32>
    %257 = vector.broadcast %256 : vector<1x16xf32> to vector<128x16xf32>
    %258 = arith.addf %255, %257 : vector<128x16xf32>
    %cst_94 = arith.constant 0.000000e+00 : f32
    %259 = vector.broadcast %cst_94 : f32 to vector<128x16xf32>
    %260 = arith.maximumf %258, %259 : vector<128x16xf32>
    %c0_95 = arith.constant 0 : index
    %c0_96 = arith.constant 0 : index
    %261 = vector.load %arg4[%c0_95, %c0_96] : memref<2x128xf32, #tpu.memory_space<vmem>>, vector<2x128xf32>
    %cst_97 = arith.constant dense<0.000000e+00> : vector<2x16xf32>
    %262 = tpu.matmul %261, %260, %cst_97 {dimension_numbers = #tpu.dot_dimension_numbers<[1], [0], [0], [1], [0, 0, 1, 1], [], []>} : vector<2x128xf32>, vector<128x16xf32>, vector<2x16xf32> -> vector<2x16xf32>
    %c0_98 = arith.constant 0 : index
    %c0_99 = arith.constant 0 : index
    %263 = vector.load %arg18[%c0_98, %c0_99] : memref<16x3xf32, #tpu.memory_space<vmem>>, vector<16x3xf32>
    %cst_100 = arith.constant dense<0.000000e+00> : vector<2x3xf32>
    %264 = tpu.matmul %262, %263, %cst_100 {dimension_numbers = #tpu.dot_dimension_numbers<[1], [0], [0], [1], [0, 0, 1, 1], [], []>} : vector<2x16xf32>, vector<16x3xf32>, vector<2x3xf32> -> vector<2x3xf32>
    %c0_101 = arith.constant 0 : index
    %c0_102 = arith.constant 0 : index
    %265 = vector.load %arg19[%c0_101, %c0_102] : memref<1x3xf32, #tpu.memory_space<vmem>>, vector<1x3xf32>
    %266 = vector.broadcast %265 : vector<1x3xf32> to vector<2x3xf32>
    %267 = arith.addf %264, %266 : vector<2x3xf32>
    %c0_103 = arith.constant 0 : index
    %c0_104 = arith.constant 0 : index
    %268 = vector.load %arg20[%c0_103, %c0_104] : memref<2x3xf32, #tpu.memory_space<vmem>>, vector<2x3xf32>
    tpu.vector_store %arg20[%c0_103, %c0_104], %267 {strides = array<i32>} : memref<2x3xf32, #tpu.memory_space<vmem>>, vector<2x3xf32>,
    return
  }
}

</mosaic_0001>

<llo_original>
// kernel: tpu_custom_call.1
$region0: #{tpu_custom_call.1}
  #allocation0 [shape = 'u32[]', space=smem, size = 0x4, offset = 0x4, fixed_abs, tag = 'smem constant byte address 0x4 - core index']
  #allocation1 [shape = 'u32[144,128]{1,0:T(1,128)}', space=vmem, size = 0x12000, scoped, tag = 'internal scratch']
  %s0 = inlined_call_operand.vmem [shape: f32[16], index: 0, kind: input, shape index: {}]
  %s1 = inlined_call_operand.vmem [shape: f32[128,8], index: 1, kind: input, shape index: {}]
  %s2 = inlined_call_operand.vmem [shape: f32[128,128], index: 2, kind: input, shape index: {}]
  %s3 = inlined_call_operand.vmem [shape: f32[128,128], index: 3, kind: input, shape index: {}]
  %s4 = inlined_call_operand.hbm [shape: f32[2,128], index: 4, kind: input, shape index: {}]
  %s5 = inlined_call_operand.hbm [shape: f32[4,128,128], index: 5, kind: input, shape index: {}]
  %s6 = inlined_call_operand.hbm [shape: f32[8,34], index: 6, kind: input, shape index: {}]
  %s7 = inlined_call_operand.hbm [shape: f32[2,32], index: 7, kind: input, shape index: {}]
  %s8 = inlined_call_operand.hbm [shape: f32[1,16], index: 8, kind: input, shape index: {}]
  %s9 = inlined_call_operand.vmem [shape: f32[16,34], index: 9, kind: input, shape index: {}]
  %s10 = inlined_call_operand.hbm [shape: f32[2,32], index: 10, kind: input, shape index: {}]
  %s11 = inlined_call_operand.hbm [shape: f32[1,16], index: 11, kind: input, shape index: {}]
  %s12 = inlined_call_operand.vmem [shape: f32[16,16], index: 12, kind: input, shape index: {}]
  %s13 = inlined_call_operand.hbm [shape: f32[1,16], index: 13, kind: input, shape index: {}]
  %s14 = inlined_call_operand.vmem [shape: f32[56,32], index: 14, kind: input, shape index: {}]
  %s15 = inlined_call_operand.vmem [shape: f32[3,32], index: 15, kind: input, shape index: {}]
  %s16 = inlined_call_operand.vmem [shape: f32[32,16], index: 16, kind: input, shape index: {}]
  %s17 = inlined_call_operand.vmem [shape: f32[1,16], index: 17, kind: input, shape index: {}]
  %s18 = inlined_call_operand.vmem [shape: f32[16,3], index: 18, kind: input, shape index: {}]
  %s19 = inlined_call_operand.vmem [shape: f32[1,3], index: 19, kind: input, shape index: {}]
  %s20 = inlined_call_operand.hbm [shape: f32[2,3], index: 20, kind: output, shape index: {}]
  %s21 = sld [smem:[#allocation0]]
  $region126: #{tpu_custom_call.1} parent=0
    _
  %s23 = ssub.s32 1, %s21
  %s24 = scalar_select 0, %s23, %s21
  $region1: #{tpu_custom_call.1} parent=0
    #allocation2 [shape = 'u8[512]{0}', space=smem, size = 0x200, scoped, tag = 'input window, operand 0, single buffered']
    #allocation3 [shape = 's32[1]{0}', space=sflag, size = 0x4, scoped, tag = 'scoped memory for tpu_custom_call.1']
    #allocation4 [shape = 's32[1]{0}', space=sflag, size = 0x4, scoped, tag = 'scoped memory for tpu_custom_call.1']
    #allocation5 [shape = 's32[1]{0}', space=sflag, size = 0x4, scoped, tag = 'scoped memory for tpu_custom_call.1']
    #allocation6 [shape = 'u8[1024]{0}', space=vmem, size = 0x400, scoped, tag = 'input window, operand 4, single buffered']
    #allocation7 [shape = 'u8[262144]{0}', space=vmem, size = 0x40000, scoped, tag = 'input window, operand 5, single buffered']
    #allocation8 [shape = 's32[1]{0}', space=sflag, size = 0x4, scoped, tag = 'scoped memory for tpu_custom_call.1']
    #allocation9 [shape = 'u8[4096]{0}', space=vmem, size = 0x1000, scoped, tag = 'input window, operand 6, single buffered']
    #allocation10 [shape = 'u8[1024]{0}', space=vmem, size = 0x400, scoped, tag = 'input window, operand 7, single buffered']
    #allocation11 [shape = 's32[1]{0}', space=sflag, size = 0x4, scoped, tag = 'scoped memory for tpu_custom_call.1']
    #allocation12 [shape = 'u8[512]{0}', space=vmem, size = 0x400, scoped, tag = 'input window, operand 8, single buffered']
    #allocation13 [shape = 'u8[1024]{0}', space=vmem, size = 0x400, scoped, tag = 'input window, operand 10, single buffered']
    #allocation14 [shape = 's32[1]{0}', space=sflag, size = 0x4, scoped, tag = 'scoped memory for tpu_custom_call.1']
    #allocation15 [shape = 'u8[512]{0}', space=vmem, size = 0x400, scoped, tag = 'input window, operand 11, single buffered']
    #allocation16 [shape = 'u8[512]{0}', space=vmem, size = 0x400, scoped, tag = 'input window, operand 13, single buffered']
    #allocation17 [shape = 's32[1]{0}', space=sflag, size = 0x4, scoped, tag = 'scoped memory for tpu_custom_call.1']
    #allocation18 [shape = 'u8[1024]{0}', space=vmem, size = 0x400, scoped, tag = 'output window, operand 0, single buffered']
    %25 = vsyncpa [#allocation5], 0
    %26 = vsyncpa [#allocation3], 0
    %27 = vsyncpa [#allocation8], 0
    %28 = vsyncpa [#allocation11], 0
    %29 = vsyncpa [#allocation14], 0
    %30 = vsyncpa [#allocation17], 0
    %31 = vsyncpa [#allocation4], 0
    // Predicated region
    $region2: #{tpu_custom_call.1} parent=1 // pred_check
      _
    $region3: #{tpu_custom_call.1} parent=1 // pred_check_branch
      %33 = sbr.rel (0) target = $region5
    $region4: #{tpu_custom_call.1} parent=1 // pred_region
      %s35 = ssub.s32 16, 16
      %36 = vsyncadd [#allocation5], %s35
      %s38 = sshll.u32 %s0, 4
      %s39 = int_to_ptr.vmem [resolvable:$true] %s38
      %41 = dma.vmem_to_smem %s39, 16, [#allocation2], [#allocation5]
    $region5: #{tpu_custom_call.1} parent=1 // pred_fallthru
      _
    // Predicated region
    $region6: #{tpu_custom_call.1} parent=1 // pred_check
      _
    $region7: #{tpu_custom_call.1} parent=1 // pred_check_branch
      %43 = sbr.rel (0) target = $region9
    $region8: #{tpu_custom_call.1} parent=1 // pred_region
      _
    $region9: #{tpu_custom_call.1} parent=1 // pred_fallthru
      _
    // Predicated region
    $region10: #{tpu_custom_call.1} parent=1 // pred_check
      _
    $region11: #{tpu_custom_call.1} parent=1 // pred_check_branch
      %45 = sbr.rel (0) target = $region13
    $region12: #{tpu_custom_call.1} parent=1 // pred_region
      _
    $region13: #{tpu_custom_call.1} parent=1 // pred_fallthru
      _
    // Predicated region
    $region14: #{tpu_custom_call.1} parent=1 // pred_check
      _
    $region15: #{tpu_custom_call.1} parent=1 // pred_check_branch
      %47 = sbr.rel (0) target = $region17
    $region16: #{tpu_custom_call.1} parent=1 // pred_region
      _
    $region17: #{tpu_custom_call.1} parent=1 // pred_fallthru
      _
    // Predicated region
    $region18: #{tpu_custom_call.1} parent=1 // pred_check
      _
    $region19: #{tpu_custom_call.1} parent=1 // pred_check_branch
      %49 = sbr.rel (0) target = $region21
    $region20: #{tpu_custom_call.1} parent=1 // pred_region
      %s51 = ssub.s32 32, 32
      %52 = vsyncadd [#allocation3], %s51
      %s54 = sshll.u32 [#allocation6], 4
      %s55 = int_to_ptr.vmem [resolvable:$true] %s54
      %57 = dma.hbm_to_vmem [thread:$0]  %s4, 32, %s55, [#allocation3]
    $region21: #{tpu_custom_call.1} parent=1 // pred_fallthru
      _
    // Predicated region
    $region22: #{tpu_custom_call.1} parent=1 // pred_check
      _
    $region23: #{tpu_custom_call.1} parent=1 // pred_check_branch
      %59 = sbr.rel (0) target = $region25
    $region24: #{tpu_custom_call.1} parent=1 // pred_region
      %s61 = ssub.s32 8192, 8192
      %62 = vsyncadd [#allocation8], %s61
      %s63 = sshll.u32 [#allocation7], 4
      %s64 = int_to_ptr.vmem [resolvable:$true] %s63
      %69 = dma.hbm_to_vmem [thread:$0]  %s5, 8192, %s64, [#allocation8], 128, 128, 8
    $region25: #{tpu_custom_call.1} parent=1 // pred_fallthru
      _
    // Predicated region
    $region26: #{tpu_custom_call.1} parent=1 // pred_check
      _
    $region27: #{tpu_custom_call.1} parent=1 // pred_check_branch
      %71 = sbr.rel (0) target = $region29
    $region28: #{tpu_custom_call.1} parent=1 // pred_region
      %s73 = ssub.s32 128, 128
      %74 = vsyncadd [#allocation8], %s73
      %s76 = sshll.u32 [#allocation9], 4
      %s77 = int_to_ptr.vmem [resolvable:$true] %s76
      %79 = dma.hbm_to_vmem [thread:$0]  %s6, 128, %s77, [#allocation8]
    $region29: #{tpu_custom_call.1} parent=1 // pred_fallthru
      _
    // Predicated region
    $region30: #{tpu_custom_call.1} parent=1 // pred_check
      _
    $region31: #{tpu_custom_call.1} parent=1 // pred_check_branch
      %81 = sbr.rel (0) target = $region33
    $region32: #{tpu_custom_call.1} parent=1 // pred_region
      %s83 = ssub.s32 32, 32
      %84 = vsyncadd [#allocation11], %s83
      %s86 = sshll.u32 [#allocation10], 4
      %s87 = int_to_ptr.vmem [resolvable:$true] %s86
      %89 = dma.hbm_to_vmem [thread:$0]  %s7, 32, %s87, [#allocation11]
    $region33: #{tpu_custom_call.1} parent=1 // pred_fallthru
      _
    // Predicated region
    $region34: #{tpu_custom_call.1} parent=1 // pred_check
      _
    $region35: #{tpu_custom_call.1} parent=1 // pred_check_branch
      %91 = sbr.rel (0) target = $region37
    $region36: #{tpu_custom_call.1} parent=1 // pred_region
      %s93 = ssub.s32 16, 16
      %94 = vsyncadd [#allocation11], %s93
      %s96 = sshll.u32 [#allocation12], 4
      %s97 = int_to_ptr.vmem [resolvable:$true] %s96
      %99 = dma.hbm_to_vmem [thread:$0]  %s8, 16, %s97, [#allocation11]
    $region37: #{tpu_custom_call.1} parent=1 // pred_fallthru
      _
    // Predicated region
    $region38: #{tpu_custom_call.1} parent=1 // pred_check
      _
    $region39: #{tpu_custom_call.1} parent=1 // pred_check_branch
      %101 = sbr.rel (0) target = $region41
    $region40: #{tpu_custom_call.1} parent=1 // pred_region
      _
    $region41: #{tpu_custom_call.1} parent=1 // pred_fallthru
      _
    // Predicated region
    $region42: #{tpu_custom_call.1} parent=1 // pred_check
      _
    $region43: #{tpu_custom_call.1} parent=1 // pred_check_branch
      %103 = sbr.rel (0) target = $region45
    $region44: #{tpu_custom_call.1} parent=1 // pred_region
      %s105 = ssub.s32 32, 32
      %106 = vsyncadd [#allocation14], %s105
      %s108 = sshll.u32 [#allocation13], 4
      %s109 = int_to_ptr.vmem [resolvable:$true] %s108
      %111 = dma.hbm_to_vmem [thread:$0]  %s10, 32, %s109, [#allocation14]
    $region45: #{tpu_custom_call.1} parent=1 // pred_fallthru
      _
    // Predicated region
    $region46: #{tpu_custom_call.1} parent=1 // pred_check
      _
    $region47: #{tpu_custom_call.1} parent=1 // pred_check_branch
      %113 = sbr.rel (0) target = $region49
    $region48: #{tpu_custom_call.1} parent=1 // pred_region
      %s115 = ssub.s32 16, 16
      %116 = vsyncadd [#allocation14], %s115
      %s118 = sshll.u32 [#allocation15], 4
      %s119 = int_to_ptr.vmem [resolvable:$true] %s118
      %121 = dma.hbm_to_vmem [thread:$0]  %s11, 16, %s119, [#allocation14]
    $region49: #{tpu_custom_call.1} parent=1 // pred_fallthru
      _
    // Predicated region
    $region50: #{tpu_custom_call.1} parent=1 // pred_check
      _
    $region51: #{tpu_custom_call.1} parent=1 // pred_check_branch
      %123 = sbr.rel (0) target = $region53
    $region52: #{tpu_custom_call.1} parent=1 // pred_region
      _
    $region53: #{tpu_custom_call.1} parent=1 // pred_fallthru
      _
    // Predicated region
    $region54: #{tpu_custom_call.1} parent=1 // pred_check
      _
    $region55: #{tpu_custom_call.1} parent=1 // pred_check_branch
      %125 = sbr.rel (0) target = $region57
    $region56: #{tpu_custom_call.1} parent=1 // pred_region
      %s127 = ssub.s32 16, 16
      %128 = vsyncadd [#allocation17], %s127
      %s130 = sshll.u32 [#allocation16], 4
      %s131 = int_to_ptr.vmem [resolvable:$true] %s130
      %133 = dma.hbm_to_vmem [thread:$0]  %s13, 16, %s131, [#allocation17]
    $region57: #{tpu_custom_call.1} parent=1 // pred_fallthru
      _
    // Predicated region
    $region58: #{tpu_custom_call.1} parent=1 // pred_check
      _
    $region59: #{tpu_custom_call.1} parent=1 // pred_check_branch
      %135 = sbr.rel (0) target = $region61
    $region60: #{tpu_custom_call.1} parent=1 // pred_region
      _
    $region61: #{tpu_custom_call.1} parent=1 // pred_fallthru
      _
    // Predicated region
    $region62: #{tpu_custom_call.1} parent=1 // pred_check
      _
    $region63: #{tpu_custom_call.1} parent=1 // pred_check_branch
      %137 = sbr.rel (0) target = $region65
    $region64: #{tpu_custom_call.1} parent=1 // pred_region
      _
    $region65: #{tpu_custom_call.1} parent=1 // pred_fallthru
      _
    // Predicated region
    $region66: #{tpu_custom_call.1} parent=1 // pred_check
      _
    $region67: #{tpu_custom_call.1} parent=1 // pred_check_branch
      %139 = sbr.rel (0) target = $region69
    $region68: #{tpu_custom_call.1} parent=1 // pred_region
      _
    $region69: #{tpu_custom_call.1} parent=1 // pred_fallthru
      _
    // Predicated region
    $region70: #{tpu_custom_call.1} parent=1 // pred_check
      _
    $region71: #{tpu_custom_call.1} parent=1 // pred_check_branch
      %141 = sbr.rel (0) target = $region73
    $region72: #{tpu_custom_call.1} parent=1 // pred_region
      _
    $region73: #{tpu_custom_call.1} parent=1 // pred_fallthru
      _
    // Predicated region
    $region74: #{tpu_custom_call.1} parent=1 // pred_check
      _
    $region75: #{tpu_custom_call.1} parent=1 // pred_check_branch
      %143 = sbr.rel (0) target = $region77
    $region76: #{tpu_custom_call.1} parent=1 // pred_region
      _
    $region77: #{tpu_custom_call.1} parent=1 // pred_fallthru
      _
    // Predicated region
    $region78: #{tpu_custom_call.1} parent=1 // pred_check
      _
    $region79: #{tpu_custom_call.1} parent=1 // pred_check_branch
      %145 = sbr.rel (0) target = $region81
    $region80: #{tpu_custom_call.1} parent=1 // pred_region
      _
    $region81: #{tpu_custom_call.1} parent=1 // pred_fallthru
      _
    // Predicated region
    $region82: #{tpu_custom_call.1} parent=1 // pred_check
      _
    $region83: #{tpu_custom_call.1} parent=1 // pred_check_branch
      %147 = sbr.rel (0) target = $region85
    $region84: #{tpu_custom_call.1} parent=1 // pred_region
      %148 = dma.done [#allocation5], 16
    $region85: #{tpu_custom_call.1} parent=1 // pred_fallthru
      _
    // Predicated region
    $region86: #{tpu_custom_call.1} parent=1 // pred_check
      _
    $region87: #{tpu_custom_call.1} parent=1 // pred_check_branch
      %150 = sbr.rel (0) target = $region89
    $region88: #{tpu_custom_call.1} parent=1 // pred_region
      %151 = dma.done [#allocation3], 32
    $region89: #{tpu_custom_call.1} parent=1 // pred_fallthru
      _
    // Predicated region
    $region90: #{tpu_custom_call.1} parent=1 // pred_check
      _
    $region91: #{tpu_custom_call.1} parent=1 // pred_check_branch
      %153 = sbr.rel (0) target = $region93
    $region92: #{tpu_custom_call.1} parent=1 // pred_region
      %154 = dma.done [#allocation8], 8192
    $region93: #{tpu_custom_call.1} parent=1 // pred_fallthru
      _
    // Predicated region
    $region94: #{tpu_custom_call.1} parent=1 // pred_check
      _
    $region95: #{tpu_custom_call.1} parent=1 // pred_check_branch
      %156 = sbr.rel (0) target = $region97
    $region96: #{tpu_custom_call.1} parent=1 // pred_region
      %157 = dma.done [#allocation8], 128
    $region97: #{tpu_custom_call.1} parent=1 // pred_fallthru
      _
    // Predicated region
    $region98: #{tpu_custom_call.1} parent=1 // pred_check
      _
    $region99: #{tpu_custom_call.1} parent=1 // pred_check_branch
      %159 = sbr.rel (0) target = $region101
    $region100: #{tpu_custom_call.1} parent=1 // pred_region
      %160 = dma.done [#allocation11], 32
    $region101: #{tpu_custom_call.1} parent=1 // pred_fallthru
      _
    // Predicated region
    $region102: #{tpu_custom_call.1} parent=1 // pred_check
      _
    $region103: #{tpu_custom_call.1} parent=1 // pred_check_branch
      %162 = sbr.rel (0) target = $region105
    $region104: #{tpu_custom_call.1} parent=1 // pred_region
      %163 = dma.done [#allocation11], 16
    $region105: #{tpu_custom_call.1} parent=1 // pred_fallthru
      _
    // Predicated region
    $region106: #{tpu_custom_call.1} parent=1 // pred_check
      _
    $region107: #{tpu_custom_call.1} parent=1 // pred_check_branch
      %165 = sbr.rel (0) target = $region109
    $region108: #{tpu_custom_call.1} parent=1 // pred_region
      %166 = dma.done [#allocation14], 32
    $region109: #{tpu_custom_call.1} parent=1 // pred_fallthru
      _
    // Predicated region
    $region110: #{tpu_custom_call.1} parent=1 // pred_check
      _
    $region111: #{tpu_custom_call.1} parent=1 // pred_check_branch
      %168 = sbr.rel (0) target = $region113
    $region112: #{tpu_custom_call.1} parent=1 // pred_region
      %169 = dma.done [#allocation14], 16
    $region113: #{tpu_custom_call.1} parent=1 // pred_fallthru
      _
    // Predicated region
    $region114: #{tpu_custom_call.1} parent=1 // pred_check
      _
    $region115: #{tpu_custom_call.1} parent=1 // pred_check_branch
      %171 = sbr.rel (0) target = $region117
    $region116: #{tpu_custom_call.1} parent=1 // pred_region
      %172 = dma.done [#allocation17], 16
    $region117: #{tpu_custom_call.1} parent=1 // pred_fallthru
      _
    %173 = sfence
    %v174 = vld [vmem:[%s1] sm:$0xff]
    %v175 = vld [vmem:[%s1 + $0x8] sm:$0xff]
    %v176 = vld [vmem:[%s1 + $0x10] sm:$0xff]
    %v177 = vld [vmem:[%s1 + $0x18] sm:$0xff]
    %v178 = vld [vmem:[%s1 + $0x20] sm:$0xff]
    %v179 = vld [vmem:[%s1 + $0x28] sm:$0xff]
    %v180 = vld [vmem:[%s1 + $0x30] sm:$0xff]
    %v181 = vld [vmem:[%s1 + $0x38] sm:$0xff]
    %v182 = vld [vmem:[%s1 + $0x40] sm:$0xff]
    %v183 = vld [vmem:[%s1 + $0x48] sm:$0xff]
    %v184 = vld [vmem:[%s1 + $0x50] sm:$0xff]
    %v185 = vld [vmem:[%s1 + $0x58] sm:$0xff]
    %v186 = vld [vmem:[%s1 + $0x60] sm:$0xff]
    %v187 = vld [vmem:[%s1 + $0x68] sm:$0xff]
    %v188 = vld [vmem:[%s1 + $0x70] sm:$0xff]
    %v189 = vld [vmem:[%s1 + $0x78] sm:$0xff]
    %v190 = vld [vmem:[%s2] sm:$0xff]
    %v191 = vld [vmem:[%s2 + $0x8] sm:$0xff]
    %v192 = vld [vmem:[%s2 + $0x10] sm:$0xff]
    %v193 = vld [vmem:[%s2 + $0x18] sm:$0xff]
    %v194 = vld [vmem:[%s2 + $0x20] sm:$0xff]
    %v195 = vld [vmem:[%s2 + $0x28] sm:$0xff]
    %v196 = vld [vmem:[%s2 + $0x30] sm:$0xff]
    %v197 = vld [vmem:[%s2 + $0x38] sm:$0xff]
    %v198 = vld [vmem:[%s2 + $0x40] sm:$0xff]
    %v199 = vld [vmem:[%s2 + $0x48] sm:$0xff]
    %v200 = vld [vmem:[%s2 + $0x50] sm:$0xff]
    %v201 = vld [vmem:[%s2 + $0x58] sm:$0xff]
    %v202 = vld [vmem:[%s2 + $0x60] sm:$0xff]
    %v203 = vld [vmem:[%s2 + $0x68] sm:$0xff]
    %v204 = vld [vmem:[%s2 + $0x70] sm:$0xff]
    %v205 = vld [vmem:[%s2 + $0x78] sm:$0xff]
    %v206 = vld [vmem:[#allocation7] sm:$0xff]
    %v207 = vld [vmem:[#allocation7 + $0x8] sm:$0xff]
    %v208 = vld [vmem:[#allocation7 + $0x10] sm:$0xff]
    %v209 = vld [vmem:[#allocation7 + $0x18] sm:$0xff]
    %v210 = vld [vmem:[#allocation7 + $0x20] sm:$0xff]
    %v211 = vld [vmem:[#allocation7 + $0x28] sm:$0xff]
    %v212 = vld [vmem:[#allocation7 + $0x30] sm:$0xff]
    %v213 = vld [vmem:[#allocation7 + $0x38] sm:$0xff]
    %v214 = vld [vmem:[#allocation7 + $0x40] sm:$0xff]
    %v215 = vld [vmem:[#allocation7 + $0x48] sm:$0xff]
    %v216 = vld [vmem:[#allocation7 + $0x50] sm:$0xff]
    %v217 = vld [vmem:[#allocation7 + $0x58] sm:$0xff]
    %v218 = vld [vmem:[#allocation7 + $0x60] sm:$0xff]
    %v219 = vld [vmem:[#allocation7 + $0x68] sm:$0xff]
    %v220 = vld [vmem:[#allocation7 + $0x70] sm:$0xff]
    %v221 = vld [vmem:[#allocation7 + $0x78] sm:$0xff]
    %s222 = scalar_lea.vmem [#allocation7], 128
    %v223 = vld [vmem:[%s222] sm:$0xff]
    %v224 = vld [vmem:[%s222 + $0x8] sm:$0xff]
    %v225 = vld [vmem:[%s222 + $0x10] sm:$0xff]
    %v226 = vld [vmem:[%s222 + $0x18] sm:$0xff]
    %v227 = vld [vmem:[%s222 + $0x20] sm:$0xff]
    %v228 = vld [vmem:[%s222 + $0x28] sm:$0xff]
    %v229 = vld [vmem:[%s222 + $0x30] sm:$0xff]
    %v230 = vld [vmem:[%s222 + $0x38] sm:$0xff]
    %v231 = vld [vmem:[%s222 + $0x40] sm:$0xff]
    %v232 = vld [vmem:[%s222 + $0x48] sm:$0xff]
    %v233 = vld [vmem:[%s222 + $0x50] sm:$0xff]
    %v234 = vld [vmem:[%s222 + $0x58] sm:$0xff]
    %v235 = vld [vmem:[%s222 + $0x60] sm:$0xff]
    %v236 = vld [vmem:[%s222 + $0x68] sm:$0xff]
    %v237 = vld [vmem:[%s222 + $0x70] sm:$0xff]
    %v238 = vld [vmem:[%s222 + $0x78] sm:$0xff]
    %s239 = scalar_lea.vmem [#allocation7], 256
    %v240 = vld [vmem:[%s239] sm:$0xff]
    %v241 = vld [vmem:[%s239 + $0x8] sm:$0xff]
    %v242 = vld [vmem:[%s239 + $0x10] sm:$0xff]
    %v243 = vld [vmem:[%s239 + $0x18] sm:$0xff]
    %v244 = vld [vmem:[%s239 + $0x20] sm:$0xff]
    %v245 = vld [vmem:[%s239 + $0x28] sm:$0xff]
    %v246 = vld [vmem:[%s239 + $0x30] sm:$0xff]
    %v247 = vld [vmem:[%s239 + $0x38] sm:$0xff]
    %v248 = vld [vmem:[%s239 + $0x40] sm:$0xff]
    %v249 = vld [vmem:[%s239 + $0x48] sm:$0xff]
    %v250 = vld [vmem:[%s239 + $0x50] sm:$0xff]
    %v251 = vld [vmem:[%s239 + $0x58] sm:$0xff]
    %v252 = vld [vmem:[%s239 + $0x60] sm:$0xff]
    %v253 = vld [vmem:[%s239 + $0x68] sm:$0xff]
    %v254 = vld [vmem:[%s239 + $0x70] sm:$0xff]
    %v255 = vld [vmem:[%s239 + $0x78] sm:$0xff]
    %s256 = scalar_lea.vmem [#allocation7], 384
    %v257 = vld [vmem:[%s256] sm:$0xff]
    %v258 = vld [vmem:[%s256 + $0x8] sm:$0xff]
    %v259 = vld [vmem:[%s256 + $0x10] sm:$0xff]
    %v260 = vld [vmem:[%s256 + $0x18] sm:$0xff]
    %v261 = vld [vmem:[%s256 + $0x20] sm:$0xff]
    %v262 = vld [vmem:[%s256 + $0x28] sm:$0xff]
    %v263 = vld [vmem:[%s256 + $0x30] sm:$0xff]
    %v264 = vld [vmem:[%s256 + $0x38] sm:$0xff]
    %v265 = vld [vmem:[%s256 + $0x40] sm:$0xff]
    %v266 = vld [vmem:[%s256 + $0x48] sm:$0xff]
    %v267 = vld [vmem:[%s256 + $0x50] sm:$0xff]
    %v268 = vld [vmem:[%s256 + $0x58] sm:$0xff]
    %v269 = vld [vmem:[%s256 + $0x60] sm:$0xff]
    %v270 = vld [vmem:[%s256 + $0x68] sm:$0xff]
    %v271 = vld [vmem:[%s256 + $0x70] sm:$0xff]
    %v272 = vld [vmem:[%s256 + $0x78] sm:$0xff]
    %v273 = vld [vmem:[%s15] sm:$0x7]
    %v274 = vld [vmem:[%s14] sm:$0xff]
    %v275 = vlaneseq
    %v276 = vshrl.u32 %v275, 7
    %v277 = vsub.s32 0, %v276
    %v278 = vrot.slane %v273, %v277
    %vm279 = vcmask 64512
    %v281 = vsel %vm279, %v174, 0
    %v284 = vsel %vm279, %v175, 0
    %v287 = vsel %vm279, %v176, 0
    %v290 = vsel %vm279, %v177, 0
    %v293 = vsel %vm279, %v178, 0
    %v296 = vsel %vm279, %v179, 0
    %v299 = vsel %vm279, %v180, 0
    %v302 = vsel %vm279, %v181, 0
    %v305 = vsel %vm279, %v182, 0
    %v308 = vsel %vm279, %v183, 0
    %v311 = vsel %vm279, %v184, 0
    %v314 = vsel %vm279, %v185, 0
    %v317 = vsel %vm279, %v186, 0
    %v320 = vsel %vm279, %v187, 0
    %v323 = vsel %vm279, %v188, 0
    %v326 = vsel %vm279, %v189, 0
    %328 = vmatprep.subr.mxu0 0.0
    %329 = vmatpush1.msra.mxu0 %v274
    %330 = vmatprep.subr.mxu0 0.0
    %331 = vmatpush1.msra.mxu0 0.0
    %332 = vmatprep.subr.mxu0 0.0
    %333 = vmatpush1.msra.mxu0 0.0
    %334 = vmatprep.subr.mxu0 0.0
    %335 = vmatpush1.msra.mxu0 0.0
    %336 = vmatprep.subr.mxu0 0.0
    %337 = vmatpush1.msra.mxu0 0.0
    %338 = vmatprep.subr.mxu0 0.0
    %339 = vmatpush1.msra.mxu0 0.0
    %340 = vmatprep.subr.mxu0 0.0
    %341 = vmatpush1.msra.mxu0 0.0
    %342 = vmatprep.subr.mxu0 0.0
    %343 = vmatpush1.msra.mxu0 0.0
    %344 = vmatprep.subr.mxu0 0.0
    %345 = vmatpush1.msra.mxu0 0.0
    %346 = vmatprep.subr.mxu0 0.0
    %347 = vmatpush1.msra.mxu0 0.0
    %348 = vmatprep.subr.mxu0 0.0
    %349 = vmatpush1.msra.mxu0 0.0
    %350 = vmatprep.subr.mxu0 0.0
    %351 = vmatpush1.msra.mxu0 0.0
    %352 = vmatprep.subr.mxu0 0.0
    %353 = vmatpush1.msra.mxu0 0.0
    %354 = vmatprep.subr.mxu0 0.0
    %355 = vmatpush1.msra.mxu0 0.0
    %356 = vmatprep.subr.mxu0 0.0
    %357 = vmatpush1.msra.mxu0 0.0
    %358 = vmatprep.subr.mxu0 0.0
    %359 = vmatpush1.msra.mxu0 0.0
    %360 = vmatprep.subr.mxu0 0.0
    %361 = vmatpush1.msra.mxu0 0.0
    %362 = vmatprep.subr.mxu0 0.0
    %363 = vmatpush1.msra.mxu0 0.0
    %364 = vmatprep.subr.mxu0 0.0
    %365 = vmatpush1.msra.mxu0 0.0
    %366 = vmatprep.subr.mxu0 0.0
    %367 = vmatpush1.msra.mxu0 0.0
    %368 = vmatprep.subr.mxu0 0.0
    %369 = vmatpush1.msra.mxu0 0.0
    %370 = vmatprep.subr.mxu0 0.0
    %371 = vmatpush1.msra.mxu0 0.0
    %372 = vmatprep.subr.mxu0 0.0
    %373 = vmatpush1.msra.mxu0 0.0
    %374 = vmatprep.subr.mxu0 0.0
    %375 = vmatpush1.msra.mxu0 0.0
    %376 = vmatprep.subr.mxu0 0.0
    %377 = vmatpush1.msra.mxu0 0.0
    %378 = vmatprep.subr.mxu0 0.0
    %379 = vmatpush1.msra.mxu0 0.0
    %380 = vmatprep.subr.mxu0 0.0
    %381 = vmatpush1.msra.mxu0 0.0
    %382 = vmatprep.subr.mxu0 0.0
    %383 = vmatpush1.msra.mxu0 0.0
    %384 = vmatprep.subr.mxu0 0.0
    %385 = vmatpush1.msra.mxu0 0.0
    %386 = vmatprep.subr.mxu0 0.0
    %387 = vmatpush1.msra.mxu0 0.0
    %388 = vmatprep.subr.mxu0 0.0
    %389 = vmatpush1.msra.mxu0 0.0
    %390 = vmatprep.subr.mxu0 0.0
    %391 = vmatpush1.msra.mxu0 0.0
    %392 = vmatprep.mubr.f32.mxu0 0.0
    %393 = vmatmul.mubr.f32.gmra.mrb[0].mxu0 %v281
    %v394 = vpop.f32.mrb[0].mxu0
    %v395 = vadd.f32 %v278, %v394
    %v396 = vpop.f32.mrb[0].mxu0
    %397 = vmatprep.mubr.f32.mxu0 0.0
    %398 = vmatmul.mubr.f32.gmra.mrb[0].mxu0 %v284
    %v399 = vpop.f32.mrb[0].mxu0
    %v400 = vadd.f32 %v278, %v399
    %v401 = vpop.f32.mrb[0].mxu0
    %402 = vmatprep.mubr.f32.mxu0 0.0
    %403 = vmatmul.mubr.f32.gmra.mrb[0].mxu0 %v287
    %v404 = vpop.f32.mrb[0].mxu0
    %v405 = vadd.f32 %v278, %v404
    %v406 = vpop.f32.mrb[0].mxu0
    %407 = vmatprep.mubr.f32.mxu0 0.0
    %408 = vmatmul.mubr.f32.gmra.mrb[0].mxu0 %v290
    %v409 = vpop.f32.mrb[0].mxu0
    %v410 = vadd.f32 %v278, %v409
    %v411 = vpop.f32.mrb[0].mxu0
    %412 = vmatprep.mubr.f32.mxu0 0.0
    %413 = vmatmul.mubr.f32.gmra.mrb[0].mxu0 %v293
    %v414 = vpop.f32.mrb[0].mxu0
    %v415 = vadd.f32 %v278, %v414
    %v416 = vpop.f32.mrb[0].mxu0
    %417 = vmatprep.mubr.f32.mxu0 0.0
    %418 = vmatmul.mubr.f32.gmra.mrb[0].mxu0 %v296
    %v419 = vpop.f32.mrb[0].mxu0
    %v420 = vadd.f32 %v278, %v419
    %v421 = vpop.f32.mrb[0].mxu0
    %422 = vmatprep.mubr.f32.mxu0 0.0
    %423 = vmatmul.mubr.f32.gmra.mrb[0].mxu0 %v299
    %v424 = vpop.f32.mrb[0].mxu0
    %v425 = vadd.f32 %v278, %v424
    %v426 = vpop.f32.mrb[0].mxu0
    %427 = vmatprep.mubr.f32.mxu0 0.0
    %428 = vmatmul.mubr.f32.gmra.mrb[0].mxu0 %v302
    %v429 = vpop.f32.mrb[0].mxu0
    %v430 = vadd.f32 %v278, %v429
    %v431 = vpop.f32.mrb[0].mxu0
    %432 = vmatprep.mubr.f32.mxu0 0.0
    %433 = vmatmul.mubr.f32.gmra.mrb[0].mxu0 %v305
    %v434 = vpop.f32.mrb[0].mxu0
    %v435 = vadd.f32 %v278, %v434
    %v436 = vpop.f32.mrb[0].mxu0
    %437 = vmatprep.mubr.f32.mxu0 0.0
    %438 = vmatmul.mubr.f32.gmra.mrb[0].mxu0 %v308
    %v439 = vpop.f32.mrb[0].mxu0
    %v440 = vadd.f32 %v278, %v439
    %v441 = vpop.f32.mrb[0].mxu0
    %442 = vmatprep.mubr.f32.mxu0 0.0
    %443 = vmatmul.mubr.f32.gmra.mrb[0].mxu0 %v311
    %v444 = vpop.f32.mrb[0].mxu0
    %v445 = vadd.f32 %v278, %v444
    %v446 = vpop.f32.mrb[0].mxu0
    %447 = vmatprep.mubr.f32.mxu0 0.0
    %448 = vmatmul.mubr.f32.gmra.mrb[0].mxu0 %v314
    %v449 = vpop.f32.mrb[0].mxu0
    %v450 = vadd.f32 %v278, %v449
    %v451 = vpop.f32.mrb[0].mxu0
    %452 = vmatprep.mubr.f32.mxu0 0.0
    %453 = vmatmul.mubr.f32.gmra.mrb[0].mxu0 %v317
    %v454 = vpop.f32.mrb[0].mxu0
    %v455 = vadd.f32 %v278, %v454
    %v456 = vpop.f32.mrb[0].mxu0
    %457 = vmatprep.mubr.f32.mxu0 0.0
    %458 = vmatmul.mubr.f32.gmra.mrb[0].mxu0 %v320
    %v459 = vpop.f32.mrb[0].mxu0
    %v460 = vadd.f32 %v278, %v459
    %v461 = vpop.f32.mrb[0].mxu0
    %462 = vmatprep.mubr.f32.mxu0 0.0
    %463 = vmatmul.mubr.f32.gmra.mrb[0].mxu0 %v323
    %v464 = vpop.f32.mrb[0].mxu0
    %v465 = vadd.f32 %v278, %v464
    %v466 = vpop.f32.mrb[0].mxu0
    %467 = vmatprep.mubr.f32.mxu0 0.0
    %468 = vmatmul.mubr.f32.gmra.mrb[0].mxu0 %v326
    %v469 = vpop.f32.mrb[0].mxu0
    %v470 = vadd.f32 %v278, %v469
    %v471 = vpop.f32.mrb[0].mxu0
    %472 = vdwg.mxu0
    %v473 = vld [vmem:[#allocation9] sm:$0xff]
    %474 = vmatprep.subr.mxu0 0.0
    %475 = vmatpush1.msra.mxu0 %v473
    %476 = vmatprep.subr.mxu0 0.0
    %477 = vmatpush1.msra.mxu0 0.0
    %478 = vmatprep.subr.mxu0 0.0
    %479 = vmatpush1.msra.mxu0 0.0
    %480 = vmatprep.subr.mxu0 0.0
    %481 = vmatpush1.msra.mxu0 0.0
    %482 = vmatprep.subr.mxu0 0.0
    %483 = vmatpush1.msra.mxu0 0.0
    %484 = vmatprep.subr.mxu0 0.0
    %485 = vmatpush1.msra.mxu0 0.0
    %486 = vmatprep.subr.mxu0 0.0
    %487 = vmatpush1.msra.mxu0 0.0
    %488 = vmatprep.subr.mxu0 0.0
    %489 = vmatpush1.msra.mxu0 0.0
    %490 = vmatprep.subr.mxu0 0.0
    %491 = vmatpush1.msra.mxu0 0.0
    %492 = vmatprep.subr.mxu0 0.0
    %493 = vmatpush1.msra.mxu0 0.0
    %494 = vmatprep.subr.mxu0 0.0
    %495 = vmatpush1.msra.mxu0 0.0
    %496 = vmatprep.subr.mxu0 0.0
    %497 = vmatpush1.msra.mxu0 0.0
    %498 = vmatprep.subr.mxu0 0.0
    %499 = vmatpush1.msra.mxu0 0.0
    %500 = vmatprep.subr.mxu0 0.0
    %501 = vmatpush1.msra.mxu0 0.0
    %502 = vmatprep.subr.mxu0 0.0
    %503 = vmatpush1.msra.mxu0 0.0
    %504 = vmatprep.subr.mxu0 0.0
    %505 = vmatpush1.msra.mxu0 0.0
    %506 = vmatprep.subr.mxu0 0.0
    %507 = vmatpush1.msra.mxu0 0.0
    %508 = vmatprep.subr.mxu0 0.0
    %509 = vmatpush1.msra.mxu0 0.0
    %510 = vmatprep.subr.mxu0 0.0
    %511 = vmatpush1.msra.mxu0 0.0
    %512 = vmatprep.subr.mxu0 0.0
    %513 = vmatpush1.msra.mxu0 0.0
    %514 = vmatprep.subr.mxu0 0.0
    %515 = vmatpush1.msra.mxu0 0.0
    %516 = vmatprep.subr.mxu0 0.0
    %517 = vmatpush1.msra.mxu0 0.0
    %518 = vmatprep.subr.mxu0 0.0
    %519 = vmatpush1.msra.mxu0 0.0
    %520 = vmatprep.subr.mxu0 0.0
    %521 = vmatpush1.msra.mxu0 0.0
    %522 = vmatprep.subr.mxu0 0.0
    %523 = vmatpush1.msra.mxu0 0.0
    %524 = vmatprep.subr.mxu0 0.0
    %525 = vmatpush1.msra.mxu0 0.0
    %526 = vmatprep.subr.mxu0 0.0
    %527 = vmatpush1.msra.mxu0 0.0
    %528 = vmatprep.subr.mxu0 0.0
    %529 = vmatpush1.msra.mxu0 0.0
    %530 = vmatprep.subr.mxu0 0.0
    %531 = vmatpush1.msra.mxu0 0.0
    %532 = vmatprep.subr.mxu0 0.0
    %533 = vmatpush1.msra.mxu0 0.0
    %534 = vmatprep.subr.mxu0 0.0
    %535 = vmatpush1.msra.mxu0 0.0
    %536 = vmatprep.subr.mxu0 0.0
    %537 = vmatpush1.msra.mxu0 0.0
    %538 = vmatprep.mubr.f32.mxu0 0.0
    %539 = vmatmul.mubr.f32.gmra.mrb[0].mxu0 %v281
    %v540 = vpop.f32.mrb[0].mxu0
    %v541 = vadd.f32 0.0, %v540
    %v542 = vpop.f32.mrb[0].mxu0
    %543 = vmatprep.mubr.f32.mxu0 0.0
    %544 = vmatmul.mubr.f32.gmra.mrb[0].mxu0 %v284
    %v545 = vpop.f32.mrb[0].mxu0
    %v546 = vadd.f32 0.0, %v545
    %v547 = vpop.f32.mrb[0].mxu0
    %548 = vmatprep.mubr.f32.mxu0 0.0
    %549 = vmatmul.mubr.f32.gmra.mrb[0].mxu0 %v287
    %v550 = vpop.f32.mrb[0].mxu0
    %v551 = vadd.f32 0.0, %v550
    %v552 = vpop.f32.mrb[0].mxu0
    %553 = vmatprep.mubr.f32.mxu0 0.0
    %554 = vmatmul.mubr.f32.gmra.mrb[0].mxu0 %v290
    %v555 = vpop.f32.mrb[0].mxu0
    %v556 = vadd.f32 0.0, %v555
    %v557 = vpop.f32.mrb[0].mxu0
    %558 = vmatprep.mubr.f32.mxu0 0.0
    %559 = vmatmul.mubr.f32.gmra.mrb[0].mxu0 %v293
    %v560 = vpop.f32.mrb[0].mxu0
    %v561 = vadd.f32 0.0, %v560
    %v562 = vpop.f32.mrb[0].mxu0
    %563 = vmatprep.mubr.f32.mxu0 0.0
    %564 = vmatmul.mubr.f32.gmra.mrb[0].mxu0 %v296
    %v565 = vpop.f32.mrb[0].mxu0
    %v566 = vadd.f32 0.0, %v565
    %v567 = vpop.f32.mrb[0].mxu0
    %568 = vmatprep.mubr.f32.mxu0 0.0
    %569 = vmatmul.mubr.f32.gmra.mrb[0].mxu0 %v299
    %v570 = vpop.f32.mrb[0].mxu0
    %v571 = vadd.f32 0.0, %v570
    %v572 = vpop.f32.mrb[0].mxu0
    %573 = vmatprep.mubr.f32.mxu0 0.0
    %574 = vmatmul.mubr.f32.gmra.mrb[0].mxu0 %v302
    %v575 = vpop.f32.mrb[0].mxu0
    %v576 = vadd.f32 0.0, %v575
    %v577 = vpop.f32.mrb[0].mxu0
    %578 = vmatprep.mubr.f32.mxu0 0.0
    %579 = vmatmul.mubr.f32.gmra.mrb[0].mxu0 %v305
    %v580 = vpop.f32.mrb[0].mxu0
    %v581 = vadd.f32 0.0, %v580
    %v582 = vpop.f32.mrb[0].mxu0
    %583 = vmatprep.mubr.f32.mxu0 0.0
    %584 = vmatmul.mubr.f32.gmra.mrb[0].mxu0 %v308
    %v585 = vpop.f32.mrb[0].mxu0
    %v586 = vadd.f32 0.0, %v585
    %v587 = vpop.f32.mrb[0].mxu0
    %588 = vmatprep.mubr.f32.mxu0 0.0
    %589 = vmatmul.mubr.f32.gmra.mrb[0].mxu0 %v311
    %v590 = vpop.f32.mrb[0].mxu0
    %v591 = vadd.f32 0.0, %v590
    %v592 = vpop.f32.mrb[0].mxu0
    %593 = vmatprep.mubr.f32.mxu0 0.0
    %594 = vmatmul.mubr.f32.gmra.mrb[0].mxu0 %v314
    %v595 = vpop.f32.mrb[0].mxu0
    %v596 = vadd.f32 0.0, %v595
    %v597 = vpop.f32.mrb[0].mxu0
    %598 = vmatprep.mubr.f32.mxu0 0.0
    %599 = vmatmul.mubr.f32.gmra.mrb[0].mxu0 %v317
    %v600 = vpop.f32.mrb[0].mxu0
    %v601 = vadd.f32 0.0, %v600
    %v602 = vpop.f32.mrb[0].mxu0
    %603 = vmatprep.mubr.f32.mxu0 0.0
    %604 = vmatmul.mubr.f32.gmra.mrb[0].mxu0 %v320
    %v605 = vpop.f32.mrb[0].mxu0
    %v606 = vadd.f32 0.0, %v605
    %v607 = vpop.f32.mrb[0].mxu0
    %608 = vmatprep.mubr.f32.mxu0 0.0
    %609 = vmatmul.mubr.f32.gmra.mrb[0].mxu0 %v323
    %v610 = vpop.f32.mrb[0].mxu0
    %v611 = vadd.f32 0.0, %v610
    %v612 = vpop.f32.mrb[0].mxu0
    %613 = vmatprep.mubr.f32.mxu0 0.0
    %614 = vmatmul.mubr.f32.gmra.mrb[0].mxu0 %v326
    %v615 = vpop.f32.mrb[0].mxu0
    %v616 = vadd.f32 0.0, %v615
    %v617 = vpop.f32.mrb[0].mxu0
    %618 = vdwg.mxu0
    %v619 = vld [vmem:[#allocation10] sm:$0x3]
    %vm620 = vcmask 261120
    %v622 = vsel %vm620, %v619, 0
    %v625 = vsel %vm620, %v541, 0
    %v628 = vsel %vm620, %v546, 0
    %v631 = vsel %vm620, %v551, 0
    %v634 = vsel %vm620, %v556, 0
    %v637 = vsel %vm620, %v561, 0
    %v640 = vsel %vm620, %v566, 0
    %v643 = vsel %vm620, %v571, 0
    %v646 = vsel %vm620, %v576, 0
    %v649 = vsel %vm620, %v581, 0
    %v652 = vsel %vm620, %v586, 0
    %v655 = vsel %vm620, %v591, 0
    %v658 = vsel %vm620, %v596, 0
    %v661 = vsel %vm620, %v601, 0
    %v664 = vsel %vm620, %v606, 0
    %v667 = vsel %vm620, %v611, 0
    %v670 = vsel %vm620, %v616, 0
    %672 = vmatprep.subr.mxu0 0.0
    %673 = vmatpush1.xpose.msra.mxu0 %v625
    %674 = vmatprep.subr.mxu0 0.0
    %675 = vmatpush1.xpose.msra.mxu0 %v628
    %676 = vmatprep.subr.mxu0 0.0
    %677 = vmatpush1.xpose.msra.mxu0 %v631
    %678 = vmatprep.subr.mxu0 0.0
    %679 = vmatpush1.xpose.msra.mxu0 %v634
    %680 = vmatprep.subr.mxu0 0.0
    %681 = vmatpush1.xpose.msra.mxu0 %v637
    %682 = vmatprep.subr.mxu0 0.0
    %683 = vmatpush1.xpose.msra.mxu0 %v640
    %684 = vmatprep.subr.mxu0 0.0
    %685 = vmatpush1.xpose.msra.mxu0 %v643
    %686 = vmatprep.subr.mxu0 0.0
    %687 = vmatpush1.xpose.msra.mxu0 %v646
    %688 = vmatprep.subr.mxu0 0.0
    %689 = vmatpush1.xpose.msra.mxu0 %v649
    %690 = vmatprep.subr.mxu0 0.0
    %691 = vmatpush1.xpose.msra.mxu0 %v652
    %692 = vmatprep.subr.mxu0 0.0
    %693 = vmatpush1.xpose.msra.mxu0 %v655
    %694 = vmatprep.subr.mxu0 0.0
    %695 = vmatpush1.xpose.msra.mxu0 %v658
    %696 = vmatprep.subr.mxu0 0.0
    %697 = vmatpush1.xpose.msra.mxu0 %v661
    %698 = vmatprep.subr.mxu0 0.0
    %699 = vmatpush1.xpose.msra.mxu0 %v664
    %700 = vmatprep.subr.mxu0 0.0
    %701 = vmatpush1.xpose.msra.mxu0 %v667
    %702 = vmatprep.subr.mxu0 0.0
    %703 = vmatpush1.xpose.msra.mxu0 %v670
    %704 = vmatprep.subr.mxu0 0.0
    %705 = vmatpush1.xpose.msra.mxu0 0.0
    %706 = vmatprep.subr.mxu0 0.0
    %707 = vmatpush1.xpose.msra.mxu0 0.0
    %708 = vmatprep.subr.mxu0 0.0
    %709 = vmatpush1.xpose.msra.mxu0 0.0
    %710 = vmatprep.subr.mxu0 0.0
    %711 = vmatpush1.xpose.msra.mxu0 0.0
    %712 = vmatprep.subr.mxu0 0.0
    %713 = vmatpush1.xpose.msra.mxu0 0.0
    %714 = vmatprep.subr.mxu0 0.0
    %715 = vmatpush1.xpose.msra.mxu0 0.0
    %716 = vmatprep.subr.mxu0 0.0
    %717 = vmatpush1.xpose.msra.mxu0 0.0
    %718 = vmatprep.subr.mxu0 0.0
    %719 = vmatpush1.xpose.msra.mxu0 0.0
    %720 = vmatprep.subr.mxu0 0.0
    %721 = vmatpush1.xpose.msra.mxu0 0.0
    %722 = vmatprep.subr.mxu0 0.0
    %723 = vmatpush1.xpose.msra.mxu0 0.0
    %724 = vmatprep.subr.mxu0 0.0
    %725 = vmatpush1.xpose.msra.mxu0 0.0
    %726 = vmatprep.subr.mxu0 0.0
    %727 = vmatpush1.xpose.msra.mxu0 0.0
    %728 = vmatprep.subr.mxu0 0.0
    %729 = vmatpush1.xpose.msra.mxu0 0.0
    %730 = vmatprep.subr.mxu0 0.0
    %731 = vmatpush1.xpose.msra.mxu0 0.0
    %732 = vmatprep.subr.mxu0 0.0
    %733 = vmatpush1.xpose.msra.mxu0 0.0
    %734 = vmatprep.subr.mxu0 0.0
    %735 = vmatpush1.xpose.msra.mxu0 0.0
    %736 = vmatprep.mubr.f32.mxu0 0.0
    %737 = vmatmul.mubr.f32.gmra.mrb[0].mxu0 %v622
    %v738 = vpop.f32.mrb[0].mxu0
    %v739 = vadd.f32 0.0, %v738
    %v740 = vpop.f32.mrb[0].mxu0
    %741 = vdwg.mxu0
    %s742 = sld [smem:[#allocation2]]
    %v743 = vstv %s742
    %v744 = vmul.f32 %v743, %v206
    %v745 = vmul.f32 %v743, %v207
    %v746 = vmul.f32 %v743, %v208
    %v747 = vmul.f32 %v743, %v209
    %v748 = vmul.f32 %v743, %v210
    %v749 = vmul.f32 %v743, %v211
    %v750 = vmul.f32 %v743, %v212
    %v751 = vmul.f32 %v743, %v213
    %v752 = vmul.f32 %v743, %v214
    %v753 = vmul.f32 %v743, %v215
    %v754 = vmul.f32 %v743, %v216
    %v755 = vmul.f32 %v743, %v217
    %v756 = vmul.f32 %v743, %v218
    %v757 = vmul.f32 %v743, %v219
    %v758 = vmul.f32 %v743, %v220
    %v759 = vmul.f32 %v743, %v221
    %s760 = sld [smem:[#allocation2 + $0x2]]
    %v761 = vstv %s760
    %v762 = vmul.f32 %v761, %v223
    %v763 = vmul.f32 %v761, %v224
    %v764 = vmul.f32 %v761, %v225
    %v765 = vmul.f32 %v761, %v226
    %v766 = vmul.f32 %v761, %v227
    %v767 = vmul.f32 %v761, %v228
    %v768 = vmul.f32 %v761, %v229
    %v769 = vmul.f32 %v761, %v230
    %v770 = vmul.f32 %v761, %v231
    %v771 = vmul.f32 %v761, %v232
    %v772 = vmul.f32 %v761, %v233
    %v773 = vmul.f32 %v761, %v234
    %v774 = vmul.f32 %v761, %v235
    %v775 = vmul.f32 %v761, %v236
    %v776 = vmul.f32 %v761, %v237
    %v777 = vmul.f32 %v761, %v238
    %v778 = vadd.f32 %v744, %v762
    %v779 = vadd.f32 %v745, %v763
    %v780 = vadd.f32 %v746, %v764
    %v781 = vadd.f32 %v747, %v765
    %v782 = vadd.f32 %v748, %v766
    %v783 = vadd.f32 %v749, %v767
    %v784 = vadd.f32 %v750, %v768
    %v785 = vadd.f32 %v751, %v769
    %v786 = vadd.f32 %v752, %v770
    %v787 = vadd.f32 %v753, %v771
    %v788 = vadd.f32 %v754, %v772
    %v789 = vadd.f32 %v755, %v773
    %v790 = vadd.f32 %v756, %v774
    %v791 = vadd.f32 %v757, %v775
    %v792 = vadd.f32 %v758, %v776
    %v793 = vadd.f32 %v759, %v777
    %s794 = sld [smem:[#allocation2 + $0x4]]
    %v795 = vstv %s794
    %v796 = vmul.f32 %v795, %v240
    %v797 = vmul.f32 %v795, %v241
    %v798 = vmul.f32 %v795, %v242
    %v799 = vmul.f32 %v795, %v243
    %v800 = vmul.f32 %v795, %v244
    %v801 = vmul.f32 %v795, %v245
    %v802 = vmul.f32 %v795, %v246
    %v803 = vmul.f32 %v795, %v247
    %v804 = vmul.f32 %v795, %v248
    %v805 = vmul.f32 %v795, %v249
    %v806 = vmul.f32 %v795, %v250
    %v807 = vmul.f32 %v795, %v251
    %v808 = vmul.f32 %v795, %v252
    %v809 = vmul.f32 %v795, %v253
    %v810 = vmul.f32 %v795, %v254
    %v811 = vmul.f32 %v795, %v255
    %v812 = vadd.f32 %v778, %v796
    %v813 = vadd.f32 %v779, %v797
    %v814 = vadd.f32 %v780, %v798
    %v815 = vadd.f32 %v781, %v799
    %v816 = vadd.f32 %v782, %v800
    %v817 = vadd.f32 %v783, %v801
    %v818 = vadd.f32 %v784, %v802
    %v819 = vadd.f32 %v785, %v803
    %v820 = vadd.f32 %v786, %v804
    %v821 = vadd.f32 %v787, %v805
    %v822 = vadd.f32 %v788, %v806
    %v823 = vadd.f32 %v789, %v807
    %v824 = vadd.f32 %v790, %v808
    %v825 = vadd.f32 %v791, %v809
    %v826 = vadd.f32 %v792, %v810
    %v827 = vadd.f32 %v793, %v811
    %s828 = sld [smem:[#allocation2 + $0x6]]
    %v829 = vstv %s828
    %v830 = vmul.f32 %v829, %v257
    %v831 = vmul.f32 %v829, %v258
    %v832 = vmul.f32 %v829, %v259
    %v833 = vmul.f32 %v829, %v260
    %v834 = vmul.f32 %v829, %v261
    %v835 = vmul.f32 %v829, %v262
    %v836 = vmul.f32 %v829, %v263
    %v837 = vmul.f32 %v829, %v264
    %v838 = vmul.f32 %v829, %v265
    %v839 = vmul.f32 %v829, %v266
    %v840 = vmul.f32 %v829, %v267
    %v841 = vmul.f32 %v829, %v268
    %v842 = vmul.f32 %v829, %v269
    %v843 = vmul.f32 %v829, %v270
    %v844 = vmul.f32 %v829, %v271
    %v845 = vmul.f32 %v829, %v272
    %v846 = vadd.f32 %v812, %v830
    %v847 = vadd.f32 %v813, %v831
    %v848 = vadd.f32 %v814, %v832
    %v849 = vadd.f32 %v815, %v833
    %v850 = vadd.f32 %v816, %v834
    %v851 = vadd.f32 %v817, %v835
    %v852 = vadd.f32 %v818, %v836
    %v853 = vadd.f32 %v819, %v837
    %v854 = vadd.f32 %v820, %v838
    %v855 = vadd.f32 %v821, %v839
    %v856 = vadd.f32 %v822, %v840
    %v857 = vadd.f32 %v823, %v841
    %v858 = vadd.f32 %v824, %v842
    %v859 = vadd.f32 %v825, %v843
    %v860 = vadd.f32 %v826, %v844
    %v861 = vadd.f32 %v827, %v845
    %s862 = sld [smem:[#allocation2 + $0x1]]
    %v863 = vstv %s862
    %v864 = vmul.f32 %v863, %v206
    %v865 = vmul.f32 %v863, %v207
    %v866 = vmul.f32 %v863, %v208
    %v867 = vmul.f32 %v863, %v209
    %v868 = vmul.f32 %v863, %v210
    %v869 = vmul.f32 %v863, %v211
    %v870 = vmul.f32 %v863, %v212
    %v871 = vmul.f32 %v863, %v213
    %v872 = vmul.f32 %v863, %v214
    %v873 = vmul.f32 %v863, %v215
    %v874 = vmul.f32 %v863, %v216
    %v875 = vmul.f32 %v863, %v217
    %v876 = vmul.f32 %v863, %v218
    %v877 = vmul.f32 %v863, %v219
    %v878 = vmul.f32 %v863, %v220
    %v879 = vmul.f32 %v863, %v221
    %s880 = sld [smem:[#allocation2 + $0x3]]
    %v881 = vstv %s880
    %v882 = vmul.f32 %v881, %v223
    %v883 = vmul.f32 %v881, %v224
    %v884 = vmul.f32 %v881, %v225
    %v885 = vmul.f32 %v881, %v226
    %v886 = vmul.f32 %v881, %v227
    %v887 = vmul.f32 %v881, %v228
    %v888 = vmul.f32 %v881, %v229
    %v889 = vmul.f32 %v881, %v230
    %v890 = vmul.f32 %v881, %v231
    %v891 = vmul.f32 %v881, %v232
    %v892 = vmul.f32 %v881, %v233
    %v893 = vmul.f32 %v881, %v234
    %v894 = vmul.f32 %v881, %v235
    %v895 = vmul.f32 %v881, %v236
    %v896 = vmul.f32 %v881, %v237
    %v897 = vmul.f32 %v881, %v238
    %v898 = vadd.f32 %v864, %v882
    %v899 = vadd.f32 %v865, %v883
    %v900 = vadd.f32 %v866, %v884
    %v901 = vadd.f32 %v867, %v885
    %v902 = vadd.f32 %v868, %v886
    %v903 = vadd.f32 %v869, %v887
    %v904 = vadd.f32 %v870, %v888
    %v905 = vadd.f32 %v871, %v889
    %v906 = vadd.f32 %v872, %v890
    %v907 = vadd.f32 %v873, %v891
    %v908 = vadd.f32 %v874, %v892
    %v909 = vadd.f32 %v875, %v893
    %v910 = vadd.f32 %v876, %v894
    %v911 = vadd.f32 %v877, %v895
    %v912 = vadd.f32 %v878, %v896
    %v913 = vadd.f32 %v879, %v897
    %s914 = sld [smem:[#allocation2 + $0x5]]
    %v915 = vstv %s914
    %v916 = vmul.f32 %v915, %v240
    %v917 = vmul.f32 %v915, %v241
    %v918 = vmul.f32 %v915, %v242
    %v919 = vmul.f32 %v915, %v243
    %v920 = vmul.f32 %v915, %v244
    %v921 = vmul.f32 %v915, %v245
    %v922 = vmul.f32 %v915, %v246
    %v923 = vmul.f32 %v915, %v247
    %v924 = vmul.f32 %v915, %v248
    %v925 = vmul.f32 %v915, %v249
    %v926 = vmul.f32 %v915, %v250
    %v927 = vmul.f32 %v915, %v251
    %v928 = vmul.f32 %v915, %v252
    %v929 = vmul.f32 %v915, %v253
    %v930 = vmul.f32 %v915, %v254
    %v931 = vmul.f32 %v915, %v255
    %v932 = vadd.f32 %v898, %v916
    %v933 = vadd.f32 %v899, %v917
    %v934 = vadd.f32 %v900, %v918
    %v935 = vadd.f32 %v901, %v919
    %v936 = vadd.f32 %v902, %v920
    %v937 = vadd.f32 %v903, %v921
    %v938 = vadd.f32 %v904, %v922
    %v939 = vadd.f32 %v905, %v923
    %v940 = vadd.f32 %v906, %v924
    %v941 = vadd.f32 %v907, %v925
    %v942 = vadd.f32 %v908, %v926
    %v943 = vadd.f32 %v909, %v927
    %v944 = vadd.f32 %v910, %v928
    %v945 = vadd.f32 %v911, %v929
    %v946 = vadd.f32 %v912, %v930
    %v947 = vadd.f32 %v913, %v931
    %s948 = sld [smem:[#allocation2 + $0x7]]
    %v949 = vstv %s948
    %v950 = vmul.f32 %v949, %v257
    %v951 = vmul.f32 %v949, %v258
    %v952 = vmul.f32 %v949, %v259
    %v953 = vmul.f32 %v949, %v260
    %v954 = vmul.f32 %v949, %v261
    %v955 = vmul.f32 %v949, %v262
    %v956 = vmul.f32 %v949, %v263
    %v957 = vmul.f32 %v949, %v264
    %v958 = vmul.f32 %v949, %v265
    %v959 = vmul.f32 %v949, %v266
    %v960 = vmul.f32 %v949, %v267
    %v961 = vmul.f32 %v949, %v268
    %v962 = vmul.f32 %v949, %v269
    %v963 = vmul.f32 %v949, %v270
    %v964 = vmul.f32 %v949, %v271
    %v965 = vmul.f32 %v949, %v272
    %v966 = vadd.f32 %v932, %v950
    %v967 = vadd.f32 %v933, %v951
    %v968 = vadd.f32 %v934, %v952
    %v969 = vadd.f32 %v935, %v953
    %v970 = vadd.f32 %v936, %v954
    %v971 = vadd.f32 %v937, %v955
    %v972 = vadd.f32 %v938, %v956
    %v973 = vadd.f32 %v939, %v957
    %v974 = vadd.f32 %v940, %v958
    %v975 = vadd.f32 %v941, %v959
    %v976 = vadd.f32 %v942, %v960
    %v977 = vadd.f32 %v943, %v961
    %v978 = vadd.f32 %v944, %v962
    %v979 = vadd.f32 %v945, %v963
    %v980 = vadd.f32 %v946, %v964
    %v981 = vadd.f32 %v947, %v965
    %982 = vset.pattern.permute.xlu0 32
    %983 = vperm.xlu0 %982, %v541
    %v984 = vpop.permute.xlu0 %983
    %986 = vset.pattern.permute.xlu0 32
    %987 = vperm.xlu0 %986, %v546
    %v988 = vpop.permute.xlu0 %987
    %990 = vset.pattern.permute.xlu0 32
    %991 = vperm.xlu0 %990, %v551
    %v992 = vpop.permute.xlu0 %991
    %994 = vset.pattern.permute.xlu0 32
    %995 = vperm.xlu0 %994, %v556
    %v996 = vpop.permute.xlu0 %995
    %998 = vset.pattern.permute.xlu0 32
    %999 = vperm.xlu0 %998, %v561
    %v1000 = vpop.permute.xlu0 %999
    %1002 = vset.pattern.permute.xlu0 32
    %1003 = vperm.xlu0 %1002, %v566
    %v1004 = vpop.permute.xlu0 %1003
    %1006 = vset.pattern.permute.xlu0 32
    %1007 = vperm.xlu0 %1006, %v571
    %v1008 = vpop.permute.xlu0 %1007
    %1010 = vset.pattern.permute.xlu0 32
    %1011 = vperm.xlu0 %1010, %v576
    %v1012 = vpop.permute.xlu0 %1011
    %1014 = vset.pattern.permute.xlu0 32
    %1015 = vperm.xlu0 %1014, %v581
    %v1016 = vpop.permute.xlu0 %1015
    %1018 = vset.pattern.permute.xlu0 32
    %1019 = vperm.xlu0 %1018, %v586
    %v1020 = vpop.permute.xlu0 %1019
    %1022 = vset.pattern.permute.xlu0 32
    %1023 = vperm.xlu0 %1022, %v591
    %v1024 = vpop.permute.xlu0 %1023
    %1026 = vset.pattern.permute.xlu0 32
    %1027 = vperm.xlu0 %1026, %v596
    %v1028 = vpop.permute.xlu0 %1027
    %1030 = vset.pattern.permute.xlu0 32
    %1031 = vperm.xlu0 %1030, %v601
    %v1032 = vpop.permute.xlu0 %1031
    %1034 = vset.pattern.permute.xlu0 32
    %1035 = vperm.xlu0 %1034, %v606
    %v1036 = vpop.permute.xlu0 %1035
    %1038 = vset.pattern.permute.xlu0 32
    %1039 = vperm.xlu0 %1038, %v611
    %v1040 = vpop.permute.xlu0 %1039
    %1042 = vset.pattern.permute.xlu0 32
    %1043 = vperm.xlu0 %1042, %v616
    %v1044 = vpop.permute.xlu0 %1043
    %v1046 = vadd.f32 %v846, %v984
    %v1047 = vadd.f32 %v847, %v988
    %v1048 = vadd.f32 %v848, %v992
    %v1049 = vadd.f32 %v849, %v996
    %v1050 = vadd.f32 %v850, %v1000
    %v1051 = vadd.f32 %v851, %v1004
    %v1052 = vadd.f32 %v852, %v1008
    %v1053 = vadd.f32 %v853, %v1012
    %v1054 = vadd.f32 %v854, %v1016
    %v1055 = vadd.f32 %v855, %v1020
    %v1056 = vadd.f32 %v856, %v1024
    %v1057 = vadd.f32 %v857, %v1028
    %v1058 = vadd.f32 %v858, %v1032
    %v1059 = vadd.f32 %v859, %v1036
    %v1060 = vadd.f32 %v860, %v1040
    %v1061 = vadd.f32 %v861, %v1044
    %v1062 = vlaneseq
    %v1063 = vshrl.u32 %v1062, 7
    %v1064 = vsub.s32 0, %v1063
    %v1065 = vrot.slane %v739, %v1064
    %v1066 = vadd.f32 %v1046, %v1065
    %v1067 = vadd.f32 %v1047, %v1065
    %v1068 = vadd.f32 %v1048, %v1065
    %v1069 = vadd.f32 %v1049, %v1065
    %v1070 = vadd.f32 %v1050, %v1065
    %v1071 = vadd.f32 %v1051, %v1065
    %v1072 = vadd.f32 %v1052, %v1065
    %v1073 = vadd.f32 %v1053, %v1065
    %v1074 = vadd.f32 %v1054, %v1065
    %v1075 = vadd.f32 %v1055, %v1065
    %v1076 = vadd.f32 %v1056, %v1065
    %v1077 = vadd.f32 %v1057, %v1065
    %v1078 = vadd.f32 %v1058, %v1065
    %v1079 = vadd.f32 %v1059, %v1065
    %v1080 = vadd.f32 %v1060, %v1065
    %v1081 = vadd.f32 %v1061, %v1065
    %vm1082 = vcmp.gt.f32.partialorder %v1066, 0.0
    %vm1083 = vcmp.gt.f32.partialorder %v1067, 0.0
    %vm1084 = vcmp.gt.f32.partialorder %v1068, 0.0
    %vm1085 = vcmp.gt.f32.partialorder %v1069, 0.0
    %vm1086 = vcmp.gt.f32.partialorder %v1070, 0.0
    %vm1087 = vcmp.gt.f32.partialorder %v1071, 0.0
    %vm1088 = vcmp.gt.f32.partialorder %v1072, 0.0
    %vm1089 = vcmp.gt.f32.partialorder %v1073, 0.0
    %vm1090 = vcmp.gt.f32.partialorder %v1074, 0.0
    %vm1091 = vcmp.gt.f32.partialorder %v1075, 0.0
    %vm1092 = vcmp.gt.f32.partialorder %v1076, 0.0
    %vm1093 = vcmp.gt.f32.partialorder %v1077, 0.0
    %vm1094 = vcmp.gt.f32.partialorder %v1078, 0.0
    %vm1095 = vcmp.gt.f32.partialorder %v1079, 0.0
    %vm1096 = vcmp.gt.f32.partialorder %v1080, 0.0
    %vm1097 = vcmp.gt.f32.partialorder %v1081, 0.0
    %v1098 = vmul.f32 %v1066, 0.2
    %v1099 = vmul.f32 %v1067, 0.2
    %v1100 = vmul.f32 %v1068, 0.2
    %v1101 = vmul.f32 %v1069, 0.2
    %v1102 = vmul.f32 %v1070, 0.2
    %v1103 = vmul.f32 %v1071, 0.2
    %v1104 = vmul.f32 %v1072, 0.2
    %v1105 = vmul.f32 %v1073, 0.2
    %v1106 = vmul.f32 %v1074, 0.2
    %v1107 = vmul.f32 %v1075, 0.2
    %v1108 = vmul.f32 %v1076, 0.2
    %v1109 = vmul.f32 %v1077, 0.2
    %v1110 = vmul.f32 %v1078, 0.2
    %v1111 = vmul.f32 %v1079, 0.2
    %v1112 = vmul.f32 %v1080, 0.2
    %v1113 = vmul.f32 %v1081, 0.2
    %v1114 = vsel %vm1082, %v1066, %v1098
    %v1115 = vsel %vm1083, %v1067, %v1099
    %v1116 = vsel %vm1084, %v1068, %v1100
    %v1117 = vsel %vm1085, %v1069, %v1101
    %v1118 = vsel %vm1086, %v1070, %v1102
    %v1119 = vsel %vm1087, %v1071, %v1103
    %v1120 = vsel %vm1088, %v1072, %v1104
    %v1121 = vsel %vm1089, %v1073, %v1105
    %v1122 = vsel %vm1090, %v1074, %v1106
    %v1123 = vsel %vm1091, %v1075, %v1107
    %v1124 = vsel %vm1092, %v1076, %v1108
    %v1125 = vsel %vm1093, %v1077, %v1109
    %v1126 = vsel %vm1094, %v1078, %v1110
    %v1127 = vsel %vm1095, %v1079, %v1111
    %v1128 = vsel %vm1096, %v1080, %v1112
    %v1129 = vsel %vm1097, %v1081, %v1113
    %vm1130 = vcmp.gt.f32.partialorder %v190, 0.0
    %vm1131 = vcmp.gt.f32.partialorder %v191, 0.0
    %vm1132 = vcmp.gt.f32.partialorder %v192, 0.0
    %vm1133 = vcmp.gt.f32.partialorder %v193, 0.0
    %vm1134 = vcmp.gt.f32.partialorder %v194, 0.0
    %vm1135 = vcmp.gt.f32.partialorder %v195, 0.0
    %vm1136 = vcmp.gt.f32.partialorder %v196, 0.0
    %vm1137 = vcmp.gt.f32.partialorder %v197, 0.0
    %vm1138 = vcmp.gt.f32.partialorder %v198, 0.0
    %vm1139 = vcmp.gt.f32.partialorder %v199, 0.0
    %vm1140 = vcmp.gt.f32.partialorder %v200, 0.0
    %vm1141 = vcmp.gt.f32.partialorder %v201, 0.0
    %vm1142 = vcmp.gt.f32.partialorder %v202, 0.0
    %vm1143 = vcmp.gt.f32.partialorder %v203, 0.0
    %vm1144 = vcmp.gt.f32.partialorder %v204, 0.0
    %vm1145 = vcmp.gt.f32.partialorder %v205, 0.0
    %v1146 = vsel %vm1130, %v1114, -1e+30
    %v1147 = vsel %vm1131, %v1115, -1e+30
    %v1148 = vsel %vm1132, %v1116, -1e+30
    %v1149 = vsel %vm1133, %v1117, -1e+30
    %v1150 = vsel %vm1134, %v1118, -1e+30
    %v1151 = vsel %vm1135, %v1119, -1e+30
    %v1152 = vsel %vm1136, %v1120, -1e+30
    %v1153 = vsel %vm1137, %v1121, -1e+30
    %v1154 = vsel %vm1138, %v1122, -1e+30
    %v1155 = vsel %vm1139, %v1123, -1e+30
    %v1156 = vsel %vm1140, %v1124, -1e+30
    %v1157 = vsel %vm1141, %v1125, -1e+30
    %v1158 = vsel %vm1142, %v1126, -1e+30
    %v1159 = vsel %vm1143, %v1127, -1e+30
    %v1160 = vsel %vm1144, %v1128, -1e+30
    %v1161 = vsel %vm1145, %v1129, -1e+30
    %1162 = vmax.xlane.f32.xlu0 %v1146
    %v1163 = vpop.xlane.xlu0 %1162
    %1164 = vmax.xlane.f32.xlu0 %v1147
    %v1165 = vpop.xlane.xlu0 %1164
    %1166 = vmax.xlane.f32.xlu0 %v1148
    %v1167 = vpop.xlane.xlu0 %1166
    %1168 = vmax.xlane.f32.xlu0 %v1149
    %v1169 = vpop.xlane.xlu0 %1168
    %1170 = vmax.xlane.f32.xlu0 %v1150
    %v1171 = vpop.xlane.xlu0 %1170
    %1172 = vmax.xlane.f32.xlu0 %v1151
    %v1173 = vpop.xlane.xlu0 %1172
    %1174 = vmax.xlane.f32.xlu0 %v1152
    %v1175 = vpop.xlane.xlu0 %1174
    %1176 = vmax.xlane.f32.xlu0 %v1153
    %v1177 = vpop.xlane.xlu0 %1176
    %1178 = vmax.xlane.f32.xlu0 %v1154
    %v1179 = vpop.xlane.xlu0 %1178
    %1180 = vmax.xlane.f32.xlu0 %v1155
    %v1181 = vpop.xlane.xlu0 %1180
    %1182 = vmax.xlane.f32.xlu0 %v1156
    %v1183 = vpop.xlane.xlu0 %1182
    %1184 = vmax.xlane.f32.xlu0 %v1157
    %v1185 = vpop.xlane.xlu0 %1184
    %1186 = vmax.xlane.f32.xlu0 %v1158
    %v1187 = vpop.xlane.xlu0 %1186
    %1188 = vmax.xlane.f32.xlu0 %v1159
    %v1189 = vpop.xlane.xlu0 %1188
    %1190 = vmax.xlane.f32.xlu0 %v1160
    %v1191 = vpop.xlane.xlu0 %1190
    %1192 = vmax.xlane.f32.xlu0 %v1161
    %v1193 = vpop.xlane.xlu0 %1192
    %v1194 = vsub.f32 %v1146, %v1163
    %v1195 = vsub.f32 %v1147, %v1165
    %v1196 = vsub.f32 %v1148, %v1167
    %v1197 = vsub.f32 %v1149, %v1169
    %v1198 = vsub.f32 %v1150, %v1171
    %v1199 = vsub.f32 %v1151, %v1173
    %v1200 = vsub.f32 %v1152, %v1175
    %v1201 = vsub.f32 %v1153, %v1177
    %v1202 = vsub.f32 %v1154, %v1179
    %v1203 = vsub.f32 %v1155, %v1181
    %v1204 = vsub.f32 %v1156, %v1183
    %v1205 = vsub.f32 %v1157, %v1185
    %v1206 = vsub.f32 %v1158, %v1187
    %v1207 = vsub.f32 %v1159, %v1189
    %v1208 = vsub.f32 %v1160, %v1191
    %v1209 = vsub.f32 %v1161, %v1193
    %v1210 = vmul.f32 %v1194, 1.442695
    %v1211 = vpow.pop %v1210
    %v1212 = vmul.f32 %v1195, 1.442695
    %v1213 = vpow.pop %v1212
    %v1214 = vmul.f32 %v1196, 1.442695
    %v1215 = vpow.pop %v1214
    %v1216 = vmul.f32 %v1197, 1.442695
    %v1217 = vpow.pop %v1216
    %v1218 = vmul.f32 %v1198, 1.442695
    %v1219 = vpow.pop %v1218
    %v1220 = vmul.f32 %v1199, 1.442695
    %v1221 = vpow.pop %v1220
    %v1222 = vmul.f32 %v1200, 1.442695
    %v1223 = vpow.pop %v1222
    %v1224 = vmul.f32 %v1201, 1.442695
    %v1225 = vpow.pop %v1224
    %v1226 = vmul.f32 %v1202, 1.442695
    %v1227 = vpow.pop %v1226
    %v1228 = vmul.f32 %v1203, 1.442695
    %v1229 = vpow.pop %v1228
    %v1230 = vmul.f32 %v1204, 1.442695
    %v1231 = vpow.pop %v1230
    %v1232 = vmul.f32 %v1205, 1.442695
    %v1233 = vpow.pop %v1232
    %v1234 = vmul.f32 %v1206, 1.442695
    %v1235 = vpow.pop %v1234
    %v1236 = vmul.f32 %v1207, 1.442695
    %v1237 = vpow.pop %v1236
    %v1238 = vmul.f32 %v1208, 1.442695
    %v1239 = vpow.pop %v1238
    %v1240 = vmul.f32 %v1209, 1.442695
    %v1241 = vpow.pop %v1240
    %1242 = vadd.xlane.f32.xlu0 %v1211
    %v1243 = vpop.xlane.xlu0 %1242
    %1244 = vadd.xlane.f32.xlu0 %v1213
    %v1245 = vpop.xlane.xlu0 %1244
    %1246 = vadd.xlane.f32.xlu0 %v1215
    %v1247 = vpop.xlane.xlu0 %1246
    %1248 = vadd.xlane.f32.xlu0 %v1217
    %v1249 = vpop.xlane.xlu0 %1248
    %1250 = vadd.xlane.f32.xlu0 %v1219
    %v1251 = vpop.xlane.xlu0 %1250
    %1252 = vadd.xlane.f32.xlu0 %v1221
    %v1253 = vpop.xlane.xlu0 %1252
    %1254 = vadd.xlane.f32.xlu0 %v1223
    %v1255 = vpop.xlane.xlu0 %1254
    %1256 = vadd.xlane.f32.xlu0 %v1225
    %v1257 = vpop.xlane.xlu0 %1256
    %1258 = vadd.xlane.f32.xlu0 %v1227
    %v1259 = vpop.xlane.xlu0 %1258
    %1260 = vadd.xlane.f32.xlu0 %v1229
    %v1261 = vpop.xlane.xlu0 %1260
    %1262 = vadd.xlane.f32.xlu0 %v1231
    %v1263 = vpop.xlane.xlu0 %1262
    %1264 = vadd.xlane.f32.xlu0 %v1233
    %v1265 = vpop.xlane.xlu0 %1264
    %1266 = vadd.xlane.f32.xlu0 %v1235
    %v1267 = vpop.xlane.xlu0 %1266
    %1268 = vadd.xlane.f32.xlu0 %v1237
    %v1269 = vpop.xlane.xlu0 %1268
    %1270 = vadd.xlane.f32.xlu0 %v1239
    %v1271 = vpop.xlane.xlu0 %1270
    %1272 = vadd.xlane.f32.xlu0 %v1241
    %v1273 = vpop.xlane.xlu0 %1272
    %v1274 = vrcp.pop %v1243
    %v1275 = vrcp.pop %v1245
    %v1276 = vrcp.pop %v1247
    %v1277 = vrcp.pop %v1249
    %v1278 = vrcp.pop %v1251
    %v1279 = vrcp.pop %v1253
    %v1280 = vrcp.pop %v1255
    %v1281 = vrcp.pop %v1257
    %v1282 = vrcp.pop %v1259
    %v1283 = vrcp.pop %v1261
    %v1284 = vrcp.pop %v1263
    %v1285 = vrcp.pop %v1265
    %v1286 = vrcp.pop %v1267
    %v1287 = vrcp.pop %v1269
    %v1288 = vrcp.pop %v1271
    %v1289 = vrcp.pop %v1273
    %v1290 = vmul.f32 %v1211, %v1274
    %v1291 = vmul.f32 %v1213, %v1275
    %v1292 = vmul.f32 %v1215, %v1276
    %v1293 = vmul.f32 %v1217, %v1277
    %v1294 = vmul.f32 %v1219, %v1278
    %v1295 = vmul.f32 %v1221, %v1279
    %v1296 = vmul.f32 %v1223, %v1280
    %v1297 = vmul.f32 %v1225, %v1281
    %v1298 = vmul.f32 %v1227, %v1282
    %v1299 = vmul.f32 %v1229, %v1283
    %v1300 = vmul.f32 %v1231, %v1284
    %v1301 = vmul.f32 %v1233, %v1285
    %v1302 = vmul.f32 %v1235, %v1286
    %v1303 = vmul.f32 %v1237, %v1287
    %v1304 = vmul.f32 %v1239, %v1288
    %v1305 = vmul.f32 %v1241, %v1289
    %1306 = vset.pattern.permute.xlu0 33
    %1307 = vperm.xlu0 %1306, %v541
    %v1308 = vpop.permute.xlu0 %1307
    %1310 = vset.pattern.permute.xlu0 33
    %1311 = vperm.xlu0 %1310, %v546
    %v1312 = vpop.permute.xlu0 %1311
    %1314 = vset.pattern.permute.xlu0 33
    %1315 = vperm.xlu0 %1314, %v551
    %v1316 = vpop.permute.xlu0 %1315
    %1318 = vset.pattern.permute.xlu0 33
    %1319 = vperm.xlu0 %1318, %v556
    %v1320 = vpop.permute.xlu0 %1319
    %1322 = vset.pattern.permute.xlu0 33
    %1323 = vperm.xlu0 %1322, %v561
    %v1324 = vpop.permute.xlu0 %1323
    %1326 = vset.pattern.permute.xlu0 33
    %1327 = vperm.xlu0 %1326, %v566
    %v1328 = vpop.permute.xlu0 %1327
    %1330 = vset.pattern.permute.xlu0 33
    %1331 = vperm.xlu0 %1330, %v571
    %v1332 = vpop.permute.xlu0 %1331
    %1334 = vset.pattern.permute.xlu0 33
    %1335 = vperm.xlu0 %1334, %v576
    %v1336 = vpop.permute.xlu0 %1335
    %1338 = vset.pattern.permute.xlu0 33
    %1339 = vperm.xlu0 %1338, %v581
    %v1340 = vpop.permute.xlu0 %1339
    %1342 = vset.pattern.permute.xlu0 33
    %1343 = vperm.xlu0 %1342, %v586
    %v1344 = vpop.permute.xlu0 %1343
    %1346 = vset.pattern.permute.xlu0 33
    %1347 = vperm.xlu0 %1346, %v591
    %v1348 = vpop.permute.xlu0 %1347
    %1350 = vset.pattern.permute.xlu0 33
    %1351 = vperm.xlu0 %1350, %v596
    %v1352 = vpop.permute.xlu0 %1351
    %1354 = vset.pattern.permute.xlu0 33
    %1355 = vperm.xlu0 %1354, %v601
    %v1356 = vpop.permute.xlu0 %1355
    %1358 = vset.pattern.permute.xlu0 33
    %1359 = vperm.xlu0 %1358, %v606
    %v1360 = vpop.permute.xlu0 %1359
    %1362 = vset.pattern.permute.xlu0 33
    %1363 = vperm.xlu0 %1362, %v611
    %v1364 = vpop.permute.xlu0 %1363
    %1366 = vset.pattern.permute.xlu0 33
    %1367 = vperm.xlu0 %1366, %v616
    %v1368 = vpop.permute.xlu0 %1367
    %v1370 = vadd.f32 %v966, %v1308
    %v1371 = vadd.f32 %v967, %v1312
    %v1372 = vadd.f32 %v968, %v1316
    %v1373 = vadd.f32 %v969, %v1320
    %v1374 = vadd.f32 %v970, %v1324
    %v1375 = vadd.f32 %v971, %v1328
    %v1376 = vadd.f32 %v972, %v1332
    %v1377 = vadd.f32 %v973, %v1336
    %v1378 = vadd.f32 %v974, %v1340
    %v1379 = vadd.f32 %v975, %v1344
    %v1380 = vadd.f32 %v976, %v1348
    %v1381 = vadd.f32 %v977, %v1352
    %v1382 = vadd.f32 %v978, %v1356
    %v1383 = vadd.f32 %v979, %v1360
    %v1384 = vadd.f32 %v980, %v1364
    %v1385 = vadd.f32 %v981, %v1368
    %v1386 = vlaneseq
    %v1387 = vshrl.u32 %v1386, 7
    %v1388 = vsub.s32 1, %v1387
    %v1389 = vrot.slane %v739, %v1388
    %v1390 = vadd.f32 %v1370, %v1389
    %v1391 = vadd.f32 %v1371, %v1389
    %v1392 = vadd.f32 %v1372, %v1389
    %v1393 = vadd.f32 %v1373, %v1389
    %v1394 = vadd.f32 %v1374, %v1389
    %v1395 = vadd.f32 %v1375, %v1389
    %v1396 = vadd.f32 %v1376, %v1389
    %v1397 = vadd.f32 %v1377, %v1389
    %v1398 = vadd.f32 %v1378, %v1389
    %v1399 = vadd.f32 %v1379, %v1389
    %v1400 = vadd.f32 %v1380, %v1389
    %v1401 = vadd.f32 %v1381, %v1389
    %v1402 = vadd.f32 %v1382, %v1389
    %v1403 = vadd.f32 %v1383, %v1389
    %v1404 = vadd.f32 %v1384, %v1389
    %v1405 = vadd.f32 %v1385, %v1389
    %vm1406 = vcmp.gt.f32.partialorder %v1390, 0.0
    %vm1407 = vcmp.gt.f32.partialorder %v1391, 0.0
    %vm1408 = vcmp.gt.f32.partialorder %v1392, 0.0
    %vm1409 = vcmp.gt.f32.partialorder %v1393, 0.0
    %vm1410 = vcmp.gt.f32.partialorder %v1394, 0.0
    %vm1411 = vcmp.gt.f32.partialorder %v1395, 0.0
    %vm1412 = vcmp.gt.f32.partialorder %v1396, 0.0
    %vm1413 = vcmp.gt.f32.partialorder %v1397, 0.0
    %vm1414 = vcmp.gt.f32.partialorder %v1398, 0.0
    %vm1415 = vcmp.gt.f32.partialorder %v1399, 0.0
    %vm1416 = vcmp.gt.f32.partialorder %v1400, 0.0
    %vm1417 = vcmp.gt.f32.partialorder %v1401, 0.0
    %vm1418 = vcmp.gt.f32.partialorder %v1402, 0.0
    %vm1419 = vcmp.gt.f32.partialorder %v1403, 0.0
    %vm1420 = vcmp.gt.f32.partialorder %v1404, 0.0
    %vm1421 = vcmp.gt.f32.partialorder %v1405, 0.0
    %v1422 = vmul.f32 %v1390, 0.2
    %v1423 = vmul.f32 %v1391, 0.2
    %v1424 = vmul.f32 %v1392, 0.2
    %v1425 = vmul.f32 %v1393, 0.2
    %v1426 = vmul.f32 %v1394, 0.2
    %v1427 = vmul.f32 %v1395, 0.2
    %v1428 = vmul.f32 %v1396, 0.2
    %v1429 = vmul.f32 %v1397, 0.2
    %v1430 = vmul.f32 %v1398, 0.2
    %v1431 = vmul.f32 %v1399, 0.2
    %v1432 = vmul.f32 %v1400, 0.2
    %v1433 = vmul.f32 %v1401, 0.2
    %v1434 = vmul.f32 %v1402, 0.2
    %v1435 = vmul.f32 %v1403, 0.2
    %v1436 = vmul.f32 %v1404, 0.2
    %v1437 = vmul.f32 %v1405, 0.2
    %v1438 = vsel %vm1406, %v1390, %v1422
    %v1439 = vsel %vm1407, %v1391, %v1423
    %v1440 = vsel %vm1408, %v1392, %v1424
    %v1441 = vsel %vm1409, %v1393, %v1425
    %v1442 = vsel %vm1410, %v1394, %v1426
    %v1443 = vsel %vm1411, %v1395, %v1427
    %v1444 = vsel %vm1412, %v1396, %v1428
    %v1445 = vsel %vm1413, %v1397, %v1429
    %v1446 = vsel %vm1414, %v1398, %v1430
    %v1447 = vsel %vm1415, %v1399, %v1431
    %v1448 = vsel %vm1416, %v1400, %v1432
    %v1449 = vsel %vm1417, %v1401, %v1433
    %v1450 = vsel %vm1418, %v1402, %v1434
    %v1451 = vsel %vm1419, %v1403, %v1435
    %v1452 = vsel %vm1420, %v1404, %v1436
    %v1453 = vsel %vm1421, %v1405, %v1437
    %v1454 = vsel %vm1130, %v1438, -1e+30
    %v1455 = vsel %vm1131, %v1439, -1e+30
    %v1456 = vsel %vm1132, %v1440, -1e+30
    %v1457 = vsel %vm1133, %v1441, -1e+30
    %v1458 = vsel %vm1134, %v1442, -1e+30
    %v1459 = vsel %vm1135, %v1443, -1e+30
    %v1460 = vsel %vm1136, %v1444, -1e+30
    %v1461 = vsel %vm1137, %v1445, -1e+30
    %v1462 = vsel %vm1138, %v1446, -1e+30
    %v1463 = vsel %vm1139, %v1447, -1e+30
    %v1464 = vsel %vm1140, %v1448, -1e+30
    %v1465 = vsel %vm1141, %v1449, -1e+30
    %v1466 = vsel %vm1142, %v1450, -1e+30
    %v1467 = vsel %vm1143, %v1451, -1e+30
    %v1468 = vsel %vm1144, %v1452, -1e+30
    %v1469 = vsel %vm1145, %v1453, -1e+30
    %1470 = vmax.xlane.f32.xlu0 %v1454
    %v1471 = vpop.xlane.xlu0 %1470
    %1472 = vmax.xlane.f32.xlu0 %v1455
    %v1473 = vpop.xlane.xlu0 %1472
    %1474 = vmax.xlane.f32.xlu0 %v1456
    %v1475 = vpop.xlane.xlu0 %1474
    %1476 = vmax.xlane.f32.xlu0 %v1457
    %v1477 = vpop.xlane.xlu0 %1476
    %1478 = vmax.xlane.f32.xlu0 %v1458
    %v1479 = vpop.xlane.xlu0 %1478
    %1480 = vmax.xlane.f32.xlu0 %v1459
    %v1481 = vpop.xlane.xlu0 %1480
    %1482 = vmax.xlane.f32.xlu0 %v1460
    %v1483 = vpop.xlane.xlu0 %1482
    %1484 = vmax.xlane.f32.xlu0 %v1461
    %v1485 = vpop.xlane.xlu0 %1484
    %1486 = vmax.xlane.f32.xlu0 %v1462
    %v1487 = vpop.xlane.xlu0 %1486
    %1488 = vmax.xlane.f32.xlu0 %v1463
    %v1489 = vpop.xlane.xlu0 %1488
    %1490 = vmax.xlane.f32.xlu0 %v1464
    %v1491 = vpop.xlane.xlu0 %1490
    %1492 = vmax.xlane.f32.xlu0 %v1465
    %v1493 = vpop.xlane.xlu0 %1492
    %1494 = vmax.xlane.f32.xlu0 %v1466
    %v1495 = vpop.xlane.xlu0 %1494
    %1496 = vmax.xlane.f32.xlu0 %v1467
    %v1497 = vpop.xlane.xlu0 %1496
    %1498 = vmax.xlane.f32.xlu0 %v1468
    %v1499 = vpop.xlane.xlu0 %1498
    %1500 = vmax.xlane.f32.xlu0 %v1469
    %v1501 = vpop.xlane.xlu0 %1500
    %v1502 = vsub.f32 %v1454, %v1471
    %v1503 = vsub.f32 %v1455, %v1473
    %v1504 = vsub.f32 %v1456, %v1475
    %v1505 = vsub.f32 %v1457, %v1477
    %v1506 = vsub.f32 %v1458, %v1479
    %v1507 = vsub.f32 %v1459, %v1481
    %v1508 = vsub.f32 %v1460, %v1483
    %v1509 = vsub.f32 %v1461, %v1485
    %v1510 = vsub.f32 %v1462, %v1487
    %v1511 = vsub.f32 %v1463, %v1489
    %v1512 = vsub.f32 %v1464, %v1491
    %v1513 = vsub.f32 %v1465, %v1493
    %v1514 = vsub.f32 %v1466, %v1495
    %v1515 = vsub.f32 %v1467, %v1497
    %v1516 = vsub.f32 %v1468, %v1499
    %v1517 = vsub.f32 %v1469, %v1501
    %v1518 = vmul.f32 %v1502, 1.442695
    %v1519 = vpow.pop %v1518
    %v1520 = vmul.f32 %v1503, 1.442695
    %v1521 = vpow.pop %v1520
    %v1522 = vmul.f32 %v1504, 1.442695
    %v1523 = vpow.pop %v1522
    %v1524 = vmul.f32 %v1505, 1.442695
    %v1525 = vpow.pop %v1524
    %v1526 = vmul.f32 %v1506, 1.442695
    %v1527 = vpow.pop %v1526
    %v1528 = vmul.f32 %v1507, 1.442695
    %v1529 = vpow.pop %v1528
    %v1530 = vmul.f32 %v1508, 1.442695
    %v1531 = vpow.pop %v1530
    %v1532 = vmul.f32 %v1509, 1.442695
    %v1533 = vpow.pop %v1532
    %v1534 = vmul.f32 %v1510, 1.442695
    %v1535 = vpow.pop %v1534
    %v1536 = vmul.f32 %v1511, 1.442695
    %v1537 = vpow.pop %v1536
    %v1538 = vmul.f32 %v1512, 1.442695
    %v1539 = vpow.pop %v1538
    %v1540 = vmul.f32 %v1513, 1.442695
    %v1541 = vpow.pop %v1540
    %v1542 = vmul.f32 %v1514, 1.442695
    %v1543 = vpow.pop %v1542
    %v1544 = vmul.f32 %v1515, 1.442695
    %v1545 = vpow.pop %v1544
    %v1546 = vmul.f32 %v1516, 1.442695
    %v1547 = vpow.pop %v1546
    %v1548 = vmul.f32 %v1517, 1.442695
    %v1549 = vpow.pop %v1548
    %1550 = vadd.xlane.f32.xlu0 %v1519
    %v1551 = vpop.xlane.xlu0 %1550
    %1552 = vadd.xlane.f32.xlu0 %v1521
    %v1553 = vpop.xlane.xlu0 %1552
    %1554 = vadd.xlane.f32.xlu0 %v1523
    %v1555 = vpop.xlane.xlu0 %1554
    %1556 = vadd.xlane.f32.xlu0 %v1525
    %v1557 = vpop.xlane.xlu0 %1556
    %1558 = vadd.xlane.f32.xlu0 %v1527
    %v1559 = vpop.xlane.xlu0 %1558
    %1560 = vadd.xlane.f32.xlu0 %v1529
    %v1561 = vpop.xlane.xlu0 %1560
    %1562 = vadd.xlane.f32.xlu0 %v1531
    %v1563 = vpop.xlane.xlu0 %1562
    %1564 = vadd.xlane.f32.xlu0 %v1533
    %v1565 = vpop.xlane.xlu0 %1564
    %1566 = vadd.xlane.f32.xlu0 %v1535
    %v1567 = vpop.xlane.xlu0 %1566
    %1568 = vadd.xlane.f32.xlu0 %v1537
    %v1569 = vpop.xlane.xlu0 %1568
    %1570 = vadd.xlane.f32.xlu0 %v1539
    %v1571 = vpop.xlane.xlu0 %1570
    %1572 = vadd.xlane.f32.xlu0 %v1541
    %v1573 = vpop.xlane.xlu0 %1572
    %1574 = vadd.xlane.f32.xlu0 %v1543
    %v1575 = vpop.xlane.xlu0 %1574
    %1576 = vadd.xlane.f32.xlu0 %v1545
    %v1577 = vpop.xlane.xlu0 %1576
    %1578 = vadd.xlane.f32.xlu0 %v1547
    %v1579 = vpop.xlane.xlu0 %1578
    %1580 = vadd.xlane.f32.xlu0 %v1549
    %v1581 = vpop.xlane.xlu0 %1580
    %v1582 = vrcp.pop %v1551
    %v1583 = vrcp.pop %v1553
    %v1584 = vrcp.pop %v1555
    %v1585 = vrcp.pop %v1557
    %v1586 = vrcp.pop %v1559
    %v1587 = vrcp.pop %v1561
    %v1588 = vrcp.pop %v1563
    %v1589 = vrcp.pop %v1565
    %v1590 = vrcp.pop %v1567
    %v1591 = vrcp.pop %v1569
    %v1592 = vrcp.pop %v1571
    %v1593 = vrcp.pop %v1573
    %v1594 = vrcp.pop %v1575
    %v1595 = vrcp.pop %v1577
    %v1596 = vrcp.pop %v1579
    %v1597 = vrcp.pop %v1581
    %v1598 = vmul.f32 %v1519, %v1582
    %v1599 = vmul.f32 %v1521, %v1583
    %v1600 = vmul.f32 %v1523, %v1584
    %v1601 = vmul.f32 %v1525, %v1585
    %v1602 = vmul.f32 %v1527, %v1586
    %v1603 = vmul.f32 %v1529, %v1587
    %v1604 = vmul.f32 %v1531, %v1588
    %v1605 = vmul.f32 %v1533, %v1589
    %v1606 = vmul.f32 %v1535, %v1590
    %v1607 = vmul.f32 %v1537, %v1591
    %v1608 = vmul.f32 %v1539, %v1592
    %v1609 = vmul.f32 %v1541, %v1593
    %v1610 = vmul.f32 %v1543, %v1594
    %v1611 = vmul.f32 %v1545, %v1595
    %v1612 = vmul.f32 %v1547, %v1596
    %v1613 = vmul.f32 %v1549, %v1597
    %1614 = vrot.lane.b32.xlu0 %v541, 112
    %v1615 = vpop.permute.xlu0 %1614
    %1616 = vrot.lane.b32.xlu0 %v546, 112
    %v1617 = vpop.permute.xlu0 %1616
    %1618 = vrot.lane.b32.xlu0 %v551, 112
    %v1619 = vpop.permute.xlu0 %1618
    %1620 = vrot.lane.b32.xlu0 %v556, 112
    %v1621 = vpop.permute.xlu0 %1620
    %1622 = vrot.lane.b32.xlu0 %v561, 112
    %v1623 = vpop.permute.xlu0 %1622
    %1624 = vrot.lane.b32.xlu0 %v566, 112
    %v1625 = vpop.permute.xlu0 %1624
    %1626 = vrot.lane.b32.xlu0 %v571, 112
    %v1627 = vpop.permute.xlu0 %1626
    %1628 = vrot.lane.b32.xlu0 %v576, 112
    %v1629 = vpop.permute.xlu0 %1628
    %1630 = vrot.lane.b32.xlu0 %v581, 112
    %v1631 = vpop.permute.xlu0 %1630
    %1632 = vrot.lane.b32.xlu0 %v586, 112
    %v1633 = vpop.permute.xlu0 %1632
    %1634 = vrot.lane.b32.xlu0 %v591, 112
    %v1635 = vpop.permute.xlu0 %1634
    %1636 = vrot.lane.b32.xlu0 %v596, 112
    %v1637 = vpop.permute.xlu0 %1636
    %1638 = vrot.lane.b32.xlu0 %v601, 112
    %v1639 = vpop.permute.xlu0 %1638
    %1640 = vrot.lane.b32.xlu0 %v606, 112
    %v1641 = vpop.permute.xlu0 %1640
    %1642 = vrot.lane.b32.xlu0 %v611, 112
    %v1643 = vpop.permute.xlu0 %1642
    %1644 = vrot.lane.b32.xlu0 %v616, 112
    %v1645 = vpop.permute.xlu0 %1644
    %1662 = vmatprep.subr.mxu0 0.0
    %1663 = vmatpush1.msra.mxu0 %v1615
    %1664 = vmatprep.subr.mxu0 0.0
    %1665 = vmatpush1.msra.mxu0 %v1617
    %1666 = vmatprep.subr.mxu0 0.0
    %1667 = vmatpush1.msra.mxu0 %v1619
    %1668 = vmatprep.subr.mxu0 0.0
    %1669 = vmatpush1.msra.mxu0 %v1621
    %1670 = vmatprep.subr.mxu0 0.0
    %1671 = vmatpush1.msra.mxu0 %v1623
    %1672 = vmatprep.subr.mxu0 0.0
    %1673 = vmatpush1.msra.mxu0 %v1625
    %1674 = vmatprep.subr.mxu0 0.0
    %1675 = vmatpush1.msra.mxu0 %v1627
    %1676 = vmatprep.subr.mxu0 0.0
    %1677 = vmatpush1.msra.mxu0 %v1629
    %1678 = vmatprep.subr.mxu0 0.0
    %1679 = vmatpush1.msra.mxu0 %v1631
    %1680 = vmatprep.subr.mxu0 0.0
    %1681 = vmatpush1.msra.mxu0 %v1633
    %1682 = vmatprep.subr.mxu0 0.0
    %1683 = vmatpush1.msra.mxu0 %v1635
    %1684 = vmatprep.subr.mxu0 0.0
    %1685 = vmatpush1.msra.mxu0 %v1637
    %1686 = vmatprep.subr.mxu0 0.0
    %1687 = vmatpush1.msra.mxu0 %v1639
    %1688 = vmatprep.subr.mxu0 0.0
    %1689 = vmatpush1.msra.mxu0 %v1641
    %1690 = vmatprep.subr.mxu0 0.0
    %1691 = vmatpush1.msra.mxu0 %v1643
    %1692 = vmatprep.subr.mxu0 0.0
    %1693 = vmatpush1.msra.mxu0 %v1645
    %1694 = vmatprep.subr.mxu0 0.0
    %1695 = vmatpush1.msra.mxu0 0.0
    %1696 = vmatprep.subr.mxu0 0.0
    %1697 = vmatpush1.msra.mxu0 0.0
    %1698 = vmatprep.subr.mxu0 0.0
    %1699 = vmatpush1.msra.mxu0 0.0
    %1700 = vmatprep.subr.mxu0 0.0
    %1701 = vmatpush1.msra.mxu0 0.0
    %1702 = vmatprep.subr.mxu0 0.0
    %1703 = vmatpush1.msra.mxu0 0.0
    %1704 = vmatprep.subr.mxu0 0.0
    %1705 = vmatpush1.msra.mxu0 0.0
    %1706 = vmatprep.subr.mxu0 0.0
    %1707 = vmatpush1.msra.mxu0 0.0
    %1708 = vmatprep.subr.mxu0 0.0
    %1709 = vmatpush1.msra.mxu0 0.0
    %1710 = vmatprep.subr.mxu0 0.0
    %1711 = vmatpush1.msra.mxu0 0.0
    %1712 = vmatprep.subr.mxu0 0.0
    %1713 = vmatpush1.msra.mxu0 0.0
    %1714 = vmatprep.subr.mxu0 0.0
    %1715 = vmatpush1.msra.mxu0 0.0
    %1716 = vmatprep.subr.mxu0 0.0
    %1717 = vmatpush1.msra.mxu0 0.0
    %1718 = vmatprep.subr.mxu0 0.0
    %1719 = vmatpush1.msra.mxu0 0.0
    %1720 = vmatprep.subr.mxu0 0.0
    %1721 = vmatpush1.msra.mxu0 0.0
    %1722 = vmatprep.subr.mxu0 0.0
    %1723 = vmatpush1.msra.mxu0 0.0
    %1724 = vmatprep.subr.mxu0 0.0
    %1725 = vmatpush1.msra.mxu0 0.0
    %1726 = vmatprep.mubr.f32.mxu0 0.0
    %1727 = vmatmul.mubr.f32.gmra.mrb[0].mxu0 %v1598
    %v1728 = vpop.f32.mrb[0].mxu0
    %v1729 = vadd.f32 0.0, %v1728
    %v1730 = vpop.f32.mrb[0].mxu0
    %1731 = vmatprep.mubr.f32.mxu0 0.0
    %1732 = vmatmul.mubr.f32.gmra.mrb[0].mxu0 %v1599
    %v1733 = vpop.f32.mrb[0].mxu0
    %v1734 = vadd.f32 0.0, %v1733
    %v1735 = vpop.f32.mrb[0].mxu0
    %1736 = vmatprep.mubr.f32.mxu0 0.0
    %1737 = vmatmul.mubr.f32.gmra.mrb[0].mxu0 %v1600
    %v1738 = vpop.f32.mrb[0].mxu0
    %v1739 = vadd.f32 0.0, %v1738
    %v1740 = vpop.f32.mrb[0].mxu0
    %1741 = vmatprep.mubr.f32.mxu0 0.0
    %1742 = vmatmul.mubr.f32.gmra.mrb[0].mxu0 %v1601
    %v1743 = vpop.f32.mrb[0].mxu0
    %v1744 = vadd.f32 0.0, %v1743
    %v1745 = vpop.f32.mrb[0].mxu0
    %1746 = vmatprep.mubr.f32.mxu0 0.0
    %1747 = vmatmul.mubr.f32.gmra.mrb[0].mxu0 %v1602
    %v1748 = vpop.f32.mrb[0].mxu0
    %v1749 = vadd.f32 0.0, %v1748
    %v1750 = vpop.f32.mrb[0].mxu0
    %1751 = vmatprep.mubr.f32.mxu0 0.0
    %1752 = vmatmul.mubr.f32.gmra.mrb[0].mxu0 %v1603
    %v1753 = vpop.f32.mrb[0].mxu0
    %v1754 = vadd.f32 0.0, %v1753
    %v1755 = vpop.f32.mrb[0].mxu0
    %1756 = vmatprep.mubr.f32.mxu0 0.0
    %1757 = vmatmul.mubr.f32.gmra.mrb[0].mxu0 %v1604
    %v1758 = vpop.f32.mrb[0].mxu0
    %v1759 = vadd.f32 0.0, %v1758
    %v1760 = vpop.f32.mrb[0].mxu0
    %1761 = vmatprep.mubr.f32.mxu0 0.0
    %1762 = vmatmul.mubr.f32.gmra.mrb[0].mxu0 %v1605
    %v1763 = vpop.f32.mrb[0].mxu0
    %v1764 = vadd.f32 0.0, %v1763
    %v1765 = vpop.f32.mrb[0].mxu0
    %1766 = vmatprep.mubr.f32.mxu0 0.0
    %1767 = vmatmul.mubr.f32.gmra.mrb[0].mxu0 %v1606
    %v1768 = vpop.f32.mrb[0].mxu0
    %v1769 = vadd.f32 0.0, %v1768
    %v1770 = vpop.f32.mrb[0].mxu0
    %1771 = vmatprep.mubr.f32.mxu0 0.0
    %1772 = vmatmul.mubr.f32.gmra.mrb[0].mxu0 %v1607
    %v1773 = vpop.f32.mrb[0].mxu0
    %v1774 = vadd.f32 0.0, %v1773
    %v1775 = vpop.f32.mrb[0].mxu0
    %1776 = vmatprep.mubr.f32.mxu0 0.0
    %1777 = vmatmul.mubr.f32.gmra.mrb[0].mxu0 %v1608
    %v1778 = vpop.f32.mrb[0].mxu0
    %v1779 = vadd.f32 0.0, %v1778
    %v1780 = vpop.f32.mrb[0].mxu0
    %1781 = vmatprep.mubr.f32.mxu0 0.0
    %1782 = vmatmul.mubr.f32.gmra.mrb[0].mxu0 %v1609
    %v1783 = vpop.f32.mrb[0].mxu0
    %v1784 = vadd.f32 0.0, %v1783
    %v1785 = vpop.f32.mrb[0].mxu0
    %1786 = vmatprep.mubr.f32.mxu0 0.0
    %1787 = vmatmul.mubr.f32.gmra.mrb[0].mxu0 %v1610
    %v1788 = vpop.f32.mrb[0].mxu0
    %v1789 = vadd.f32 0.0, %v1788
    %v1790 = vpop.f32.mrb[0].mxu0
    %1791 = vmatprep.mubr.f32.mxu0 0.0
    %1792 = vmatmul.mubr.f32.gmra.mrb[0].mxu0 %v1611
    %v1793 = vpop.f32.mrb[0].mxu0
    %v1794 = vadd.f32 0.0, %v1793
    %v1795 = vpop.f32.mrb[0].mxu0
    %1796 = vmatprep.mubr.f32.mxu0 0.0
    %1797 = vmatmul.mubr.f32.gmra.mrb[0].mxu0 %v1612
    %v1798 = vpop.f32.mrb[0].mxu0
    %v1799 = vadd.f32 0.0, %v1798
    %v1800 = vpop.f32.mrb[0].mxu0
    %1801 = vmatprep.mubr.f32.mxu0 0.0
    %1802 = vmatmul.mubr.f32.gmra.mrb[0].mxu0 %v1613
    %v1803 = vpop.f32.mrb[0].mxu0
    %v1804 = vadd.f32 0.0, %v1803
    %v1805 = vpop.f32.mrb[0].mxu0
    %1806 = vdwg.mxu0
    %1807 = vmatprep.subr.mxu0 0.0
    %1808 = vmatpush1.msra.mxu0 %v541
    %1809 = vmatprep.subr.mxu0 0.0
    %1810 = vmatpush1.msra.mxu0 %v546
    %1811 = vmatprep.subr.mxu0 0.0
    %1812 = vmatpush1.msra.mxu0 %v551
    %1813 = vmatprep.subr.mxu0 0.0
    %1814 = vmatpush1.msra.mxu0 %v556
    %1815 = vmatprep.subr.mxu0 0.0
    %1816 = vmatpush1.msra.mxu0 %v561
    %1817 = vmatprep.subr.mxu0 0.0
    %1818 = vmatpush1.msra.mxu0 %v566
    %1819 = vmatprep.subr.mxu0 0.0
    %1820 = vmatpush1.msra.mxu0 %v571
    %1821 = vmatprep.subr.mxu0 0.0
    %1822 = vmatpush1.msra.mxu0 %v576
    %1823 = vmatprep.subr.mxu0 0.0
    %1824 = vmatpush1.msra.mxu0 %v581
    %1825 = vmatprep.subr.mxu0 0.0
    %1826 = vmatpush1.msra.mxu0 %v586
    %1827 = vmatprep.subr.mxu0 0.0
    %1828 = vmatpush1.msra.mxu0 %v591
    %1829 = vmatprep.subr.mxu0 0.0
    %1830 = vmatpush1.msra.mxu0 %v596
    %1831 = vmatprep.subr.mxu0 0.0
    %1832 = vmatpush1.msra.mxu0 %v601
    %1833 = vmatprep.subr.mxu0 0.0
    %1834 = vmatpush1.msra.mxu0 %v606
    %1835 = vmatprep.subr.mxu0 0.0
    %1836 = vmatpush1.msra.mxu0 %v611
    %1837 = vmatprep.subr.mxu0 0.0
    %1838 = vmatpush1.msra.mxu0 %v616
    %1839 = vmatprep.subr.mxu0 0.0
    %1840 = vmatpush1.msra.mxu0 0.0
    %1841 = vmatprep.subr.mxu0 0.0
    %1842 = vmatpush1.msra.mxu0 0.0
    %1843 = vmatprep.subr.mxu0 0.0
    %1844 = vmatpush1.msra.mxu0 0.0
    %1845 = vmatprep.subr.mxu0 0.0
    %1846 = vmatpush1.msra.mxu0 0.0
    %1847 = vmatprep.subr.mxu0 0.0
    %1848 = vmatpush1.msra.mxu0 0.0
    %1849 = vmatprep.subr.mxu0 0.0
    %1850 = vmatpush1.msra.mxu0 0.0
    %1851 = vmatprep.subr.mxu0 0.0
    %1852 = vmatpush1.msra.mxu0 0.0
    %1853 = vmatprep.subr.mxu0 0.0
    %1854 = vmatpush1.msra.mxu0 0.0
    %1855 = vmatprep.subr.mxu0 0.0
    %1856 = vmatpush1.msra.mxu0 0.0
    %1857 = vmatprep.subr.mxu0 0.0
    %1858 = vmatpush1.msra.mxu0 0.0
    %1859 = vmatprep.subr.mxu0 0.0
    %1860 = vmatpush1.msra.mxu0 0.0
    %1861 = vmatprep.subr.mxu0 0.0
    %1862 = vmatpush1.msra.mxu0 0.0
    %1863 = vmatprep.subr.mxu0 0.0
    %1864 = vmatpush1.msra.mxu0 0.0
    %1865 = vmatprep.subr.mxu0 0.0
    %1866 = vmatpush1.msra.mxu0 0.0
    %1867 = vmatprep.subr.mxu0 0.0
    %1868 = vmatpush1.msra.mxu0 0.0
    %1869 = vmatprep.subr.mxu0 0.0
    %1870 = vmatpush1.msra.mxu0 0.0
    %1871 = vmatprep.mubr.f32.mxu0 0.0
    %1872 = vmatmul.mubr.f32.gmra.mrb[0].mxu0 %v1290
    %v1873 = vpop.f32.mrb[0].mxu0
    %v1874 = vadd.f32 %v1729, %v1873
    %v1875 = vpop.f32.mrb[0].mxu0
    %1876 = vmatprep.mubr.f32.mxu0 0.0
    %1877 = vmatmul.mubr.f32.gmra.mrb[0].mxu0 %v1291
    %v1878 = vpop.f32.mrb[0].mxu0
    %v1879 = vadd.f32 %v1734, %v1878
    %v1880 = vpop.f32.mrb[0].mxu0
    %1881 = vmatprep.mubr.f32.mxu0 0.0
    %1882 = vmatmul.mubr.f32.gmra.mrb[0].mxu0 %v1292
    %v1883 = vpop.f32.mrb[0].mxu0
    %v1884 = vadd.f32 %v1739, %v1883
    %v1885 = vpop.f32.mrb[0].mxu0
    %1886 = vmatprep.mubr.f32.mxu0 0.0
    %1887 = vmatmul.mubr.f32.gmra.mrb[0].mxu0 %v1293
    %v1888 = vpop.f32.mrb[0].mxu0
    %v1889 = vadd.f32 %v1744, %v1888
    %v1890 = vpop.f32.mrb[0].mxu0
    %1891 = vmatprep.mubr.f32.mxu0 0.0
    %1892 = vmatmul.mubr.f32.gmra.mrb[0].mxu0 %v1294
    %v1893 = vpop.f32.mrb[0].mxu0
    %v1894 = vadd.f32 %v1749, %v1893
    %v1895 = vpop.f32.mrb[0].mxu0
    %1896 = vmatprep.mubr.f32.mxu0 0.0
    %1897 = vmatmul.mubr.f32.gmra.mrb[0].mxu0 %v1295
    %v1898 = vpop.f32.mrb[0].mxu0
    %v1899 = vadd.f32 %v1754, %v1898
    %v1900 = vpop.f32.mrb[0].mxu0
    %1901 = vmatprep.mubr.f32.mxu0 0.0
    %1902 = vmatmul.mubr.f32.gmra.mrb[0].mxu0 %v1296
    %v1903 = vpop.f32.mrb[0].mxu0
    %v1904 = vadd.f32 %v1759, %v1903
    %v1905 = vpop.f32.mrb[0].mxu0
    %1906 = vmatprep.mubr.f32.mxu0 0.0
    %1907 = vmatmul.mubr.f32.gmra.mrb[0].mxu0 %v1297
    %v1908 = vpop.f32.mrb[0].mxu0
    %v1909 = vadd.f32 %v1764, %v1908
    %v1910 = vpop.f32.mrb[0].mxu0
    %1911 = vmatprep.mubr.f32.mxu0 0.0
    %1912 = vmatmul.mubr.f32.gmra.mrb[0].mxu0 %v1298
    %v1913 = vpop.f32.mrb[0].mxu0
    %v1914 = vadd.f32 %v1769, %v1913
    %v1915 = vpop.f32.mrb[0].mxu0
    %1916 = vmatprep.mubr.f32.mxu0 0.0
    %1917 = vmatmul.mubr.f32.gmra.mrb[0].mxu0 %v1299
    %v1918 = vpop.f32.mrb[0].mxu0
    %v1919 = vadd.f32 %v1774, %v1918
    %v1920 = vpop.f32.mrb[0].mxu0
    %1921 = vmatprep.mubr.f32.mxu0 0.0
    %1922 = vmatmul.mubr.f32.gmra.mrb[0].mxu0 %v1300
    %v1923 = vpop.f32.mrb[0].mxu0
    %v1924 = vadd.f32 %v1779, %v1923
    %v1925 = vpop.f32.mrb[0].mxu0
    %1926 = vmatprep.mubr.f32.mxu0 0.0
    %1927 = vmatmul.mubr.f32.gmra.mrb[0].mxu0 %v1301
    %v1928 = vpop.f32.mrb[0].mxu0
    %v1929 = vadd.f32 %v1784, %v1928
    %v1930 = vpop.f32.mrb[0].mxu0
    %1931 = vmatprep.mubr.f32.mxu0 0.0
    %1932 = vmatmul.mubr.f32.gmra.mrb[0].mxu0 %v1302
    %v1933 = vpop.f32.mrb[0].mxu0
    %v1934 = vadd.f32 %v1789, %v1933
    %v1935 = vpop.f32.mrb[0].mxu0
    %1936 = vmatprep.mubr.f32.mxu0 0.0
    %1937 = vmatmul.mubr.f32.gmra.mrb[0].mxu0 %v1303
    %v1938 = vpop.f32.mrb[0].mxu0
    %v1939 = vadd.f32 %v1794, %v1938
    %v1940 = vpop.f32.mrb[0].mxu0
    %1941 = vmatprep.mubr.f32.mxu0 0.0
    %1942 = vmatmul.mubr.f32.gmra.mrb[0].mxu0 %v1304
    %v1943 = vpop.f32.mrb[0].mxu0
    %v1944 = vadd.f32 %v1799, %v1943
    %v1945 = vpop.f32.mrb[0].mxu0
    %1946 = vmatprep.mubr.f32.mxu0 0.0
    %1947 = vmatmul.mubr.f32.gmra.mrb[0].mxu0 %v1305
    %v1948 = vpop.f32.mrb[0].mxu0
    %v1949 = vadd.f32 %v1804, %v1948
    %v1950 = vpop.f32.mrb[0].mxu0
    %1951 = vdwg.mxu0
    %v1952 = vmul.f32 %v1874, 0.5
    %v1953 = vmul.f32 %v1879, 0.5
    %v1954 = vmul.f32 %v1884, 0.5
    %v1955 = vmul.f32 %v1889, 0.5
    %v1956 = vmul.f32 %v1894, 0.5
    %v1957 = vmul.f32 %v1899, 0.5
    %v1958 = vmul.f32 %v1904, 0.5
    %v1959 = vmul.f32 %v1909, 0.5
    %v1960 = vmul.f32 %v1914, 0.5
    %v1961 = vmul.f32 %v1919, 0.5
    %v1962 = vmul.f32 %v1924, 0.5
    %v1963 = vmul.f32 %v1929, 0.5
    %v1964 = vmul.f32 %v1934, 0.5
    %v1965 = vmul.f32 %v1939, 0.5
    %v1966 = vmul.f32 %v1944, 0.5
    %v1967 = vmul.f32 %v1949, 0.5
    %v1968 = vld [vmem:[#allocation12] sm:$0x1]
    %v1970 = vlaneseq
    %v1971 = vshrl.u32 %v1970, 7
    %v1972 = vsub.s32 0, %v1971
    %v1973 = vrot.slane %v1968, %v1972
    %v1975 = vadd.f32 %v1952, %v1973
    %v1976 = vadd.f32 %v1953, %v1973
    %v1977 = vadd.f32 %v1954, %v1973
    %v1978 = vadd.f32 %v1955, %v1973
    %v1979 = vadd.f32 %v1956, %v1973
    %v1980 = vadd.f32 %v1957, %v1973
    %v1981 = vadd.f32 %v1958, %v1973
    %v1982 = vadd.f32 %v1959, %v1973
    %v1983 = vadd.f32 %v1960, %v1973
    %v1984 = vadd.f32 %v1961, %v1973
    %v1985 = vadd.f32 %v1962, %v1973
    %v1986 = vadd.f32 %v1963, %v1973
    %v1987 = vadd.f32 %v1964, %v1973
    %v1988 = vadd.f32 %v1965, %v1973
    %v1989 = vadd.f32 %v1966, %v1973
    %v1990 = vadd.f32 %v1967, %v1973
    %v1991 = vmax.f32 %v1975, 0.0
    %v1992 = vmax.f32 %v1976, 0.0
    %v1993 = vmax.f32 %v1977, 0.0
    %v1994 = vmax.f32 %v1978, 0.0
    %v1995 = vmax.f32 %v1979, 0.0
    %v1996 = vmax.f32 %v1980, 0.0
    %v1997 = vmax.f32 %v1981, 0.0
    %v1998 = vmax.f32 %v1982, 0.0
    %v1999 = vmax.f32 %v1983, 0.0
    %v2000 = vmax.f32 %v1984, 0.0
    %v2001 = vmax.f32 %v1985, 0.0
    %v2002 = vmax.f32 %v1986, 0.0
    %v2003 = vmax.f32 %v1987, 0.0
    %v2004 = vmax.f32 %v1988, 0.0
    %v2005 = vmax.f32 %v1989, 0.0
    %v2006 = vmax.f32 %v1990, 0.0
    %v2007 = vld [vmem:[%s14 + $0x8] sm:$0xff]
    %v2008 = vld [vmem:[%s14 + $0x10] sm:$0xff]
    %vm2009 = vcmask 130048
    %v2011 = vsel %vm2009, %v1991, 0
    %v2014 = vsel %vm2009, %v1992, 0
    %v2017 = vsel %vm2009, %v1993, 0
    %v2020 = vsel %vm2009, %v1994, 0
    %v2023 = vsel %vm2009, %v1995, 0
    %v2026 = vsel %vm2009, %v1996, 0
    %v2029 = vsel %vm2009, %v1997, 0
    %v2032 = vsel %vm2009, %v1998, 0
    %v2035 = vsel %vm2009, %v1999, 0
    %v2038 = vsel %vm2009, %v2000, 0
    %v2041 = vsel %vm2009, %v2001, 0
    %v2044 = vsel %vm2009, %v2002, 0
    %v2047 = vsel %vm2009, %v2003, 0
    %v2050 = vsel %vm2009, %v2004, 0
    %v2053 = vsel %vm2009, %v2005, 0
    %v2056 = vsel %vm2009, %v2006, 0
    %2058 = vmatprep.subr.mxu0 0.0
    %2059 = vmatpush1.msra.mxu0 %v2007
    %2060 = vmatprep.subr.mxu0 0.0
    %2061 = vmatpush1.msra.mxu0 %v2008
    %2062 = vmatprep.subr.mxu0 0.0
    %2063 = vmatpush1.msra.mxu0 0.0
    %2064 = vmatprep.subr.mxu0 0.0
    %2065 = vmatpush1.msra.mxu0 0.0
    %2066 = vmatprep.subr.mxu0 0.0
    %2067 = vmatpush1.msra.mxu0 0.0
    %2068 = vmatprep.subr.mxu0 0.0
    %2069 = vmatpush1.msra.mxu0 0.0
    %2070 = vmatprep.subr.mxu0 0.0
    %2071 = vmatpush1.msra.mxu0 0.0
    %2072 = vmatprep.subr.mxu0 0.0
    %2073 = vmatpush1.msra.mxu0 0.0
    %2074 = vmatprep.subr.mxu0 0.0
    %2075 = vmatpush1.msra.mxu0 0.0
    %2076 = vmatprep.subr.mxu0 0.0
    %2077 = vmatpush1.msra.mxu0 0.0
    %2078 = vmatprep.subr.mxu0 0.0
    %2079 = vmatpush1.msra.mxu0 0.0
    %2080 = vmatprep.subr.mxu0 0.0
    %2081 = vmatpush1.msra.mxu0 0.0
    %2082 = vmatprep.subr.mxu0 0.0
    %2083 = vmatpush1.msra.mxu0 0.0
    %2084 = vmatprep.subr.mxu0 0.0
    %2085 = vmatpush1.msra.mxu0 0.0
    %2086 = vmatprep.subr.mxu0 0.0
    %2087 = vmatpush1.msra.mxu0 0.0
    %2088 = vmatprep.subr.mxu0 0.0
    %2089 = vmatpush1.msra.mxu0 0.0
    %2090 = vmatprep.subr.mxu0 0.0
    %2091 = vmatpush1.msra.mxu0 0.0
    %2092 = vmatprep.subr.mxu0 0.0
    %2093 = vmatpush1.msra.mxu0 0.0
    %2094 = vmatprep.subr.mxu0 0.0
    %2095 = vmatpush1.msra.mxu0 0.0
    %2096 = vmatprep.subr.mxu0 0.0
    %2097 = vmatpush1.msra.mxu0 0.0
    %2098 = vmatprep.subr.mxu0 0.0
    %2099 = vmatpush1.msra.mxu0 0.0
    %2100 = vmatprep.subr.mxu0 0.0
    %2101 = vmatpush1.msra.mxu0 0.0
    %2102 = vmatprep.subr.mxu0 0.0
    %2103 = vmatpush1.msra.mxu0 0.0
    %2104 = vmatprep.subr.mxu0 0.0
    %2105 = vmatpush1.msra.mxu0 0.0
    %2106 = vmatprep.subr.mxu0 0.0
    %2107 = vmatpush1.msra.mxu0 0.0
    %2108 = vmatprep.subr.mxu0 0.0
    %2109 = vmatpush1.msra.mxu0 0.0
    %2110 = vmatprep.subr.mxu0 0.0
    %2111 = vmatpush1.msra.mxu0 0.0
    %2112 = vmatprep.subr.mxu0 0.0
    %2113 = vmatpush1.msra.mxu0 0.0
    %2114 = vmatprep.subr.mxu0 0.0
    %2115 = vmatpush1.msra.mxu0 0.0
    %2116 = vmatprep.subr.mxu0 0.0
    %2117 = vmatpush1.msra.mxu0 0.0
    %2118 = vmatprep.subr.mxu0 0.0
    %2119 = vmatpush1.msra.mxu0 0.0
    %2120 = vmatprep.subr.mxu0 0.0
    %2121 = vmatpush1.msra.mxu0 0.0
    %2122 = vmatprep.mubr.f32.mxu0 0.0
    %2123 = vmatmul.mubr.f32.gmra.mrb[0].mxu0 %v2011
    %v2124 = vpop.f32.mrb[0].mxu0
    %v2125 = vadd.f32 0.0, %v2124
    %v2126 = vpop.f32.mrb[0].mxu0
    %2127 = vmatprep.mubr.f32.mxu0 0.0
    %2128 = vmatmul.mubr.f32.gmra.mrb[0].mxu0 %v2014
    %v2129 = vpop.f32.mrb[0].mxu0
    %v2130 = vadd.f32 0.0, %v2129
    %v2131 = vpop.f32.mrb[0].mxu0
    %2132 = vmatprep.mubr.f32.mxu0 0.0
    %2133 = vmatmul.mubr.f32.gmra.mrb[0].mxu0 %v2017
    %v2134 = vpop.f32.mrb[0].mxu0
    %v2135 = vadd.f32 0.0, %v2134
    %v2136 = vpop.f32.mrb[0].mxu0
    %2137 = vmatprep.mubr.f32.mxu0 0.0
    %2138 = vmatmul.mubr.f32.gmra.mrb[0].mxu0 %v2020
    %v2139 = vpop.f32.mrb[0].mxu0
    %v2140 = vadd.f32 0.0, %v2139
    %v2141 = vpop.f32.mrb[0].mxu0
    %2142 = vmatprep.mubr.f32.mxu0 0.0
    %2143 = vmatmul.mubr.f32.gmra.mrb[0].mxu0 %v2023
    %v2144 = vpop.f32.mrb[0].mxu0
    %v2145 = vadd.f32 0.0, %v2144
    %v2146 = vpop.f32.mrb[0].mxu0
    %2147 = vmatprep.mubr.f32.mxu0 0.0
    %2148 = vmatmul.mubr.f32.gmra.mrb[0].mxu0 %v2026
    %v2149 = vpop.f32.mrb[0].mxu0
    %v2150 = vadd.f32 0.0, %v2149
    %v2151 = vpop.f32.mrb[0].mxu0
    %2152 = vmatprep.mubr.f32.mxu0 0.0
    %2153 = vmatmul.mubr.f32.gmra.mrb[0].mxu0 %v2029
    %v2154 = vpop.f32.mrb[0].mxu0
    %v2155 = vadd.f32 0.0, %v2154
    %v2156 = vpop.f32.mrb[0].mxu0
    %2157 = vmatprep.mubr.f32.mxu0 0.0
    %2158 = vmatmul.mubr.f32.gmra.mrb[0].mxu0 %v2032
    %v2159 = vpop.f32.mrb[0].mxu0
    %v2160 = vadd.f32 0.0, %v2159
    %v2161 = vpop.f32.mrb[0].mxu0
    %2162 = vmatprep.mubr.f32.mxu0 0.0
    %2163 = vmatmul.mubr.f32.gmra.mrb[0].mxu0 %v2035
    %v2164 = vpop.f32.mrb[0].mxu0
    %v2165 = vadd.f32 0.0, %v2164
    %v2166 = vpop.f32.mrb[0].mxu0
    %2167 = vmatprep.mubr.f32.mxu0 0.0
    %2168 = vmatmul.mubr.f32.gmra.mrb[0].mxu0 %v2038
    %v2169 = vpop.f32.mrb[0].mxu0
    %v2170 = vadd.f32 0.0, %v2169
    %v2171 = vpop.f32.mrb[0].mxu0
    %2172 = vmatprep.mubr.f32.mxu0 0.0
    %2173 = vmatmul.mubr.f32.gmra.mrb[0].mxu0 %v2041
    %v2174 = vpop.f32.mrb[0].mxu0
    %v2175 = vadd.f32 0.0, %v2174
    %v2176 = vpop.f32.mrb[0].mxu0
    %2177 = vmatprep.mubr.f32.mxu0 0.0
    %2178 = vmatmul.mubr.f32.gmra.mrb[0].mxu0 %v2044
    %v2179 = vpop.f32.mrb[0].mxu0
    %v2180 = vadd.f32 0.0, %v2179
    %v2181 = vpop.f32.mrb[0].mxu0
    %2182 = vmatprep.mubr.f32.mxu0 0.0
    %2183 = vmatmul.mubr.f32.gmra.mrb[0].mxu0 %v2047
    %v2184 = vpop.f32.mrb[0].mxu0
    %v2185 = vadd.f32 0.0, %v2184
    %v2186 = vpop.f32.mrb[0].mxu0
    %2187 = vmatprep.mubr.f32.mxu0 0.0
    %2188 = vmatmul.mubr.f32.gmra.mrb[0].mxu0 %v2050
    %v2189 = vpop.f32.mrb[0].mxu0
    %v2190 = vadd.f32 0.0, %v2189
    %v2191 = vpop.f32.mrb[0].mxu0
    %2192 = vmatprep.mubr.f32.mxu0 0.0
    %2193 = vmatmul.mubr.f32.gmra.mrb[0].mxu0 %v2053
    %v2194 = vpop.f32.mrb[0].mxu0
    %v2195 = vadd.f32 0.0, %v2194
    %v2196 = vpop.f32.mrb[0].mxu0
    %2197 = vmatprep.mubr.f32.mxu0 0.0
    %2198 = vmatmul.mubr.f32.gmra.mrb[0].mxu0 %v2056
    %v2199 = vpop.f32.mrb[0].mxu0
    %v2200 = vadd.f32 0.0, %v2199
    %v2201 = vpop.f32.mrb[0].mxu0
    %2202 = vdwg.mxu0
    %v2203 = vadd.f32 %v395, %v2125
    %v2204 = vadd.f32 %v400, %v2130
    %v2205 = vadd.f32 %v405, %v2135
    %v2206 = vadd.f32 %v410, %v2140
    %v2207 = vadd.f32 %v415, %v2145
    %v2208 = vadd.f32 %v420, %v2150
    %v2209 = vadd.f32 %v425, %v2155
    %v2210 = vadd.f32 %v430, %v2160
    %v2211 = vadd.f32 %v435, %v2165
    %v2212 = vadd.f32 %v440, %v2170
    %v2213 = vadd.f32 %v445, %v2175
    %v2214 = vadd.f32 %v450, %v2180
    %v2215 = vadd.f32 %v455, %v2185
    %v2216 = vadd.f32 %v460, %v2190
    %v2217 = vadd.f32 %v465, %v2195
    %v2218 = vadd.f32 %v470, %v2200
    %v2219 = vld [vmem:[%s9] sm:$0xff]
    %v2220 = vld [vmem:[%s9 + $0x8] sm:$0xff]
    %2221 = vmatprep.subr.mxu0 0.0
    %2222 = vmatpush1.msra.mxu0 %v2219
    %2223 = vmatprep.subr.mxu0 0.0
    %2224 = vmatpush1.msra.mxu0 %v2220
    %2225 = vmatprep.subr.mxu0 0.0
    %2226 = vmatpush1.msra.mxu0 0.0
    %2227 = vmatprep.subr.mxu0 0.0
    %2228 = vmatpush1.msra.mxu0 0.0
    %2229 = vmatprep.subr.mxu0 0.0
    %2230 = vmatpush1.msra.mxu0 0.0
    %2231 = vmatprep.subr.mxu0 0.0
    %2232 = vmatpush1.msra.mxu0 0.0
    %2233 = vmatprep.subr.mxu0 0.0
    %2234 = vmatpush1.msra.mxu0 0.0
    %2235 = vmatprep.subr.mxu0 0.0
    %2236 = vmatpush1.msra.mxu0 0.0
    %2237 = vmatprep.subr.mxu0 0.0
    %2238 = vmatpush1.msra.mxu0 0.0
    %2239 = vmatprep.subr.mxu0 0.0
    %2240 = vmatpush1.msra.mxu0 0.0
    %2241 = vmatprep.subr.mxu0 0.0
    %2242 = vmatpush1.msra.mxu0 0.0
    %2243 = vmatprep.subr.mxu0 0.0
    %2244 = vmatpush1.msra.mxu0 0.0
    %2245 = vmatprep.subr.mxu0 0.0
    %2246 = vmatpush1.msra.mxu0 0.0
    %2247 = vmatprep.subr.mxu0 0.0
    %2248 = vmatpush1.msra.mxu0 0.0
    %2249 = vmatprep.subr.mxu0 0.0
    %2250 = vmatpush1.msra.mxu0 0.0
    %2251 = vmatprep.subr.mxu0 0.0
    %2252 = vmatpush1.msra.mxu0 0.0
    %2253 = vmatprep.subr.mxu0 0.0
    %2254 = vmatpush1.msra.mxu0 0.0
    %2255 = vmatprep.subr.mxu0 0.0
    %2256 = vmatpush1.msra.mxu0 0.0
    %2257 = vmatprep.subr.mxu0 0.0
    %2258 = vmatpush1.msra.mxu0 0.0
    %2259 = vmatprep.subr.mxu0 0.0
    %2260 = vmatpush1.msra.mxu0 0.0
    %2261 = vmatprep.subr.mxu0 0.0
    %2262 = vmatpush1.msra.mxu0 0.0
    %2263 = vmatprep.subr.mxu0 0.0
    %2264 = vmatpush1.msra.mxu0 0.0
    %2265 = vmatprep.subr.mxu0 0.0
    %2266 = vmatpush1.msra.mxu0 0.0
    %2267 = vmatprep.subr.mxu0 0.0
    %2268 = vmatpush1.msra.mxu0 0.0
    %2269 = vmatprep.subr.mxu0 0.0
    %2270 = vmatpush1.msra.mxu0 0.0
    %2271 = vmatprep.subr.mxu0 0.0
    %2272 = vmatpush1.msra.mxu0 0.0
    %2273 = vmatprep.subr.mxu0 0.0
    %2274 = vmatpush1.msra.mxu0 0.0
    %2275 = vmatprep.subr.mxu0 0.0
    %2276 = vmatpush1.msra.mxu0 0.0
    %2277 = vmatprep.subr.mxu0 0.0
    %2278 = vmatpush1.msra.mxu0 0.0
    %2279 = vmatprep.subr.mxu0 0.0
    %2280 = vmatpush1.msra.mxu0 0.0
    %2281 = vmatprep.subr.mxu0 0.0
    %2282 = vmatpush1.msra.mxu0 0.0
    %2283 = vmatprep.subr.mxu0 0.0
    %2284 = vmatpush1.msra.mxu0 0.0
    %2285 = vmatprep.mubr.f32.mxu0 0.0
    %2286 = vmatmul.mubr.f32.gmra.mrb[0].mxu0 %v2011
    %v2287 = vpop.f32.mrb[0].mxu0
    %v2288 = vadd.f32 0.0, %v2287
    %v2289 = vpop.f32.mrb[0].mxu0
    %2290 = vmatprep.mubr.f32.mxu0 0.0
    %2291 = vmatmul.mubr.f32.gmra.mrb[0].mxu0 %v2014
    %v2292 = vpop.f32.mrb[0].mxu0
    %v2293 = vadd.f32 0.0, %v2292
    %v2294 = vpop.f32.mrb[0].mxu0
    %2295 = vmatprep.mubr.f32.mxu0 0.0
    %2296 = vmatmul.mubr.f32.gmra.mrb[0].mxu0 %v2017
    %v2297 = vpop.f32.mrb[0].mxu0
    %v2298 = vadd.f32 0.0, %v2297
    %v2299 = vpop.f32.mrb[0].mxu0
    %2300 = vmatprep.mubr.f32.mxu0 0.0
    %2301 = vmatmul.mubr.f32.gmra.mrb[0].mxu0 %v2020
    %v2302 = vpop.f32.mrb[0].mxu0
    %v2303 = vadd.f32 0.0, %v2302
    %v2304 = vpop.f32.mrb[0].mxu0
    %2305 = vmatprep.mubr.f32.mxu0 0.0
    %2306 = vmatmul.mubr.f32.gmra.mrb[0].mxu0 %v2023
    %v2307 = vpop.f32.mrb[0].mxu0
    %v2308 = vadd.f32 0.0, %v2307
    %v2309 = vpop.f32.mrb[0].mxu0
    %2310 = vmatprep.mubr.f32.mxu0 0.0
    %2311 = vmatmul.mubr.f32.gmra.mrb[0].mxu0 %v2026
    %v2312 = vpop.f32.mrb[0].mxu0
    %v2313 = vadd.f32 0.0, %v2312
    %v2314 = vpop.f32.mrb[0].mxu0
    %2315 = vmatprep.mubr.f32.mxu0 0.0
    %2316 = vmatmul.mubr.f32.gmra.mrb[0].mxu0 %v2029
    %v2317 = vpop.f32.mrb[0].mxu0
    %v2318 = vadd.f32 0.0, %v2317
    %v2319 = vpop.f32.mrb[0].mxu0
    %2320 = vmatprep.mubr.f32.mxu0 0.0
    %2321 = vmatmul.mubr.f32.gmra.mrb[0].mxu0 %v2032
    %v2322 = vpop.f32.mrb[0].mxu0
    %v2323 = vadd.f32 0.0, %v2322
    %v2324 = vpop.f32.mrb[0].mxu0
    %2325 = vmatprep.mubr.f32.mxu0 0.0
    %2326 = vmatmul.mubr.f32.gmra.mrb[0].mxu0 %v2035
    %v2327 = vpop.f32.mrb[0].mxu0
    %v2328 = vadd.f32 0.0, %v2327
    %v2329 = vpop.f32.mrb[0].mxu0
    %2330 = vmatprep.mubr.f32.mxu0 0.0
    %2331 = vmatmul.mubr.f32.gmra.mrb[0].mxu0 %v2038
    %v2332 = vpop.f32.mrb[0].mxu0
    %v2333 = vadd.f32 0.0, %v2332
    %v2334 = vpop.f32.mrb[0].mxu0
    %2335 = vmatprep.mubr.f32.mxu0 0.0
    %2336 = vmatmul.mubr.f32.gmra.mrb[0].mxu0 %v2041
    %v2337 = vpop.f32.mrb[0].mxu0
    %v2338 = vadd.f32 0.0, %v2337
    %v2339 = vpop.f32.mrb[0].mxu0
    %2340 = vmatprep.mubr.f32.mxu0 0.0
    %2341 = vmatmul.mubr.f32.gmra.mrb[0].mxu0 %v2044
    %v2342 = vpop.f32.mrb[0].mxu0
    %v2343 = vadd.f32 0.0, %v2342
    %v2344 = vpop.f32.mrb[0].mxu0
    %2345 = vmatprep.mubr.f32.mxu0 0.0
    %2346 = vmatmul.mubr.f32.gmra.mrb[0].mxu0 %v2047
    %v2347 = vpop.f32.mrb[0].mxu0
    %v2348 = vadd.f32 0.0, %v2347
    %v2349 = vpop.f32.mrb[0].mxu0
    %2350 = vmatprep.mubr.f32.mxu0 0.0
    %2351 = vmatmul.mubr.f32.gmra.mrb[0].mxu0 %v2050
    %v2352 = vpop.f32.mrb[0].mxu0
    %v2353 = vadd.f32 0.0, %v2352
    %v2354 = vpop.f32.mrb[0].mxu0
    %2355 = vmatprep.mubr.f32.mxu0 0.0
    %2356 = vmatmul.mubr.f32.gmra.mrb[0].mxu0 %v2053
    %v2357 = vpop.f32.mrb[0].mxu0
    %v2358 = vadd.f32 0.0, %v2357
    %v2359 = vpop.f32.mrb[0].mxu0
    %2360 = vmatprep.mubr.f32.mxu0 0.0
    %2361 = vmatmul.mubr.f32.gmra.mrb[0].mxu0 %v2056
    %v2362 = vpop.f32.mrb[0].mxu0
    %v2363 = vadd.f32 0.0, %v2362
    %v2364 = vpop.f32.mrb[0].mxu0
    %2365 = vdwg.mxu0
    %v2366 = vld [vmem:[#allocation13] sm:$0x3]
    %v2368 = vsel %vm620, %v2366, 0
    %v2371 = vsel %vm620, %v2288, 0
    %v2374 = vsel %vm620, %v2293, 0
    %v2377 = vsel %vm620, %v2298, 0
    %v2380 = vsel %vm620, %v2303, 0
    %v2383 = vsel %vm620, %v2308, 0
    %v2386 = vsel %vm620, %v2313, 0
    %v2389 = vsel %vm620, %v2318, 0
    %v2392 = vsel %vm620, %v2323, 0
    %v2395 = vsel %vm620, %v2328, 0
    %v2398 = vsel %vm620, %v2333, 0
    %v2401 = vsel %vm620, %v2338, 0
    %v2404 = vsel %vm620, %v2343, 0
    %v2407 = vsel %vm620, %v2348, 0
    %v2410 = vsel %vm620, %v2353, 0
    %v2413 = vsel %vm620, %v2358, 0
    %v2416 = vsel %vm620, %v2363, 0
    %2418 = vmatprep.subr.mxu0 0.0
    %2419 = vmatpush1.xpose.msra.mxu0 %v2371
    %2420 = vmatprep.subr.mxu0 0.0
    %2421 = vmatpush1.xpose.msra.mxu0 %v2374
    %2422 = vmatprep.subr.mxu0 0.0
    %2423 = vmatpush1.xpose.msra.mxu0 %v2377
    %2424 = vmatprep.subr.mxu0 0.0
    %2425 = vmatpush1.xpose.msra.mxu0 %v2380
    %2426 = vmatprep.subr.mxu0 0.0
    %2427 = vmatpush1.xpose.msra.mxu0 %v2383
    %2428 = vmatprep.subr.mxu0 0.0
    %2429 = vmatpush1.xpose.msra.mxu0 %v2386
    %2430 = vmatprep.subr.mxu0 0.0
    %2431 = vmatpush1.xpose.msra.mxu0 %v2389
    %2432 = vmatprep.subr.mxu0 0.0
    %2433 = vmatpush1.xpose.msra.mxu0 %v2392
    %2434 = vmatprep.subr.mxu0 0.0
    %2435 = vmatpush1.xpose.msra.mxu0 %v2395
    %2436 = vmatprep.subr.mxu0 0.0
    %2437 = vmatpush1.xpose.msra.mxu0 %v2398
    %2438 = vmatprep.subr.mxu0 0.0
    %2439 = vmatpush1.xpose.msra.mxu0 %v2401
    %2440 = vmatprep.subr.mxu0 0.0
    %2441 = vmatpush1.xpose.msra.mxu0 %v2404
    %2442 = vmatprep.subr.mxu0 0.0
    %2443 = vmatpush1.xpose.msra.mxu0 %v2407
    %2444 = vmatprep.subr.mxu0 0.0
    %2445 = vmatpush1.xpose.msra.mxu0 %v2410
    %2446 = vmatprep.subr.mxu0 0.0
    %2447 = vmatpush1.xpose.msra.mxu0 %v2413
    %2448 = vmatprep.subr.mxu0 0.0
    %2449 = vmatpush1.xpose.msra.mxu0 %v2416
    %2450 = vmatprep.subr.mxu0 0.0
    %2451 = vmatpush1.xpose.msra.mxu0 0.0
    %2452 = vmatprep.subr.mxu0 0.0
    %2453 = vmatpush1.xpose.msra.mxu0 0.0
    %2454 = vmatprep.subr.mxu0 0.0
    %2455 = vmatpush1.xpose.msra.mxu0 0.0
    %2456 = vmatprep.subr.mxu0 0.0
    %2457 = vmatpush1.xpose.msra.mxu0 0.0
    %2458 = vmatprep.subr.mxu0 0.0
    %2459 = vmatpush1.xpose.msra.mxu0 0.0
    %2460 = vmatprep.subr.mxu0 0.0
    %2461 = vmatpush1.xpose.msra.mxu0 0.0
    %2462 = vmatprep.subr.mxu0 0.0
    %2463 = vmatpush1.xpose.msra.mxu0 0.0
    %2464 = vmatprep.subr.mxu0 0.0
    %2465 = vmatpush1.xpose.msra.mxu0 0.0
    %2466 = vmatprep.subr.mxu0 0.0
    %2467 = vmatpush1.xpose.msra.mxu0 0.0
    %2468 = vmatprep.subr.mxu0 0.0
    %2469 = vmatpush1.xpose.msra.mxu0 0.0
    %2470 = vmatprep.subr.mxu0 0.0
    %2471 = vmatpush1.xpose.msra.mxu0 0.0
    %2472 = vmatprep.subr.mxu0 0.0
    %2473 = vmatpush1.xpose.msra.mxu0 0.0
    %2474 = vmatprep.subr.mxu0 0.0
    %2475 = vmatpush1.xpose.msra.mxu0 0.0
    %2476 = vmatprep.subr.mxu0 0.0
    %2477 = vmatpush1.xpose.msra.mxu0 0.0
    %2478 = vmatprep.subr.mxu0 0.0
    %2479 = vmatpush1.xpose.msra.mxu0 0.0
    %2480 = vmatprep.subr.mxu0 0.0
    %2481 = vmatpush1.xpose.msra.mxu0 0.0
    %2482 = vmatprep.mubr.f32.mxu0 0.0
    %2483 = vmatmul.mubr.f32.gmra.mrb[0].mxu0 %v2368
    %v2484 = vpop.f32.mrb[0].mxu0
    %v2485 = vadd.f32 0.0, %v2484
    %v2486 = vpop.f32.mrb[0].mxu0
    %2487 = vdwg.mxu0
    %s2488 = sld [smem:[#allocation2 + $0x8]]
    %v2489 = vstv %s2488
    %v2490 = vmul.f32 %v2489, %v206
    %v2491 = vmul.f32 %v2489, %v207
    %v2492 = vmul.f32 %v2489, %v208
    %v2493 = vmul.f32 %v2489, %v209
    %v2494 = vmul.f32 %v2489, %v210
    %v2495 = vmul.f32 %v2489, %v211
    %v2496 = vmul.f32 %v2489, %v212
    %v2497 = vmul.f32 %v2489, %v213
    %v2498 = vmul.f32 %v2489, %v214
    %v2499 = vmul.f32 %v2489, %v215
    %v2500 = vmul.f32 %v2489, %v216
    %v2501 = vmul.f32 %v2489, %v217
    %v2502 = vmul.f32 %v2489, %v218
    %v2503 = vmul.f32 %v2489, %v219
    %v2504 = vmul.f32 %v2489, %v220
    %v2505 = vmul.f32 %v2489, %v221
    %s2506 = sld [smem:[#allocation2 + $0xa]]
    %v2507 = vstv %s2506
    %v2508 = vmul.f32 %v2507, %v223
    %v2509 = vmul.f32 %v2507, %v224
    %v2510 = vmul.f32 %v2507, %v225
    %v2511 = vmul.f32 %v2507, %v226
    %v2512 = vmul.f32 %v2507, %v227
    %v2513 = vmul.f32 %v2507, %v228
    %v2514 = vmul.f32 %v2507, %v229
    %v2515 = vmul.f32 %v2507, %v230
    %v2516 = vmul.f32 %v2507, %v231
    %v2517 = vmul.f32 %v2507, %v232
    %v2518 = vmul.f32 %v2507, %v233
    %v2519 = vmul.f32 %v2507, %v234
    %v2520 = vmul.f32 %v2507, %v235
    %v2521 = vmul.f32 %v2507, %v236
    %v2522 = vmul.f32 %v2507, %v237
    %v2523 = vmul.f32 %v2507, %v238
    %v2524 = vadd.f32 %v2490, %v2508
    %v2525 = vadd.f32 %v2491, %v2509
    %v2526 = vadd.f32 %v2492, %v2510
    %v2527 = vadd.f32 %v2493, %v2511
    %v2528 = vadd.f32 %v2494, %v2512
    %v2529 = vadd.f32 %v2495, %v2513
    %v2530 = vadd.f32 %v2496, %v2514
    %v2531 = vadd.f32 %v2497, %v2515
    %v2532 = vadd.f32 %v2498, %v2516
    %v2533 = vadd.f32 %v2499, %v2517
    %v2534 = vadd.f32 %v2500, %v2518
    %v2535 = vadd.f32 %v2501, %v2519
    %v2536 = vadd.f32 %v2502, %v2520
    %v2537 = vadd.f32 %v2503, %v2521
    %v2538 = vadd.f32 %v2504, %v2522
    %v2539 = vadd.f32 %v2505, %v2523
    %s2540 = sld [smem:[#allocation2 + $0xc]]
    %v2541 = vstv %s2540
    %v2542 = vmul.f32 %v2541, %v240
    %v2543 = vmul.f32 %v2541, %v241
    %v2544 = vmul.f32 %v2541, %v242
    %v2545 = vmul.f32 %v2541, %v243
    %v2546 = vmul.f32 %v2541, %v244
    %v2547 = vmul.f32 %v2541, %v245
    %v2548 = vmul.f32 %v2541, %v246
    %v2549 = vmul.f32 %v2541, %v247
    %v2550 = vmul.f32 %v2541, %v248
    %v2551 = vmul.f32 %v2541, %v249
    %v2552 = vmul.f32 %v2541, %v250
    %v2553 = vmul.f32 %v2541, %v251
    %v2554 = vmul.f32 %v2541, %v252
    %v2555 = vmul.f32 %v2541, %v253
    %v2556 = vmul.f32 %v2541, %v254
    %v2557 = vmul.f32 %v2541, %v255
    %v2558 = vadd.f32 %v2524, %v2542
    %v2559 = vadd.f32 %v2525, %v2543
    %v2560 = vadd.f32 %v2526, %v2544
    %v2561 = vadd.f32 %v2527, %v2545
    %v2562 = vadd.f32 %v2528, %v2546
    %v2563 = vadd.f32 %v2529, %v2547
    %v2564 = vadd.f32 %v2530, %v2548
    %v2565 = vadd.f32 %v2531, %v2549
    %v2566 = vadd.f32 %v2532, %v2550
    %v2567 = vadd.f32 %v2533, %v2551
    %v2568 = vadd.f32 %v2534, %v2552
    %v2569 = vadd.f32 %v2535, %v2553
    %v2570 = vadd.f32 %v2536, %v2554
    %v2571 = vadd.f32 %v2537, %v2555
    %v2572 = vadd.f32 %v2538, %v2556
    %v2573 = vadd.f32 %v2539, %v2557
    %s2574 = sld [smem:[#allocation2 + $0xe]]
    %v2575 = vstv %s2574
    %v2576 = vmul.f32 %v2575, %v257
    %v2577 = vmul.f32 %v2575, %v258
    %v2578 = vmul.f32 %v2575, %v259
    %v2579 = vmul.f32 %v2575, %v260
    %v2580 = vmul.f32 %v2575, %v261
    %v2581 = vmul.f32 %v2575, %v262
    %v2582 = vmul.f32 %v2575, %v263
    %v2583 = vmul.f32 %v2575, %v264
    %v2584 = vmul.f32 %v2575, %v265
    %v2585 = vmul.f32 %v2575, %v266
    %v2586 = vmul.f32 %v2575, %v267
    %v2587 = vmul.f32 %v2575, %v268
    %v2588 = vmul.f32 %v2575, %v269
    %v2589 = vmul.f32 %v2575, %v270
    %v2590 = vmul.f32 %v2575, %v271
    %v2591 = vmul.f32 %v2575, %v272
    %v2592 = vadd.f32 %v2558, %v2576
    %v2593 = vadd.f32 %v2559, %v2577
    %v2594 = vadd.f32 %v2560, %v2578
    %v2595 = vadd.f32 %v2561, %v2579
    %v2596 = vadd.f32 %v2562, %v2580
    %v2597 = vadd.f32 %v2563, %v2581
    %v2598 = vadd.f32 %v2564, %v2582
    %v2599 = vadd.f32 %v2565, %v2583
    %v2600 = vadd.f32 %v2566, %v2584
    %v2601 = vadd.f32 %v2567, %v2585
    %v2602 = vadd.f32 %v2568, %v2586
    %v2603 = vadd.f32 %v2569, %v2587
    %v2604 = vadd.f32 %v2570, %v2588
    %v2605 = vadd.f32 %v2571, %v2589
    %v2606 = vadd.f32 %v2572, %v2590
    %v2607 = vadd.f32 %v2573, %v2591
    %s2608 = sld [smem:[#allocation2 + $0x9]]
    %v2609 = vstv %s2608
    %v2610 = vmul.f32 %v2609, %v206
    %v2611 = vmul.f32 %v2609, %v207
    %v2612 = vmul.f32 %v2609, %v208
    %v2613 = vmul.f32 %v2609, %v209
    %v2614 = vmul.f32 %v2609, %v210
    %v2615 = vmul.f32 %v2609, %v211
    %v2616 = vmul.f32 %v2609, %v212
    %v2617 = vmul.f32 %v2609, %v213
    %v2618 = vmul.f32 %v2609, %v214
    %v2619 = vmul.f32 %v2609, %v215
    %v2620 = vmul.f32 %v2609, %v216
    %v2621 = vmul.f32 %v2609, %v217
    %v2622 = vmul.f32 %v2609, %v218
    %v2623 = vmul.f32 %v2609, %v219
    %v2624 = vmul.f32 %v2609, %v220
    %v2625 = vmul.f32 %v2609, %v221
    %s2626 = sld [smem:[#allocation2 + $0xb]]
    %v2627 = vstv %s2626
    %v2628 = vmul.f32 %v2627, %v223
    %v2629 = vmul.f32 %v2627, %v224
    %v2630 = vmul.f32 %v2627, %v225
    %v2631 = vmul.f32 %v2627, %v226
    %v2632 = vmul.f32 %v2627, %v227
    %v2633 = vmul.f32 %v2627, %v228
    %v2634 = vmul.f32 %v2627, %v229
    %v2635 = vmul.f32 %v2627, %v230
    %v2636 = vmul.f32 %v2627, %v231
    %v2637 = vmul.f32 %v2627, %v232
    %v2638 = vmul.f32 %v2627, %v233
    %v2639 = vmul.f32 %v2627, %v234
    %v2640 = vmul.f32 %v2627, %v235
    %v2641 = vmul.f32 %v2627, %v236
    %v2642 = vmul.f32 %v2627, %v237
    %v2643 = vmul.f32 %v2627, %v238
    %v2644 = vadd.f32 %v2610, %v2628
    %v2645 = vadd.f32 %v2611, %v2629
    %v2646 = vadd.f32 %v2612, %v2630
    %v2647 = vadd.f32 %v2613, %v2631
    %v2648 = vadd.f32 %v2614, %v2632
    %v2649 = vadd.f32 %v2615, %v2633
    %v2650 = vadd.f32 %v2616, %v2634
    %v2651 = vadd.f32 %v2617, %v2635
    %v2652 = vadd.f32 %v2618, %v2636
    %v2653 = vadd.f32 %v2619, %v2637
    %v2654 = vadd.f32 %v2620, %v2638
    %v2655 = vadd.f32 %v2621, %v2639
    %v2656 = vadd.f32 %v2622, %v2640
    %v2657 = vadd.f32 %v2623, %v2641
    %v2658 = vadd.f32 %v2624, %v2642
    %v2659 = vadd.f32 %v2625, %v2643
    %s2660 = sld [smem:[#allocation2 + $0xd]]
    %v2661 = vstv %s2660
    %v2662 = vmul.f32 %v2661, %v240
    %v2663 = vmul.f32 %v2661, %v241
    %v2664 = vmul.f32 %v2661, %v242
    %v2665 = vmul.f32 %v2661, %v243
    %v2666 = vmul.f32 %v2661, %v244
    %v2667 = vmul.f32 %v2661, %v245
    %v2668 = vmul.f32 %v2661, %v246
    %v2669 = vmul.f32 %v2661, %v247
    %v2670 = vmul.f32 %v2661, %v248
    %v2671 = vmul.f32 %v2661, %v249
    %v2672 = vmul.f32 %v2661, %v250
    %v2673 = vmul.f32 %v2661, %v251
    %v2674 = vmul.f32 %v2661, %v252
    %v2675 = vmul.f32 %v2661, %v253
    %v2676 = vmul.f32 %v2661, %v254
    %v2677 = vmul.f32 %v2661, %v255
    %v2678 = vadd.f32 %v2644, %v2662
    %v2679 = vadd.f32 %v2645, %v2663
    %v2680 = vadd.f32 %v2646, %v2664
    %v2681 = vadd.f32 %v2647, %v2665
    %v2682 = vadd.f32 %v2648, %v2666
    %v2683 = vadd.f32 %v2649, %v2667
    %v2684 = vadd.f32 %v2650, %v2668
    %v2685 = vadd.f32 %v2651, %v2669
    %v2686 = vadd.f32 %v2652, %v2670
    %v2687 = vadd.f32 %v2653, %v2671
    %v2688 = vadd.f32 %v2654, %v2672
    %v2689 = vadd.f32 %v2655, %v2673
    %v2690 = vadd.f32 %v2656, %v2674
    %v2691 = vadd.f32 %v2657, %v2675
    %v2692 = vadd.f32 %v2658, %v2676
    %v2693 = vadd.f32 %v2659, %v2677
    %s2694 = sld [smem:[#allocation2 + $0xf]]
    %v2695 = vstv %s2694
    %v2696 = vmul.f32 %v2695, %v257
    %v2697 = vmul.f32 %v2695, %v258
    %v2698 = vmul.f32 %v2695, %v259
    %v2699 = vmul.f32 %v2695, %v260
    %v2700 = vmul.f32 %v2695, %v261
    %v2701 = vmul.f32 %v2695, %v262
    %v2702 = vmul.f32 %v2695, %v263
    %v2703 = vmul.f32 %v2695, %v264
    %v2704 = vmul.f32 %v2695, %v265
    %v2705 = vmul.f32 %v2695, %v266
    %v2706 = vmul.f32 %v2695, %v267
    %v2707 = vmul.f32 %v2695, %v268
    %v2708 = vmul.f32 %v2695, %v269
    %v2709 = vmul.f32 %v2695, %v270
    %v2710 = vmul.f32 %v2695, %v271
    %v2711 = vmul.f32 %v2695, %v272
    %v2712 = vadd.f32 %v2678, %v2696
    %v2713 = vadd.f32 %v2679, %v2697
    %v2714 = vadd.f32 %v2680, %v2698
    %v2715 = vadd.f32 %v2681, %v2699
    %v2716 = vadd.f32 %v2682, %v2700
    %v2717 = vadd.f32 %v2683, %v2701
    %v2718 = vadd.f32 %v2684, %v2702
    %v2719 = vadd.f32 %v2685, %v2703
    %v2720 = vadd.f32 %v2686, %v2704
    %v2721 = vadd.f32 %v2687, %v2705
    %v2722 = vadd.f32 %v2688, %v2706
    %v2723 = vadd.f32 %v2689, %v2707
    %v2724 = vadd.f32 %v2690, %v2708
    %v2725 = vadd.f32 %v2691, %v2709
    %v2726 = vadd.f32 %v2692, %v2710
    %v2727 = vadd.f32 %v2693, %v2711
    %2728 = vset.pattern.permute.xlu0 32
    %2729 = vperm.xlu0 %2728, %v2288
    %v2730 = vpop.permute.xlu0 %2729
    %2732 = vset.pattern.permute.xlu0 32
    %2733 = vperm.xlu0 %2732, %v2293
    %v2734 = vpop.permute.xlu0 %2733
    %2736 = vset.pattern.permute.xlu0 32
    %2737 = vperm.xlu0 %2736, %v2298
    %v2738 = vpop.permute.xlu0 %2737
    %2740 = vset.pattern.permute.xlu0 32
    %2741 = vperm.xlu0 %2740, %v2303
    %v2742 = vpop.permute.xlu0 %2741
    %2744 = vset.pattern.permute.xlu0 32
    %2745 = vperm.xlu0 %2744, %v2308
    %v2746 = vpop.permute.xlu0 %2745
    %2748 = vset.pattern.permute.xlu0 32
    %2749 = vperm.xlu0 %2748, %v2313
    %v2750 = vpop.permute.xlu0 %2749
    %2752 = vset.pattern.permute.xlu0 32
    %2753 = vperm.xlu0 %2752, %v2318
    %v2754 = vpop.permute.xlu0 %2753
    %2756 = vset.pattern.permute.xlu0 32
    %2757 = vperm.xlu0 %2756, %v2323
    %v2758 = vpop.permute.xlu0 %2757
    %2760 = vset.pattern.permute.xlu0 32
    %2761 = vperm.xlu0 %2760, %v2328
    %v2762 = vpop.permute.xlu0 %2761
    %2764 = vset.pattern.permute.xlu0 32
    %2765 = vperm.xlu0 %2764, %v2333
    %v2766 = vpop.permute.xlu0 %2765
    %2768 = vset.pattern.permute.xlu0 32
    %2769 = vperm.xlu0 %2768, %v2338
    %v2770 = vpop.permute.xlu0 %2769
    %2772 = vset.pattern.permute.xlu0 32
    %2773 = vperm.xlu0 %2772, %v2343
    %v2774 = vpop.permute.xlu0 %2773
    %2776 = vset.pattern.permute.xlu0 32
    %2777 = vperm.xlu0 %2776, %v2348
    %v2778 = vpop.permute.xlu0 %2777
    %2780 = vset.pattern.permute.xlu0 32
    %2781 = vperm.xlu0 %2780, %v2353
    %v2782 = vpop.permute.xlu0 %2781
    %2784 = vset.pattern.permute.xlu0 32
    %2785 = vperm.xlu0 %2784, %v2358
    %v2786 = vpop.permute.xlu0 %2785
    %2788 = vset.pattern.permute.xlu0 32
    %2789 = vperm.xlu0 %2788, %v2363
    %v2790 = vpop.permute.xlu0 %2789
    %v2792 = vadd.f32 %v2592, %v2730
    %v2793 = vadd.f32 %v2593, %v2734
    %v2794 = vadd.f32 %v2594, %v2738
    %v2795 = vadd.f32 %v2595, %v2742
    %v2796 = vadd.f32 %v2596, %v2746
    %v2797 = vadd.f32 %v2597, %v2750
    %v2798 = vadd.f32 %v2598, %v2754
    %v2799 = vadd.f32 %v2599, %v2758
    %v2800 = vadd.f32 %v2600, %v2762
    %v2801 = vadd.f32 %v2601, %v2766
    %v2802 = vadd.f32 %v2602, %v2770
    %v2803 = vadd.f32 %v2603, %v2774
    %v2804 = vadd.f32 %v2604, %v2778
    %v2805 = vadd.f32 %v2605, %v2782
    %v2806 = vadd.f32 %v2606, %v2786
    %v2807 = vadd.f32 %v2607, %v2790
    %v2808 = vlaneseq
    %v2809 = vshrl.u32 %v2808, 7
    %v2810 = vsub.s32 0, %v2809
    %v2811 = vrot.slane %v2485, %v2810
    %v2812 = vadd.f32 %v2792, %v2811
    %v2813 = vadd.f32 %v2793, %v2811
    %v2814 = vadd.f32 %v2794, %v2811
    %v2815 = vadd.f32 %v2795, %v2811
    %v2816 = vadd.f32 %v2796, %v2811
    %v2817 = vadd.f32 %v2797, %v2811
    %v2818 = vadd.f32 %v2798, %v2811
    %v2819 = vadd.f32 %v2799, %v2811
    %v2820 = vadd.f32 %v2800, %v2811
    %v2821 = vadd.f32 %v2801, %v2811
    %v2822 = vadd.f32 %v2802, %v2811
    %v2823 = vadd.f32 %v2803, %v2811
    %v2824 = vadd.f32 %v2804, %v2811
    %v2825 = vadd.f32 %v2805, %v2811
    %v2826 = vadd.f32 %v2806, %v2811
    %v2827 = vadd.f32 %v2807, %v2811
    %vm2828 = vcmp.gt.f32.partialorder %v2812, 0.0
    %vm2829 = vcmp.gt.f32.partialorder %v2813, 0.0
    %vm2830 = vcmp.gt.f32.partialorder %v2814, 0.0
    %vm2831 = vcmp.gt.f32.partialorder %v2815, 0.0
    %vm2832 = vcmp.gt.f32.partialorder %v2816, 0.0
    %vm2833 = vcmp.gt.f32.partialorder %v2817, 0.0
    %vm2834 = vcmp.gt.f32.partialorder %v2818, 0.0
    %vm2835 = vcmp.gt.f32.partialorder %v2819, 0.0
    %vm2836 = vcmp.gt.f32.partialorder %v2820, 0.0
    %vm2837 = vcmp.gt.f32.partialorder %v2821, 0.0
    %vm2838 = vcmp.gt.f32.partialorder %v2822, 0.0
    %vm2839 = vcmp.gt.f32.partialorder %v2823, 0.0
    %vm2840 = vcmp.gt.f32.partialorder %v2824, 0.0
    %vm2841 = vcmp.gt.f32.partialorder %v2825, 0.0
    %vm2842 = vcmp.gt.f32.partialorder %v2826, 0.0
    %vm2843 = vcmp.gt.f32.partialorder %v2827, 0.0
    %v2844 = vmul.f32 %v2812, 0.2
    %v2845 = vmul.f32 %v2813, 0.2
    %v2846 = vmul.f32 %v2814, 0.2
    %v2847 = vmul.f32 %v2815, 0.2
    %v2848 = vmul.f32 %v2816, 0.2
    %v2849 = vmul.f32 %v2817, 0.2
    %v2850 = vmul.f32 %v2818, 0.2
    %v2851 = vmul.f32 %v2819, 0.2
    %v2852 = vmul.f32 %v2820, 0.2
    %v2853 = vmul.f32 %v2821, 0.2
    %v2854 = vmul.f32 %v2822, 0.2
    %v2855 = vmul.f32 %v2823, 0.2
    %v2856 = vmul.f32 %v2824, 0.2
    %v2857 = vmul.f32 %v2825, 0.2
    %v2858 = vmul.f32 %v2826, 0.2
    %v2859 = vmul.f32 %v2827, 0.2
    %v2860 = vsel %vm2828, %v2812, %v2844
    %v2861 = vsel %vm2829, %v2813, %v2845
    %v2862 = vsel %vm2830, %v2814, %v2846
    %v2863 = vsel %vm2831, %v2815, %v2847
    %v2864 = vsel %vm2832, %v2816, %v2848
    %v2865 = vsel %vm2833, %v2817, %v2849
    %v2866 = vsel %vm2834, %v2818, %v2850
    %v2867 = vsel %vm2835, %v2819, %v2851
    %v2868 = vsel %vm2836, %v2820, %v2852
    %v2869 = vsel %vm2837, %v2821, %v2853
    %v2870 = vsel %vm2838, %v2822, %v2854
    %v2871 = vsel %vm2839, %v2823, %v2855
    %v2872 = vsel %vm2840, %v2824, %v2856
    %v2873 = vsel %vm2841, %v2825, %v2857
    %v2874 = vsel %vm2842, %v2826, %v2858
    %v2875 = vsel %vm2843, %v2827, %v2859
    %v2876 = vsel %vm1130, %v2860, -1e+30
    %v2877 = vsel %vm1131, %v2861, -1e+30
    %v2878 = vsel %vm1132, %v2862, -1e+30
    %v2879 = vsel %vm1133, %v2863, -1e+30
    %v2880 = vsel %vm1134, %v2864, -1e+30
    %v2881 = vsel %vm1135, %v2865, -1e+30
    %v2882 = vsel %vm1136, %v2866, -1e+30
    %v2883 = vsel %vm1137, %v2867, -1e+30
    %v2884 = vsel %vm1138, %v2868, -1e+30
    %v2885 = vsel %vm1139, %v2869, -1e+30
    %v2886 = vsel %vm1140, %v2870, -1e+30
    %v2887 = vsel %vm1141, %v2871, -1e+30
    %v2888 = vsel %vm1142, %v2872, -1e+30
    %v2889 = vsel %vm1143, %v2873, -1e+30
    %v2890 = vsel %vm1144, %v2874, -1e+30
    %v2891 = vsel %vm1145, %v2875, -1e+30
    %2892 = vmax.xlane.f32.xlu0 %v2876
    %v2893 = vpop.xlane.xlu0 %2892
    %2894 = vmax.xlane.f32.xlu0 %v2877
    %v2895 = vpop.xlane.xlu0 %2894
    %2896 = vmax.xlane.f32.xlu0 %v2878
    %v2897 = vpop.xlane.xlu0 %2896
    %2898 = vmax.xlane.f32.xlu0 %v2879
    %v2899 = vpop.xlane.xlu0 %2898
    %2900 = vmax.xlane.f32.xlu0 %v2880
    %v2901 = vpop.xlane.xlu0 %2900
    %2902 = vmax.xlane.f32.xlu0 %v2881
    %v2903 = vpop.xlane.xlu0 %2902
    %2904 = vmax.xlane.f32.xlu0 %v2882
    %v2905 = vpop.xlane.xlu0 %2904
    %2906 = vmax.xlane.f32.xlu0 %v2883
    %v2907 = vpop.xlane.xlu0 %2906
    %2908 = vmax.xlane.f32.xlu0 %v2884
    %v2909 = vpop.xlane.xlu0 %2908
    %2910 = vmax.xlane.f32.xlu0 %v2885
    %v2911 = vpop.xlane.xlu0 %2910
    %2912 = vmax.xlane.f32.xlu0 %v2886
    %v2913 = vpop.xlane.xlu0 %2912
    %2914 = vmax.xlane.f32.xlu0 %v2887
    %v2915 = vpop.xlane.xlu0 %2914
    %2916 = vmax.xlane.f32.xlu0 %v2888
    %v2917 = vpop.xlane.xlu0 %2916
    %2918 = vmax.xlane.f32.xlu0 %v2889
    %v2919 = vpop.xlane.xlu0 %2918
    %2920 = vmax.xlane.f32.xlu0 %v2890
    %v2921 = vpop.xlane.xlu0 %2920
    %2922 = vmax.xlane.f32.xlu0 %v2891
    %v2923 = vpop.xlane.xlu0 %2922
    %v2924 = vsub.f32 %v2876, %v2893
    %v2925 = vsub.f32 %v2877, %v2895
    %v2926 = vsub.f32 %v2878, %v2897
    %v2927 = vsub.f32 %v2879, %v2899
    %v2928 = vsub.f32 %v2880, %v2901
    %v2929 = vsub.f32 %v2881, %v2903
    %v2930 = vsub.f32 %v2882, %v2905
    %v2931 = vsub.f32 %v2883, %v2907
    %v2932 = vsub.f32 %v2884, %v2909
    %v2933 = vsub.f32 %v2885, %v2911
    %v2934 = vsub.f32 %v2886, %v2913
    %v2935 = vsub.f32 %v2887, %v2915
    %v2936 = vsub.f32 %v2888, %v2917
    %v2937 = vsub.f32 %v2889, %v2919
    %v2938 = vsub.f32 %v2890, %v2921
    %v2939 = vsub.f32 %v2891, %v2923
    %v2940 = vmul.f32 %v2924, 1.442695
    %v2941 = vpow.pop %v2940
    %v2942 = vmul.f32 %v2925, 1.442695
    %v2943 = vpow.pop %v2942
    %v2944 = vmul.f32 %v2926, 1.442695
    %v2945 = vpow.pop %v2944
    %v2946 = vmul.f32 %v2927, 1.442695
    %v2947 = vpow.pop %v2946
    %v2948 = vmul.f32 %v2928, 1.442695
    %v2949 = vpow.pop %v2948
    %v2950 = vmul.f32 %v2929, 1.442695
    %v2951 = vpow.pop %v2950
    %v2952 = vmul.f32 %v2930, 1.442695
    %v2953 = vpow.pop %v2952
    %v2954 = vmul.f32 %v2931, 1.442695
    %v2955 = vpow.pop %v2954
    %v2956 = vmul.f32 %v2932, 1.442695
    %v2957 = vpow.pop %v2956
    %v2958 = vmul.f32 %v2933, 1.442695
    %v2959 = vpow.pop %v2958
    %v2960 = vmul.f32 %v2934, 1.442695
    %v2961 = vpow.pop %v2960
    %v2962 = vmul.f32 %v2935, 1.442695
    %v2963 = vpow.pop %v2962
    %v2964 = vmul.f32 %v2936, 1.442695
    %v2965 = vpow.pop %v2964
    %v2966 = vmul.f32 %v2937, 1.442695
    %v2967 = vpow.pop %v2966
    %v2968 = vmul.f32 %v2938, 1.442695
    %v2969 = vpow.pop %v2968
    %v2970 = vmul.f32 %v2939, 1.442695
    %v2971 = vpow.pop %v2970
    %2972 = vadd.xlane.f32.xlu0 %v2941
    %v2973 = vpop.xlane.xlu0 %2972
    %2974 = vadd.xlane.f32.xlu0 %v2943
    %v2975 = vpop.xlane.xlu0 %2974
    %2976 = vadd.xlane.f32.xlu0 %v2945
    %v2977 = vpop.xlane.xlu0 %2976
    %2978 = vadd.xlane.f32.xlu0 %v2947
    %v2979 = vpop.xlane.xlu0 %2978
    %2980 = vadd.xlane.f32.xlu0 %v2949
    %v2981 = vpop.xlane.xlu0 %2980
    %2982 = vadd.xlane.f32.xlu0 %v2951
    %v2983 = vpop.xlane.xlu0 %2982
    %2984 = vadd.xlane.f32.xlu0 %v2953
    %v2985 = vpop.xlane.xlu0 %2984
    %2986 = vadd.xlane.f32.xlu0 %v2955
    %v2987 = vpop.xlane.xlu0 %2986
    %2988 = vadd.xlane.f32.xlu0 %v2957
    %v2989 = vpop.xlane.xlu0 %2988
    %2990 = vadd.xlane.f32.xlu0 %v2959
    %v2991 = vpop.xlane.xlu0 %2990
    %2992 = vadd.xlane.f32.xlu0 %v2961
    %v2993 = vpop.xlane.xlu0 %2992
    %2994 = vadd.xlane.f32.xlu0 %v2963
    %v2995 = vpop.xlane.xlu0 %2994
    %2996 = vadd.xlane.f32.xlu0 %v2965
    %v2997 = vpop.xlane.xlu0 %2996
    %2998 = vadd.xlane.f32.xlu0 %v2967
    %v2999 = vpop.xlane.xlu0 %2998
    %3000 = vadd.xlane.f32.xlu0 %v2969
    %v3001 = vpop.xlane.xlu0 %3000
    %3002 = vadd.xlane.f32.xlu0 %v2971
    %v3003 = vpop.xlane.xlu0 %3002
    %v3004 = vrcp.pop %v2973
    %v3005 = vrcp.pop %v2975
    %v3006 = vrcp.pop %v2977
    %v3007 = vrcp.pop %v2979
    %v3008 = vrcp.pop %v2981
    %v3009 = vrcp.pop %v2983
    %v3010 = vrcp.pop %v2985
    %v3011 = vrcp.pop %v2987
    %v3012 = vrcp.pop %v2989
    %v3013 = vrcp.pop %v2991
    %v3014 = vrcp.pop %v2993
    %v3015 = vrcp.pop %v2995
    %v3016 = vrcp.pop %v2997
    %v3017 = vrcp.pop %v2999
    %v3018 = vrcp.pop %v3001
    %v3019 = vrcp.pop %v3003
    %v3020 = vmul.f32 %v2941, %v3004
    %v3021 = vmul.f32 %v2943, %v3005
    %v3022 = vmul.f32 %v2945, %v3006
    %v3023 = vmul.f32 %v2947, %v3007
    %v3024 = vmul.f32 %v2949, %v3008
    %v3025 = vmul.f32 %v2951, %v3009
    %v3026 = vmul.f32 %v2953, %v3010
    %v3027 = vmul.f32 %v2955, %v3011
    %v3028 = vmul.f32 %v2957, %v3012
    %v3029 = vmul.f32 %v2959, %v3013
    %v3030 = vmul.f32 %v2961, %v3014
    %v3031 = vmul.f32 %v2963, %v3015
    %v3032 = vmul.f32 %v2965, %v3016
    %v3033 = vmul.f32 %v2967, %v3017
    %v3034 = vmul.f32 %v2969, %v3018
    %v3035 = vmul.f32 %v2971, %v3019
    %3036 = vset.pattern.permute.xlu0 33
    %3037 = vperm.xlu0 %3036, %v2288
    %v3038 = vpop.permute.xlu0 %3037
    %3040 = vset.pattern.permute.xlu0 33
    %3041 = vperm.xlu0 %3040, %v2293
    %v3042 = vpop.permute.xlu0 %3041
    %3044 = vset.pattern.permute.xlu0 33
    %3045 = vperm.xlu0 %3044, %v2298
    %v3046 = vpop.permute.xlu0 %3045
    %3048 = vset.pattern.permute.xlu0 33
    %3049 = vperm.xlu0 %3048, %v2303
    %v3050 = vpop.permute.xlu0 %3049
    %3052 = vset.pattern.permute.xlu0 33
    %3053 = vperm.xlu0 %3052, %v2308
    %v3054 = vpop.permute.xlu0 %3053
    %3056 = vset.pattern.permute.xlu0 33
    %3057 = vperm.xlu0 %3056, %v2313
    %v3058 = vpop.permute.xlu0 %3057
    %3060 = vset.pattern.permute.xlu0 33
    %3061 = vperm.xlu0 %3060, %v2318
    %v3062 = vpop.permute.xlu0 %3061
    %3064 = vset.pattern.permute.xlu0 33
    %3065 = vperm.xlu0 %3064, %v2323
    %v3066 = vpop.permute.xlu0 %3065
    %3068 = vset.pattern.permute.xlu0 33
    %3069 = vperm.xlu0 %3068, %v2328
    %v3070 = vpop.permute.xlu0 %3069
    %3072 = vset.pattern.permute.xlu0 33
    %3073 = vperm.xlu0 %3072, %v2333
    %v3074 = vpop.permute.xlu0 %3073
    %3076 = vset.pattern.permute.xlu0 33
    %3077 = vperm.xlu0 %3076, %v2338
    %v3078 = vpop.permute.xlu0 %3077
    %3080 = vset.pattern.permute.xlu0 33
    %3081 = vperm.xlu0 %3080, %v2343
    %v3082 = vpop.permute.xlu0 %3081
    %3084 = vset.pattern.permute.xlu0 33
    %3085 = vperm.xlu0 %3084, %v2348
    %v3086 = vpop.permute.xlu0 %3085
    %3088 = vset.pattern.permute.xlu0 33
    %3089 = vperm.xlu0 %3088, %v2353
    %v3090 = vpop.permute.xlu0 %3089
    %3092 = vset.pattern.permute.xlu0 33
    %3093 = vperm.xlu0 %3092, %v2358
    %v3094 = vpop.permute.xlu0 %3093
    %3096 = vset.pattern.permute.xlu0 33
    %3097 = vperm.xlu0 %3096, %v2363
    %v3098 = vpop.permute.xlu0 %3097
    %v3100 = vadd.f32 %v2712, %v3038
    %v3101 = vadd.f32 %v2713, %v3042
    %v3102 = vadd.f32 %v2714, %v3046
    %v3103 = vadd.f32 %v2715, %v3050
    %v3104 = vadd.f32 %v2716, %v3054
    %v3105 = vadd.f32 %v2717, %v3058
    %v3106 = vadd.f32 %v2718, %v3062
    %v3107 = vadd.f32 %v2719, %v3066
    %v3108 = vadd.f32 %v2720, %v3070
    %v3109 = vadd.f32 %v2721, %v3074
    %v3110 = vadd.f32 %v2722, %v3078
    %v3111 = vadd.f32 %v2723, %v3082
    %v3112 = vadd.f32 %v2724, %v3086
    %v3113 = vadd.f32 %v2725, %v3090
    %v3114 = vadd.f32 %v2726, %v3094
    %v3115 = vadd.f32 %v2727, %v3098
    %v3116 = vlaneseq
    %v3117 = vshrl.u32 %v3116, 7
    %v3118 = vsub.s32 1, %v3117
    %v3119 = vrot.slane %v2485, %v3118
    %v3120 = vadd.f32 %v3100, %v3119
    %v3121 = vadd.f32 %v3101, %v3119
    %v3122 = vadd.f32 %v3102, %v3119
    %v3123 = vadd.f32 %v3103, %v3119
    %v3124 = vadd.f32 %v3104, %v3119
    %v3125 = vadd.f32 %v3105, %v3119
    %v3126 = vadd.f32 %v3106, %v3119
    %v3127 = vadd.f32 %v3107, %v3119
    %v3128 = vadd.f32 %v3108, %v3119
    %v3129 = vadd.f32 %v3109, %v3119
    %v3130 = vadd.f32 %v3110, %v3119
    %v3131 = vadd.f32 %v3111, %v3119
    %v3132 = vadd.f32 %v3112, %v3119
    %v3133 = vadd.f32 %v3113, %v3119
    %v3134 = vadd.f32 %v3114, %v3119
    %v3135 = vadd.f32 %v3115, %v3119
    %vm3136 = vcmp.gt.f32.partialorder %v3120, 0.0
    %vm3137 = vcmp.gt.f32.partialorder %v3121, 0.0
    %vm3138 = vcmp.gt.f32.partialorder %v3122, 0.0
    %vm3139 = vcmp.gt.f32.partialorder %v3123, 0.0
    %vm3140 = vcmp.gt.f32.partialorder %v3124, 0.0
    %vm3141 = vcmp.gt.f32.partialorder %v3125, 0.0
    %vm3142 = vcmp.gt.f32.partialorder %v3126, 0.0
    %vm3143 = vcmp.gt.f32.partialorder %v3127, 0.0
    %vm3144 = vcmp.gt.f32.partialorder %v3128, 0.0
    %vm3145 = vcmp.gt.f32.partialorder %v3129, 0.0
    %vm3146 = vcmp.gt.f32.partialorder %v3130, 0.0
    %vm3147 = vcmp.gt.f32.partialorder %v3131, 0.0
    %vm3148 = vcmp.gt.f32.partialorder %v3132, 0.0
    %vm3149 = vcmp.gt.f32.partialorder %v3133, 0.0
    %vm3150 = vcmp.gt.f32.partialorder %v3134, 0.0
    %vm3151 = vcmp.gt.f32.partialorder %v3135, 0.0
    %v3152 = vmul.f32 %v3120, 0.2
    %v3153 = vmul.f32 %v3121, 0.2
    %v3154 = vmul.f32 %v3122, 0.2
    %v3155 = vmul.f32 %v3123, 0.2
    %v3156 = vmul.f32 %v3124, 0.2
    %v3157 = vmul.f32 %v3125, 0.2
    %v3158 = vmul.f32 %v3126, 0.2
    %v3159 = vmul.f32 %v3127, 0.2
    %v3160 = vmul.f32 %v3128, 0.2
    %v3161 = vmul.f32 %v3129, 0.2
    %v3162 = vmul.f32 %v3130, 0.2
    %v3163 = vmul.f32 %v3131, 0.2
    %v3164 = vmul.f32 %v3132, 0.2
    %v3165 = vmul.f32 %v3133, 0.2
    %v3166 = vmul.f32 %v3134, 0.2
    %v3167 = vmul.f32 %v3135, 0.2
    %v3168 = vsel %vm3136, %v3120, %v3152
    %v3169 = vsel %vm3137, %v3121, %v3153
    %v3170 = vsel %vm3138, %v3122, %v3154
    %v3171 = vsel %vm3139, %v3123, %v3155
    %v3172 = vsel %vm3140, %v3124, %v3156
    %v3173 = vsel %vm3141, %v3125, %v3157
    %v3174 = vsel %vm3142, %v3126, %v3158
    %v3175 = vsel %vm3143, %v3127, %v3159
    %v3176 = vsel %vm3144, %v3128, %v3160
    %v3177 = vsel %vm3145, %v3129, %v3161
    %v3178 = vsel %vm3146, %v3130, %v3162
    %v3179 = vsel %vm3147, %v3131, %v3163
    %v3180 = vsel %vm3148, %v3132, %v3164
    %v3181 = vsel %vm3149, %v3133, %v3165
    %v3182 = vsel %vm3150, %v3134, %v3166
    %v3183 = vsel %vm3151, %v3135, %v3167
    %v3184 = vsel %vm1130, %v3168, -1e+30
    %v3185 = vsel %vm1131, %v3169, -1e+30
    %v3186 = vsel %vm1132, %v3170, -1e+30
    %v3187 = vsel %vm1133, %v3171, -1e+30
    %v3188 = vsel %vm1134, %v3172, -1e+30
    %v3189 = vsel %vm1135, %v3173, -1e+30
    %v3190 = vsel %vm1136, %v3174, -1e+30
    %v3191 = vsel %vm1137, %v3175, -1e+30
    %v3192 = vsel %vm1138, %v3176, -1e+30
    %v3193 = vsel %vm1139, %v3177, -1e+30
    %v3194 = vsel %vm1140, %v3178, -1e+30
    %v3195 = vsel %vm1141, %v3179, -1e+30
    %v3196 = vsel %vm1142, %v3180, -1e+30
    %v3197 = vsel %vm1143, %v3181, -1e+30
    %v3198 = vsel %vm1144, %v3182, -1e+30
    %v3199 = vsel %vm1145, %v3183, -1e+30
    %3200 = vmax.xlane.f32.xlu0 %v3184
    %v3201 = vpop.xlane.xlu0 %3200
    %3202 = vmax.xlane.f32.xlu0 %v3185
    %v3203 = vpop.xlane.xlu0 %3202
    %3204 = vmax.xlane.f32.xlu0 %v3186
    %v3205 = vpop.xlane.xlu0 %3204
    %3206 = vmax.xlane.f32.xlu0 %v3187
    %v3207 = vpop.xlane.xlu0 %3206
    %3208 = vmax.xlane.f32.xlu0 %v3188
    %v3209 = vpop.xlane.xlu0 %3208
    %3210 = vmax.xlane.f32.xlu0 %v3189
    %v3211 = vpop.xlane.xlu0 %3210
    %3212 = vmax.xlane.f32.xlu0 %v3190
    %v3213 = vpop.xlane.xlu0 %3212
    %3214 = vmax.xlane.f32.xlu0 %v3191
    %v3215 = vpop.xlane.xlu0 %3214
    %3216 = vmax.xlane.f32.xlu0 %v3192
    %v3217 = vpop.xlane.xlu0 %3216
    %3218 = vmax.xlane.f32.xlu0 %v3193
    %v3219 = vpop.xlane.xlu0 %3218
    %3220 = vmax.xlane.f32.xlu0 %v3194
    %v3221 = vpop.xlane.xlu0 %3220
    %3222 = vmax.xlane.f32.xlu0 %v3195
    %v3223 = vpop.xlane.xlu0 %3222
    %3224 = vmax.xlane.f32.xlu0 %v3196
    %v3225 = vpop.xlane.xlu0 %3224
    %3226 = vmax.xlane.f32.xlu0 %v3197
    %v3227 = vpop.xlane.xlu0 %3226
    %3228 = vmax.xlane.f32.xlu0 %v3198
    %v3229 = vpop.xlane.xlu0 %3228
    %3230 = vmax.xlane.f32.xlu0 %v3199
    %v3231 = vpop.xlane.xlu0 %3230
    %v3232 = vsub.f32 %v3184, %v3201
    %v3233 = vsub.f32 %v3185, %v3203
    %v3234 = vsub.f32 %v3186, %v3205
    %v3235 = vsub.f32 %v3187, %v3207
    %v3236 = vsub.f32 %v3188, %v3209
    %v3237 = vsub.f32 %v3189, %v3211
    %v3238 = vsub.f32 %v3190, %v3213
    %v3239 = vsub.f32 %v3191, %v3215
    %v3240 = vsub.f32 %v3192, %v3217
    %v3241 = vsub.f32 %v3193, %v3219
    %v3242 = vsub.f32 %v3194, %v3221
    %v3243 = vsub.f32 %v3195, %v3223
    %v3244 = vsub.f32 %v3196, %v3225
    %v3245 = vsub.f32 %v3197, %v3227
    %v3246 = vsub.f32 %v3198, %v3229
    %v3247 = vsub.f32 %v3199, %v3231
    %v3248 = vmul.f32 %v3232, 1.442695
    %v3249 = vpow.pop %v3248
    %v3250 = vmul.f32 %v3233, 1.442695
    %v3251 = vpow.pop %v3250
    %v3252 = vmul.f32 %v3234, 1.442695
    %v3253 = vpow.pop %v3252
    %v3254 = vmul.f32 %v3235, 1.442695
    %v3255 = vpow.pop %v3254
    %v3256 = vmul.f32 %v3236, 1.442695
    %v3257 = vpow.pop %v3256
    %v3258 = vmul.f32 %v3237, 1.442695
    %v3259 = vpow.pop %v3258
    %v3260 = vmul.f32 %v3238, 1.442695
    %v3261 = vpow.pop %v3260
    %v3262 = vmul.f32 %v3239, 1.442695
    %v3263 = vpow.pop %v3262
    %v3264 = vmul.f32 %v3240, 1.442695
    %v3265 = vpow.pop %v3264
    %v3266 = vmul.f32 %v3241, 1.442695
    %v3267 = vpow.pop %v3266
    %v3268 = vmul.f32 %v3242, 1.442695
    %v3269 = vpow.pop %v3268
    %v3270 = vmul.f32 %v3243, 1.442695
    %v3271 = vpow.pop %v3270
    %v3272 = vmul.f32 %v3244, 1.442695
    %v3273 = vpow.pop %v3272
    %v3274 = vmul.f32 %v3245, 1.442695
    %v3275 = vpow.pop %v3274
    %v3276 = vmul.f32 %v3246, 1.442695
    %v3277 = vpow.pop %v3276
    %v3278 = vmul.f32 %v3247, 1.442695
    %v3279 = vpow.pop %v3278
    %3280 = vadd.xlane.f32.xlu0 %v3249
    %v3281 = vpop.xlane.xlu0 %3280
    %3282 = vadd.xlane.f32.xlu0 %v3251
    %v3283 = vpop.xlane.xlu0 %3282
    %3284 = vadd.xlane.f32.xlu0 %v3253
    %v3285 = vpop.xlane.xlu0 %3284
    %3286 = vadd.xlane.f32.xlu0 %v3255
    %v3287 = vpop.xlane.xlu0 %3286
    %3288 = vadd.xlane.f32.xlu0 %v3257
    %v3289 = vpop.xlane.xlu0 %3288
    %3290 = vadd.xlane.f32.xlu0 %v3259
    %v3291 = vpop.xlane.xlu0 %3290
    %3292 = vadd.xlane.f32.xlu0 %v3261
    %v3293 = vpop.xlane.xlu0 %3292
    %3294 = vadd.xlane.f32.xlu0 %v3263
    %v3295 = vpop.xlane.xlu0 %3294
    %3296 = vadd.xlane.f32.xlu0 %v3265
    %v3297 = vpop.xlane.xlu0 %3296
    %3298 = vadd.xlane.f32.xlu0 %v3267
    %v3299 = vpop.xlane.xlu0 %3298
    %3300 = vadd.xlane.f32.xlu0 %v3269
    %v3301 = vpop.xlane.xlu0 %3300
    %3302 = vadd.xlane.f32.xlu0 %v3271
    %v3303 = vpop.xlane.xlu0 %3302
    %3304 = vadd.xlane.f32.xlu0 %v3273
    %v3305 = vpop.xlane.xlu0 %3304
    %3306 = vadd.xlane.f32.xlu0 %v3275
    %v3307 = vpop.xlane.xlu0 %3306
    %3308 = vadd.xlane.f32.xlu0 %v3277
    %v3309 = vpop.xlane.xlu0 %3308
    %3310 = vadd.xlane.f32.xlu0 %v3279
    %v3311 = vpop.xlane.xlu0 %3310
    %v3312 = vrcp.pop %v3281
    %v3313 = vrcp.pop %v3283
    %v3314 = vrcp.pop %v3285
    %v3315 = vrcp.pop %v3287
    %v3316 = vrcp.pop %v3289
    %v3317 = vrcp.pop %v3291
    %v3318 = vrcp.pop %v3293
    %v3319 = vrcp.pop %v3295
    %v3320 = vrcp.pop %v3297
    %v3321 = vrcp.pop %v3299
    %v3322 = vrcp.pop %v3301
    %v3323 = vrcp.pop %v3303
    %v3324 = vrcp.pop %v3305
    %v3325 = vrcp.pop %v3307
    %v3326 = vrcp.pop %v3309
    %v3327 = vrcp.pop %v3311
    %v3328 = vmul.f32 %v3249, %v3312
    %v3329 = vmul.f32 %v3251, %v3313
    %v3330 = vmul.f32 %v3253, %v3314
    %v3331 = vmul.f32 %v3255, %v3315
    %v3332 = vmul.f32 %v3257, %v3316
    %v3333 = vmul.f32 %v3259, %v3317
    %v3334 = vmul.f32 %v3261, %v3318
    %v3335 = vmul.f32 %v3263, %v3319
    %v3336 = vmul.f32 %v3265, %v3320
    %v3337 = vmul.f32 %v3267, %v3321
    %v3338 = vmul.f32 %v3269, %v3322
    %v3339 = vmul.f32 %v3271, %v3323
    %v3340 = vmul.f32 %v3273, %v3324
    %v3341 = vmul.f32 %v3275, %v3325
    %v3342 = vmul.f32 %v3277, %v3326
    %v3343 = vmul.f32 %v3279, %v3327
    %3344 = vrot.lane.b32.xlu0 %v2288, 112
    %v3345 = vpop.permute.xlu0 %3344
    %3346 = vrot.lane.b32.xlu0 %v2293, 112
    %v3347 = vpop.permute.xlu0 %3346
    %3348 = vrot.lane.b32.xlu0 %v2298, 112
    %v3349 = vpop.permute.xlu0 %3348
    %3350 = vrot.lane.b32.xlu0 %v2303, 112
    %v3351 = vpop.permute.xlu0 %3350
    %3352 = vrot.lane.b32.xlu0 %v2308, 112
    %v3353 = vpop.permute.xlu0 %3352
    %3354 = vrot.lane.b32.xlu0 %v2313, 112
    %v3355 = vpop.permute.xlu0 %3354
    %3356 = vrot.lane.b32.xlu0 %v2318, 112
    %v3357 = vpop.permute.xlu0 %3356
    %3358 = vrot.lane.b32.xlu0 %v2323, 112
    %v3359 = vpop.permute.xlu0 %3358
    %3360 = vrot.lane.b32.xlu0 %v2328, 112
    %v3361 = vpop.permute.xlu0 %3360
    %3362 = vrot.lane.b32.xlu0 %v2333, 112
    %v3363 = vpop.permute.xlu0 %3362
    %3364 = vrot.lane.b32.xlu0 %v2338, 112
    %v3365 = vpop.permute.xlu0 %3364
    %3366 = vrot.lane.b32.xlu0 %v2343, 112
    %v3367 = vpop.permute.xlu0 %3366
    %3368 = vrot.lane.b32.xlu0 %v2348, 112
    %v3369 = vpop.permute.xlu0 %3368
    %3370 = vrot.lane.b32.xlu0 %v2353, 112
    %v3371 = vpop.permute.xlu0 %3370
    %3372 = vrot.lane.b32.xlu0 %v2358, 112
    %v3373 = vpop.permute.xlu0 %3372
    %3374 = vrot.lane.b32.xlu0 %v2363, 112
    %v3375 = vpop.permute.xlu0 %3374
    %3392 = vmatprep.subr.mxu0 0.0
    %3393 = vmatpush1.msra.mxu0 %v3345
    %3394 = vmatprep.subr.mxu0 0.0
    %3395 = vmatpush1.msra.mxu0 %v3347
    %3396 = vmatprep.subr.mxu0 0.0
    %3397 = vmatpush1.msra.mxu0 %v3349
    %3398 = vmatprep.subr.mxu0 0.0
    %3399 = vmatpush1.msra.mxu0 %v3351
    %3400 = vmatprep.subr.mxu0 0.0
    %3401 = vmatpush1.msra.mxu0 %v3353
    %3402 = vmatprep.subr.mxu0 0.0
    %3403 = vmatpush1.msra.mxu0 %v3355
    %3404 = vmatprep.subr.mxu0 0.0
    %3405 = vmatpush1.msra.mxu0 %v3357
    %3406 = vmatprep.subr.mxu0 0.0
    %3407 = vmatpush1.msra.mxu0 %v3359
    %3408 = vmatprep.subr.mxu0 0.0
    %3409 = vmatpush1.msra.mxu0 %v3361
    %3410 = vmatprep.subr.mxu0 0.0
    %3411 = vmatpush1.msra.mxu0 %v3363
    %3412 = vmatprep.subr.mxu0 0.0
    %3413 = vmatpush1.msra.mxu0 %v3365
    %3414 = vmatprep.subr.mxu0 0.0
    %3415 = vmatpush1.msra.mxu0 %v3367
    %3416 = vmatprep.subr.mxu0 0.0
    %3417 = vmatpush1.msra.mxu0 %v3369
    %3418 = vmatprep.subr.mxu0 0.0
    %3419 = vmatpush1.msra.mxu0 %v3371
    %3420 = vmatprep.subr.mxu0 0.0
    %3421 = vmatpush1.msra.mxu0 %v3373
    %3422 = vmatprep.subr.mxu0 0.0
    %3423 = vmatpush1.msra.mxu0 %v3375
    %3424 = vmatprep.subr.mxu0 0.0
    %3425 = vmatpush1.msra.mxu0 0.0
    %3426 = vmatprep.subr.mxu0 0.0
    %3427 = vmatpush1.msra.mxu0 0.0
    %3428 = vmatprep.subr.mxu0 0.0
    %3429 = vmatpush1.msra.mxu0 0.0
    %3430 = vmatprep.subr.mxu0 0.0
    %3431 = vmatpush1.msra.mxu0 0.0
    %3432 = vmatprep.subr.mxu0 0.0
    %3433 = vmatpush1.msra.mxu0 0.0
    %3434 = vmatprep.subr.mxu0 0.0
    %3435 = vmatpush1.msra.mxu0 0.0
    %3436 = vmatprep.subr.mxu0 0.0
    %3437 = vmatpush1.msra.mxu0 0.0
    %3438 = vmatprep.subr.mxu0 0.0
    %3439 = vmatpush1.msra.mxu0 0.0
    %3440 = vmatprep.subr.mxu0 0.0
    %3441 = vmatpush1.msra.mxu0 0.0
    %3442 = vmatprep.subr.mxu0 0.0
    %3443 = vmatpush1.msra.mxu0 0.0
    %3444 = vmatprep.subr.mxu0 0.0
    %3445 = vmatpush1.msra.mxu0 0.0
    %3446 = vmatprep.subr.mxu0 0.0
    %3447 = vmatpush1.msra.mxu0 0.0
    %3448 = vmatprep.subr.mxu0 0.0
    %3449 = vmatpush1.msra.mxu0 0.0
    %3450 = vmatprep.subr.mxu0 0.0
    %3451 = vmatpush1.msra.mxu0 0.0
    %3452 = vmatprep.subr.mxu0 0.0
    %3453 = vmatpush1.msra.mxu0 0.0
    %3454 = vmatprep.subr.mxu0 0.0
    %3455 = vmatpush1.msra.mxu0 0.0
    %3456 = vmatprep.mubr.f32.mxu0 0.0
    %3457 = vmatmul.mubr.f32.gmra.mrb[0].mxu0 %v3328
    %v3458 = vpop.f32.mrb[0].mxu0
    %v3459 = vadd.f32 0.0, %v3458
    %v3460 = vpop.f32.mrb[0].mxu0
    %3461 = vmatprep.mubr.f32.mxu0 0.0
    %3462 = vmatmul.mubr.f32.gmra.mrb[0].mxu0 %v3329
    %v3463 = vpop.f32.mrb[0].mxu0
    %v3464 = vadd.f32 0.0, %v3463
    %v3465 = vpop.f32.mrb[0].mxu0
    %3466 = vmatprep.mubr.f32.mxu0 0.0
    %3467 = vmatmul.mubr.f32.gmra.mrb[0].mxu0 %v3330
    %v3468 = vpop.f32.mrb[0].mxu0
    %v3469 = vadd.f32 0.0, %v3468
    %v3470 = vpop.f32.mrb[0].mxu0
    %3471 = vmatprep.mubr.f32.mxu0 0.0
    %3472 = vmatmul.mubr.f32.gmra.mrb[0].mxu0 %v3331
    %v3473 = vpop.f32.mrb[0].mxu0
    %v3474 = vadd.f32 0.0, %v3473
    %v3475 = vpop.f32.mrb[0].mxu0
    %3476 = vmatprep.mubr.f32.mxu0 0.0
    %3477 = vmatmul.mubr.f32.gmra.mrb[0].mxu0 %v3332
    %v3478 = vpop.f32.mrb[0].mxu0
    %v3479 = vadd.f32 0.0, %v3478
    %v3480 = vpop.f32.mrb[0].mxu0
    %3481 = vmatprep.mubr.f32.mxu0 0.0
    %3482 = vmatmul.mubr.f32.gmra.mrb[0].mxu0 %v3333
    %v3483 = vpop.f32.mrb[0].mxu0
    %v3484 = vadd.f32 0.0, %v3483
    %v3485 = vpop.f32.mrb[0].mxu0
    %3486 = vmatprep.mubr.f32.mxu0 0.0
    %3487 = vmatmul.mubr.f32.gmra.mrb[0].mxu0 %v3334
    %v3488 = vpop.f32.mrb[0].mxu0
    %v3489 = vadd.f32 0.0, %v3488
    %v3490 = vpop.f32.mrb[0].mxu0
    %3491 = vmatprep.mubr.f32.mxu0 0.0
    %3492 = vmatmul.mubr.f32.gmra.mrb[0].mxu0 %v3335
    %v3493 = vpop.f32.mrb[0].mxu0
    %v3494 = vadd.f32 0.0, %v3493
    %v3495 = vpop.f32.mrb[0].mxu0
    %3496 = vmatprep.mubr.f32.mxu0 0.0
    %3497 = vmatmul.mubr.f32.gmra.mrb[0].mxu0 %v3336
    %v3498 = vpop.f32.mrb[0].mxu0
    %v3499 = vadd.f32 0.0, %v3498
    %v3500 = vpop.f32.mrb[0].mxu0
    %3501 = vmatprep.mubr.f32.mxu0 0.0
    %3502 = vmatmul.mubr.f32.gmra.mrb[0].mxu0 %v3337
    %v3503 = vpop.f32.mrb[0].mxu0
    %v3504 = vadd.f32 0.0, %v3503
    %v3505 = vpop.f32.mrb[0].mxu0
    %3506 = vmatprep.mubr.f32.mxu0 0.0
    %3507 = vmatmul.mubr.f32.gmra.mrb[0].mxu0 %v3338
    %v3508 = vpop.f32.mrb[0].mxu0
    %v3509 = vadd.f32 0.0, %v3508
    %v3510 = vpop.f32.mrb[0].mxu0
    %3511 = vmatprep.mubr.f32.mxu0 0.0
    %3512 = vmatmul.mubr.f32.gmra.mrb[0].mxu0 %v3339
    %v3513 = vpop.f32.mrb[0].mxu0
    %v3514 = vadd.f32 0.0, %v3513
    %v3515 = vpop.f32.mrb[0].mxu0
    %3516 = vmatprep.mubr.f32.mxu0 0.0
    %3517 = vmatmul.mubr.f32.gmra.mrb[0].mxu0 %v3340
    %v3518 = vpop.f32.mrb[0].mxu0
    %v3519 = vadd.f32 0.0, %v3518
    %v3520 = vpop.f32.mrb[0].mxu0
    %3521 = vmatprep.mubr.f32.mxu0 0.0
    %3522 = vmatmul.mubr.f32.gmra.mrb[0].mxu0 %v3341
    %v3523 = vpop.f32.mrb[0].mxu0
    %v3524 = vadd.f32 0.0, %v3523
    %v3525 = vpop.f32.mrb[0].mxu0
    %3526 = vmatprep.mubr.f32.mxu0 0.0
    %3527 = vmatmul.mubr.f32.gmra.mrb[0].mxu0 %v3342
    %v3528 = vpop.f32.mrb[0].mxu0
    %v3529 = vadd.f32 0.0, %v3528
    %v3530 = vpop.f32.mrb[0].mxu0
    %3531 = vmatprep.mubr.f32.mxu0 0.0
    %3532 = vmatmul.mubr.f32.gmra.mrb[0].mxu0 %v3343
    %v3533 = vpop.f32.mrb[0].mxu0
    %v3534 = vadd.f32 0.0, %v3533
    %v3535 = vpop.f32.mrb[0].mxu0
    %3536 = vdwg.mxu0
    %3537 = vmatprep.subr.mxu0 0.0
    %3538 = vmatpush1.msra.mxu0 %v2288
    %3539 = vmatprep.subr.mxu0 0.0
    %3540 = vmatpush1.msra.mxu0 %v2293
    %3541 = vmatprep.subr.mxu0 0.0
    %3542 = vmatpush1.msra.mxu0 %v2298
    %3543 = vmatprep.subr.mxu0 0.0
    %3544 = vmatpush1.msra.mxu0 %v2303
    %3545 = vmatprep.subr.mxu0 0.0
    %3546 = vmatpush1.msra.mxu0 %v2308
    %3547 = vmatprep.subr.mxu0 0.0
    %3548 = vmatpush1.msra.mxu0 %v2313
    %3549 = vmatprep.subr.mxu0 0.0
    %3550 = vmatpush1.msra.mxu0 %v2318
    %3551 = vmatprep.subr.mxu0 0.0
    %3552 = vmatpush1.msra.mxu0 %v2323
    %3553 = vmatprep.subr.mxu0 0.0
    %3554 = vmatpush1.msra.mxu0 %v2328
    %3555 = vmatprep.subr.mxu0 0.0
    %3556 = vmatpush1.msra.mxu0 %v2333
    %3557 = vmatprep.subr.mxu0 0.0
    %3558 = vmatpush1.msra.mxu0 %v2338
    %3559 = vmatprep.subr.mxu0 0.0
    %3560 = vmatpush1.msra.mxu0 %v2343
    %3561 = vmatprep.subr.mxu0 0.0
    %3562 = vmatpush1.msra.mxu0 %v2348
    %3563 = vmatprep.subr.mxu0 0.0
    %3564 = vmatpush1.msra.mxu0 %v2353
    %3565 = vmatprep.subr.mxu0 0.0
    %3566 = vmatpush1.msra.mxu0 %v2358
    %3567 = vmatprep.subr.mxu0 0.0
    %3568 = vmatpush1.msra.mxu0 %v2363
    %3569 = vmatprep.subr.mxu0 0.0
    %3570 = vmatpush1.msra.mxu0 0.0
    %3571 = vmatprep.subr.mxu0 0.0
    %3572 = vmatpush1.msra.mxu0 0.0
    %3573 = vmatprep.subr.mxu0 0.0
    %3574 = vmatpush1.msra.mxu0 0.0
    %3575 = vmatprep.subr.mxu0 0.0
    %3576 = vmatpush1.msra.mxu0 0.0
    %3577 = vmatprep.subr.mxu0 0.0
    %3578 = vmatpush1.msra.mxu0 0.0
    %3579 = vmatprep.subr.mxu0 0.0
    %3580 = vmatpush1.msra.mxu0 0.0
    %3581 = vmatprep.subr.mxu0 0.0
    %3582 = vmatpush1.msra.mxu0 0.0
    %3583 = vmatprep.subr.mxu0 0.0
    %3584 = vmatpush1.msra.mxu0 0.0
    %3585 = vmatprep.subr.mxu0 0.0
    %3586 = vmatpush1.msra.mxu0 0.0
    %3587 = vmatprep.subr.mxu0 0.0
    %3588 = vmatpush1.msra.mxu0 0.0
    %3589 = vmatprep.subr.mxu0 0.0
    %3590 = vmatpush1.msra.mxu0 0.0
    %3591 = vmatprep.subr.mxu0 0.0
    %3592 = vmatpush1.msra.mxu0 0.0
    %3593 = vmatprep.subr.mxu0 0.0
    %3594 = vmatpush1.msra.mxu0 0.0
    %3595 = vmatprep.subr.mxu0 0.0
    %3596 = vmatpush1.msra.mxu0 0.0
    %3597 = vmatprep.subr.mxu0 0.0
    %3598 = vmatpush1.msra.mxu0 0.0
    %3599 = vmatprep.subr.mxu0 0.0
    %3600 = vmatpush1.msra.mxu0 0.0
    %3601 = vmatprep.mubr.f32.mxu0 0.0
    %3602 = vmatmul.mubr.f32.gmra.mrb[0].mxu0 %v3020
    %v3603 = vpop.f32.mrb[0].mxu0
    %v3604 = vadd.f32 %v3459, %v3603
    %v3605 = vpop.f32.mrb[0].mxu0
    %3606 = vmatprep.mubr.f32.mxu0 0.0
    %3607 = vmatmul.mubr.f32.gmra.mrb[0].mxu0 %v3021
    %v3608 = vpop.f32.mrb[0].mxu0
    %v3609 = vadd.f32 %v3464, %v3608
    %v3610 = vpop.f32.mrb[0].mxu0
    %3611 = vmatprep.mubr.f32.mxu0 0.0
    %3612 = vmatmul.mubr.f32.gmra.mrb[0].mxu0 %v3022
    %v3613 = vpop.f32.mrb[0].mxu0
    %v3614 = vadd.f32 %v3469, %v3613
    %v3615 = vpop.f32.mrb[0].mxu0
    %3616 = vmatprep.mubr.f32.mxu0 0.0
    %3617 = vmatmul.mubr.f32.gmra.mrb[0].mxu0 %v3023
    %v3618 = vpop.f32.mrb[0].mxu0
    %v3619 = vadd.f32 %v3474, %v3618
    %v3620 = vpop.f32.mrb[0].mxu0
    %3621 = vmatprep.mubr.f32.mxu0 0.0
    %3622 = vmatmul.mubr.f32.gmra.mrb[0].mxu0 %v3024
    %v3623 = vpop.f32.mrb[0].mxu0
    %v3624 = vadd.f32 %v3479, %v3623
    %v3625 = vpop.f32.mrb[0].mxu0
    %3626 = vmatprep.mubr.f32.mxu0 0.0
    %3627 = vmatmul.mubr.f32.gmra.mrb[0].mxu0 %v3025
    %v3628 = vpop.f32.mrb[0].mxu0
    %v3629 = vadd.f32 %v3484, %v3628
    %v3630 = vpop.f32.mrb[0].mxu0
    %3631 = vmatprep.mubr.f32.mxu0 0.0
    %3632 = vmatmul.mubr.f32.gmra.mrb[0].mxu0 %v3026
    %v3633 = vpop.f32.mrb[0].mxu0
    %v3634 = vadd.f32 %v3489, %v3633
    %v3635 = vpop.f32.mrb[0].mxu0
    %3636 = vmatprep.mubr.f32.mxu0 0.0
    %3637 = vmatmul.mubr.f32.gmra.mrb[0].mxu0 %v3027
    %v3638 = vpop.f32.mrb[0].mxu0
    %v3639 = vadd.f32 %v3494, %v3638
    %v3640 = vpop.f32.mrb[0].mxu0
    %3641 = vmatprep.mubr.f32.mxu0 0.0
    %3642 = vmatmul.mubr.f32.gmra.mrb[0].mxu0 %v3028
    %v3643 = vpop.f32.mrb[0].mxu0
    %v3644 = vadd.f32 %v3499, %v3643
    %v3645 = vpop.f32.mrb[0].mxu0
    %3646 = vmatprep.mubr.f32.mxu0 0.0
    %3647 = vmatmul.mubr.f32.gmra.mrb[0].mxu0 %v3029
    %v3648 = vpop.f32.mrb[0].mxu0
    %v3649 = vadd.f32 %v3504, %v3648
    %v3650 = vpop.f32.mrb[0].mxu0
    %3651 = vmatprep.mubr.f32.mxu0 0.0
    %3652 = vmatmul.mubr.f32.gmra.mrb[0].mxu0 %v3030
    %v3653 = vpop.f32.mrb[0].mxu0
    %v3654 = vadd.f32 %v3509, %v3653
    %v3655 = vpop.f32.mrb[0].mxu0
    %3656 = vmatprep.mubr.f32.mxu0 0.0
    %3657 = vmatmul.mubr.f32.gmra.mrb[0].mxu0 %v3031
    %v3658 = vpop.f32.mrb[0].mxu0
    %v3659 = vadd.f32 %v3514, %v3658
    %v3660 = vpop.f32.mrb[0].mxu0
    %3661 = vmatprep.mubr.f32.mxu0 0.0
    %3662 = vmatmul.mubr.f32.gmra.mrb[0].mxu0 %v3032
    %v3663 = vpop.f32.mrb[0].mxu0
    %v3664 = vadd.f32 %v3519, %v3663
    %v3665 = vpop.f32.mrb[0].mxu0
    %3666 = vmatprep.mubr.f32.mxu0 0.0
    %3667 = vmatmul.mubr.f32.gmra.mrb[0].mxu0 %v3033
    %v3668 = vpop.f32.mrb[0].mxu0
    %v3669 = vadd.f32 %v3524, %v3668
    %v3670 = vpop.f32.mrb[0].mxu0
    %3671 = vmatprep.mubr.f32.mxu0 0.0
    %3672 = vmatmul.mubr.f32.gmra.mrb[0].mxu0 %v3034
    %v3673 = vpop.f32.mrb[0].mxu0
    %v3674 = vadd.f32 %v3529, %v3673
    %v3675 = vpop.f32.mrb[0].mxu0
    %3676 = vmatprep.mubr.f32.mxu0 0.0
    %3677 = vmatmul.mubr.f32.gmra.mrb[0].mxu0 %v3035
    %v3678 = vpop.f32.mrb[0].mxu0
    %v3679 = vadd.f32 %v3534, %v3678
    %v3680 = vpop.f32.mrb[0].mxu0
    %3681 = vdwg.mxu0
    %v3682 = vmul.f32 %v3604, 0.5
    %v3683 = vmul.f32 %v3609, 0.5
    %v3684 = vmul.f32 %v3614, 0.5
    %v3685 = vmul.f32 %v3619, 0.5
    %v3686 = vmul.f32 %v3624, 0.5
    %v3687 = vmul.f32 %v3629, 0.5
    %v3688 = vmul.f32 %v3634, 0.5
    %v3689 = vmul.f32 %v3639, 0.5
    %v3690 = vmul.f32 %v3644, 0.5
    %v3691 = vmul.f32 %v3649, 0.5
    %v3692 = vmul.f32 %v3654, 0.5
    %v3693 = vmul.f32 %v3659, 0.5
    %v3694 = vmul.f32 %v3664, 0.5
    %v3695 = vmul.f32 %v3669, 0.5
    %v3696 = vmul.f32 %v3674, 0.5
    %v3697 = vmul.f32 %v3679, 0.5
    %v3698 = vld [vmem:[#allocation15] sm:$0x1]
    %v3700 = vlaneseq
    %v3701 = vshrl.u32 %v3700, 7
    %v3702 = vsub.s32 0, %v3701
    %v3703 = vrot.slane %v3698, %v3702
    %v3705 = vadd.f32 %v3682, %v3703
    %v3706 = vadd.f32 %v3683, %v3703
    %v3707 = vadd.f32 %v3684, %v3703
    %v3708 = vadd.f32 %v3685, %v3703
    %v3709 = vadd.f32 %v3686, %v3703
    %v3710 = vadd.f32 %v3687, %v3703
    %v3711 = vadd.f32 %v3688, %v3703
    %v3712 = vadd.f32 %v3689, %v3703
    %v3713 = vadd.f32 %v3690, %v3703
    %v3714 = vadd.f32 %v3691, %v3703
    %v3715 = vadd.f32 %v3692, %v3703
    %v3716 = vadd.f32 %v3693, %v3703
    %v3717 = vadd.f32 %v3694, %v3703
    %v3718 = vadd.f32 %v3695, %v3703
    %v3719 = vadd.f32 %v3696, %v3703
    %v3720 = vadd.f32 %v3697, %v3703
    %v3721 = vmax.f32 %v3705, 0.0
    %v3722 = vmax.f32 %v3706, 0.0
    %v3723 = vmax.f32 %v3707, 0.0
    %v3724 = vmax.f32 %v3708, 0.0
    %v3725 = vmax.f32 %v3709, 0.0
    %v3726 = vmax.f32 %v3710, 0.0
    %v3727 = vmax.f32 %v3711, 0.0
    %v3728 = vmax.f32 %v3712, 0.0
    %v3729 = vmax.f32 %v3713, 0.0
    %v3730 = vmax.f32 %v3714, 0.0
    %v3731 = vmax.f32 %v3715, 0.0
    %v3732 = vmax.f32 %v3716, 0.0
    %v3733 = vmax.f32 %v3717, 0.0
    %v3734 = vmax.f32 %v3718, 0.0
    %v3735 = vmax.f32 %v3719, 0.0
    %v3736 = vmax.f32 %v3720, 0.0
    %v3737 = vld [vmem:[%s14 + $0x18] sm:$0xff]
    %v3738 = vld [vmem:[%s14 + $0x20] sm:$0xff]
    %v3740 = vsel %vm2009, %v3721, 0
    %v3743 = vsel %vm2009, %v3722, 0
    %v3746 = vsel %vm2009, %v3723, 0
    %v3749 = vsel %vm2009, %v3724, 0
    %v3752 = vsel %vm2009, %v3725, 0
    %v3755 = vsel %vm2009, %v3726, 0
    %v3758 = vsel %vm2009, %v3727, 0
    %v3761 = vsel %vm2009, %v3728, 0
    %v3764 = vsel %vm2009, %v3729, 0
    %v3767 = vsel %vm2009, %v3730, 0
    %v3770 = vsel %vm2009, %v3731, 0
    %v3773 = vsel %vm2009, %v3732, 0
    %v3776 = vsel %vm2009, %v3733, 0
    %v3779 = vsel %vm2009, %v3734, 0
    %v3782 = vsel %vm2009, %v3735, 0
    %v3785 = vsel %vm2009, %v3736, 0
    %3787 = vmatprep.subr.mxu0 0.0
    %3788 = vmatpush1.msra.mxu0 %v3737
    %3789 = vmatprep.subr.mxu0 0.0
    %3790 = vmatpush1.msra.mxu0 %v3738
    %3791 = vmatprep.subr.mxu0 0.0
    %3792 = vmatpush1.msra.mxu0 0.0
    %3793 = vmatprep.subr.mxu0 0.0
    %3794 = vmatpush1.msra.mxu0 0.0
    %3795 = vmatprep.subr.mxu0 0.0
    %3796 = vmatpush1.msra.mxu0 0.0
    %3797 = vmatprep.subr.mxu0 0.0
    %3798 = vmatpush1.msra.mxu0 0.0
    %3799 = vmatprep.subr.mxu0 0.0
    %3800 = vmatpush1.msra.mxu0 0.0
    %3801 = vmatprep.subr.mxu0 0.0
    %3802 = vmatpush1.msra.mxu0 0.0
    %3803 = vmatprep.subr.mxu0 0.0
    %3804 = vmatpush1.msra.mxu0 0.0
    %3805 = vmatprep.subr.mxu0 0.0
    %3806 = vmatpush1.msra.mxu0 0.0
    %3807 = vmatprep.subr.mxu0 0.0
    %3808 = vmatpush1.msra.mxu0 0.0
    %3809 = vmatprep.subr.mxu0 0.0
    %3810 = vmatpush1.msra.mxu0 0.0
    %3811 = vmatprep.subr.mxu0 0.0
    %3812 = vmatpush1.msra.mxu0 0.0
    %3813 = vmatprep.subr.mxu0 0.0
    %3814 = vmatpush1.msra.mxu0 0.0
    %3815 = vmatprep.subr.mxu0 0.0
    %3816 = vmatpush1.msra.mxu0 0.0
    %3817 = vmatprep.subr.mxu0 0.0
    %3818 = vmatpush1.msra.mxu0 0.0
    %3819 = vmatprep.subr.mxu0 0.0
    %3820 = vmatpush1.msra.mxu0 0.0
    %3821 = vmatprep.subr.mxu0 0.0
    %3822 = vmatpush1.msra.mxu0 0.0
    %3823 = vmatprep.subr.mxu0 0.0
    %3824 = vmatpush1.msra.mxu0 0.0
    %3825 = vmatprep.subr.mxu0 0.0
    %3826 = vmatpush1.msra.mxu0 0.0
    %3827 = vmatprep.subr.mxu0 0.0
    %3828 = vmatpush1.msra.mxu0 0.0
    %3829 = vmatprep.subr.mxu0 0.0
    %3830 = vmatpush1.msra.mxu0 0.0
    %3831 = vmatprep.subr.mxu0 0.0
    %3832 = vmatpush1.msra.mxu0 0.0
    %3833 = vmatprep.subr.mxu0 0.0
    %3834 = vmatpush1.msra.mxu0 0.0
    %3835 = vmatprep.subr.mxu0 0.0
    %3836 = vmatpush1.msra.mxu0 0.0
    %3837 = vmatprep.subr.mxu0 0.0
    %3838 = vmatpush1.msra.mxu0 0.0
    %3839 = vmatprep.subr.mxu0 0.0
    %3840 = vmatpush1.msra.mxu0 0.0
    %3841 = vmatprep.subr.mxu0 0.0
    %3842 = vmatpush1.msra.mxu0 0.0
    %3843 = vmatprep.subr.mxu0 0.0
    %3844 = vmatpush1.msra.mxu0 0.0
    %3845 = vmatprep.subr.mxu0 0.0
    %3846 = vmatpush1.msra.mxu0 0.0
    %3847 = vmatprep.subr.mxu0 0.0
    %3848 = vmatpush1.msra.mxu0 0.0
    %3849 = vmatprep.subr.mxu0 0.0
    %3850 = vmatpush1.msra.mxu0 0.0
    %3851 = vmatprep.mubr.f32.mxu0 0.0
    %3852 = vmatmul.mubr.f32.gmra.mrb[0].mxu0 %v3740
    %v3853 = vpop.f32.mrb[0].mxu0
    %v3854 = vadd.f32 0.0, %v3853
    %v3855 = vpop.f32.mrb[0].mxu0
    %3856 = vmatprep.mubr.f32.mxu0 0.0
    %3857 = vmatmul.mubr.f32.gmra.mrb[0].mxu0 %v3743
    %v3858 = vpop.f32.mrb[0].mxu0
    %v3859 = vadd.f32 0.0, %v3858
    %v3860 = vpop.f32.mrb[0].mxu0
    %3861 = vmatprep.mubr.f32.mxu0 0.0
    %3862 = vmatmul.mubr.f32.gmra.mrb[0].mxu0 %v3746
    %v3863 = vpop.f32.mrb[0].mxu0
    %v3864 = vadd.f32 0.0, %v3863
    %v3865 = vpop.f32.mrb[0].mxu0
    %3866 = vmatprep.mubr.f32.mxu0 0.0
    %3867 = vmatmul.mubr.f32.gmra.mrb[0].mxu0 %v3749
    %v3868 = vpop.f32.mrb[0].mxu0
    %v3869 = vadd.f32 0.0, %v3868
    %v3870 = vpop.f32.mrb[0].mxu0
    %3871 = vmatprep.mubr.f32.mxu0 0.0
    %3872 = vmatmul.mubr.f32.gmra.mrb[0].mxu0 %v3752
    %v3873 = vpop.f32.mrb[0].mxu0
    %v3874 = vadd.f32 0.0, %v3873
    %v3875 = vpop.f32.mrb[0].mxu0
    %3876 = vmatprep.mubr.f32.mxu0 0.0
    %3877 = vmatmul.mubr.f32.gmra.mrb[0].mxu0 %v3755
    %v3878 = vpop.f32.mrb[0].mxu0
    %v3879 = vadd.f32 0.0, %v3878
    %v3880 = vpop.f32.mrb[0].mxu0
    %3881 = vmatprep.mubr.f32.mxu0 0.0
    %3882 = vmatmul.mubr.f32.gmra.mrb[0].mxu0 %v3758
    %v3883 = vpop.f32.mrb[0].mxu0
    %v3884 = vadd.f32 0.0, %v3883
    %v3885 = vpop.f32.mrb[0].mxu0
    %3886 = vmatprep.mubr.f32.mxu0 0.0
    %3887 = vmatmul.mubr.f32.gmra.mrb[0].mxu0 %v3761
    %v3888 = vpop.f32.mrb[0].mxu0
    %v3889 = vadd.f32 0.0, %v3888
    %v3890 = vpop.f32.mrb[0].mxu0
    %3891 = vmatprep.mubr.f32.mxu0 0.0
    %3892 = vmatmul.mubr.f32.gmra.mrb[0].mxu0 %v3764
    %v3893 = vpop.f32.mrb[0].mxu0
    %v3894 = vadd.f32 0.0, %v3893
    %v3895 = vpop.f32.mrb[0].mxu0
    %3896 = vmatprep.mubr.f32.mxu0 0.0
    %3897 = vmatmul.mubr.f32.gmra.mrb[0].mxu0 %v3767
    %v3898 = vpop.f32.mrb[0].mxu0
    %v3899 = vadd.f32 0.0, %v3898
    %v3900 = vpop.f32.mrb[0].mxu0
    %3901 = vmatprep.mubr.f32.mxu0 0.0
    %3902 = vmatmul.mubr.f32.gmra.mrb[0].mxu0 %v3770
    %v3903 = vpop.f32.mrb[0].mxu0
    %v3904 = vadd.f32 0.0, %v3903
    %v3905 = vpop.f32.mrb[0].mxu0
    %3906 = vmatprep.mubr.f32.mxu0 0.0
    %3907 = vmatmul.mubr.f32.gmra.mrb[0].mxu0 %v3773
    %v3908 = vpop.f32.mrb[0].mxu0
    %v3909 = vadd.f32 0.0, %v3908
    %v3910 = vpop.f32.mrb[0].mxu0
    %3911 = vmatprep.mubr.f32.mxu0 0.0
    %3912 = vmatmul.mubr.f32.gmra.mrb[0].mxu0 %v3776
    %v3913 = vpop.f32.mrb[0].mxu0
    %v3914 = vadd.f32 0.0, %v3913
    %v3915 = vpop.f32.mrb[0].mxu0
    %3916 = vmatprep.mubr.f32.mxu0 0.0
    %3917 = vmatmul.mubr.f32.gmra.mrb[0].mxu0 %v3779
    %v3918 = vpop.f32.mrb[0].mxu0
    %v3919 = vadd.f32 0.0, %v3918
    %v3920 = vpop.f32.mrb[0].mxu0
    %3921 = vmatprep.mubr.f32.mxu0 0.0
    %3922 = vmatmul.mubr.f32.gmra.mrb[0].mxu0 %v3782
    %v3923 = vpop.f32.mrb[0].mxu0
    %v3924 = vadd.f32 0.0, %v3923
    %v3925 = vpop.f32.mrb[0].mxu0
    %3926 = vmatprep.mubr.f32.mxu0 0.0
    %3927 = vmatmul.mubr.f32.gmra.mrb[0].mxu0 %v3785
    %v3928 = vpop.f32.mrb[0].mxu0
    %v3929 = vadd.f32 0.0, %v3928
    %v3930 = vpop.f32.mrb[0].mxu0
    %3931 = vdwg.mxu0
    %v3932 = vadd.f32 %v2203, %v3854
    %v3933 = vadd.f32 %v2204, %v3859
    %v3934 = vadd.f32 %v2205, %v3864
    %v3935 = vadd.f32 %v2206, %v3869
    %v3936 = vadd.f32 %v2207, %v3874
    %v3937 = vadd.f32 %v2208, %v3879
    %v3938 = vadd.f32 %v2209, %v3884
    %v3939 = vadd.f32 %v2210, %v3889
    %v3940 = vadd.f32 %v2211, %v3894
    %v3941 = vadd.f32 %v2212, %v3899
    %v3942 = vadd.f32 %v2213, %v3904
    %v3943 = vadd.f32 %v2214, %v3909
    %v3944 = vadd.f32 %v2215, %v3914
    %v3945 = vadd.f32 %v2216, %v3919
    %v3946 = vadd.f32 %v2217, %v3924
    %v3947 = vadd.f32 %v2218, %v3929
    %v3948 = vld [vmem:[%s12] sm:$0xff]
    %v3949 = vld [vmem:[%s12 + $0x8] sm:$0xff]
    %3950 = vmatprep.subr.mxu0 0.0
    %3951 = vmatpush1.msra.mxu0 %v3948
    %3952 = vmatprep.subr.mxu0 0.0
    %3953 = vmatpush1.msra.mxu0 %v3949
    %3954 = vmatprep.subr.mxu0 0.0
    %3955 = vmatpush1.msra.mxu0 0.0
    %3956 = vmatprep.subr.mxu0 0.0
    %3957 = vmatpush1.msra.mxu0 0.0
    %3958 = vmatprep.subr.mxu0 0.0
    %3959 = vmatpush1.msra.mxu0 0.0
    %3960 = vmatprep.subr.mxu0 0.0
    %3961 = vmatpush1.msra.mxu0 0.0
    %3962 = vmatprep.subr.mxu0 0.0
    %3963 = vmatpush1.msra.mxu0 0.0
    %3964 = vmatprep.subr.mxu0 0.0
    %3965 = vmatpush1.msra.mxu0 0.0
    %3966 = vmatprep.subr.mxu0 0.0
    %3967 = vmatpush1.msra.mxu0 0.0
    %3968 = vmatprep.subr.mxu0 0.0
    %3969 = vmatpush1.msra.mxu0 0.0
    %3970 = vmatprep.subr.mxu0 0.0
    %3971 = vmatpush1.msra.mxu0 0.0
    %3972 = vmatprep.subr.mxu0 0.0
    %3973 = vmatpush1.msra.mxu0 0.0
    %3974 = vmatprep.subr.mxu0 0.0
    %3975 = vmatpush1.msra.mxu0 0.0
    %3976 = vmatprep.subr.mxu0 0.0
    %3977 = vmatpush1.msra.mxu0 0.0
    %3978 = vmatprep.subr.mxu0 0.0
    %3979 = vmatpush1.msra.mxu0 0.0
    %3980 = vmatprep.subr.mxu0 0.0
    %3981 = vmatpush1.msra.mxu0 0.0
    %3982 = vmatprep.subr.mxu0 0.0
    %3983 = vmatpush1.msra.mxu0 0.0
    %3984 = vmatprep.subr.mxu0 0.0
    %3985 = vmatpush1.msra.mxu0 0.0
    %3986 = vmatprep.subr.mxu0 0.0
    %3987 = vmatpush1.msra.mxu0 0.0
    %3988 = vmatprep.subr.mxu0 0.0
    %3989 = vmatpush1.msra.mxu0 0.0
    %3990 = vmatprep.subr.mxu0 0.0
    %3991 = vmatpush1.msra.mxu0 0.0
    %3992 = vmatprep.subr.mxu0 0.0
    %3993 = vmatpush1.msra.mxu0 0.0
    %3994 = vmatprep.subr.mxu0 0.0
    %3995 = vmatpush1.msra.mxu0 0.0
    %3996 = vmatprep.subr.mxu0 0.0
    %3997 = vmatpush1.msra.mxu0 0.0
    %3998 = vmatprep.subr.mxu0 0.0
    %3999 = vmatpush1.msra.mxu0 0.0
    %4000 = vmatprep.subr.mxu0 0.0
    %4001 = vmatpush1.msra.mxu0 0.0
    %4002 = vmatprep.subr.mxu0 0.0
    %4003 = vmatpush1.msra.mxu0 0.0
    %4004 = vmatprep.subr.mxu0 0.0
    %4005 = vmatpush1.msra.mxu0 0.0
    %4006 = vmatprep.subr.mxu0 0.0
    %4007 = vmatpush1.msra.mxu0 0.0
    %4008 = vmatprep.subr.mxu0 0.0
    %4009 = vmatpush1.msra.mxu0 0.0
    %4010 = vmatprep.subr.mxu0 0.0
    %4011 = vmatpush1.msra.mxu0 0.0
    %4012 = vmatprep.subr.mxu0 0.0
    %4013 = vmatpush1.msra.mxu0 0.0
    %4014 = vmatprep.mubr.f32.mxu0 0.0
    %4015 = vmatmul.mubr.f32.gmra.mrb[0].mxu0 %v3740
    %v4016 = vpop.f32.mrb[0].mxu0
    %v4017 = vadd.f32 0.0, %v4016
    %v4018 = vpop.f32.mrb[0].mxu0
    %4019 = vmatprep.mubr.f32.mxu0 0.0
    %4020 = vmatmul.mubr.f32.gmra.mrb[0].mxu0 %v3743
    %v4021 = vpop.f32.mrb[0].mxu0
    %v4022 = vadd.f32 0.0, %v4021
    %v4023 = vpop.f32.mrb[0].mxu0
    %4024 = vmatprep.mubr.f32.mxu0 0.0
    %4025 = vmatmul.mubr.f32.gmra.mrb[0].mxu0 %v3746
    %v4026 = vpop.f32.mrb[0].mxu0
    %v4027 = vadd.f32 0.0, %v4026
    %v4028 = vpop.f32.mrb[0].mxu0
    %4029 = vmatprep.mubr.f32.mxu0 0.0
    %4030 = vmatmul.mubr.f32.gmra.mrb[0].mxu0 %v3749
    %v4031 = vpop.f32.mrb[0].mxu0
    %v4032 = vadd.f32 0.0, %v4031
    %v4033 = vpop.f32.mrb[0].mxu0
    %4034 = vmatprep.mubr.f32.mxu0 0.0
    %4035 = vmatmul.mubr.f32.gmra.mrb[0].mxu0 %v3752
    %v4036 = vpop.f32.mrb[0].mxu0
    %v4037 = vadd.f32 0.0, %v4036
    %v4038 = vpop.f32.mrb[0].mxu0
    %4039 = vmatprep.mubr.f32.mxu0 0.0
    %4040 = vmatmul.mubr.f32.gmra.mrb[0].mxu0 %v3755
    %v4041 = vpop.f32.mrb[0].mxu0
    %v4042 = vadd.f32 0.0, %v4041
    %v4043 = vpop.f32.mrb[0].mxu0
    %4044 = vmatprep.mubr.f32.mxu0 0.0
    %4045 = vmatmul.mubr.f32.gmra.mrb[0].mxu0 %v3758
    %v4046 = vpop.f32.mrb[0].mxu0
    %v4047 = vadd.f32 0.0, %v4046
    %v4048 = vpop.f32.mrb[0].mxu0
    %4049 = vmatprep.mubr.f32.mxu0 0.0
    %4050 = vmatmul.mubr.f32.gmra.mrb[0].mxu0 %v3761
    %v4051 = vpop.f32.mrb[0].mxu0
    %v4052 = vadd.f32 0.0, %v4051
    %v4053 = vpop.f32.mrb[0].mxu0
    %4054 = vmatprep.mubr.f32.mxu0 0.0
    %4055 = vmatmul.mubr.f32.gmra.mrb[0].mxu0 %v3764
    %v4056 = vpop.f32.mrb[0].mxu0
    %v4057 = vadd.f32 0.0, %v4056
    %v4058 = vpop.f32.mrb[0].mxu0
    %4059 = vmatprep.mubr.f32.mxu0 0.0
    %4060 = vmatmul.mubr.f32.gmra.mrb[0].mxu0 %v3767
    %v4061 = vpop.f32.mrb[0].mxu0
    %v4062 = vadd.f32 0.0, %v4061
    %v4063 = vpop.f32.mrb[0].mxu0
    %4064 = vmatprep.mubr.f32.mxu0 0.0
    %4065 = vmatmul.mubr.f32.gmra.mrb[0].mxu0 %v3770
    %v4066 = vpop.f32.mrb[0].mxu0
    %v4067 = vadd.f32 0.0, %v4066
    %v4068 = vpop.f32.mrb[0].mxu0
    %4069 = vmatprep.mubr.f32.mxu0 0.0
    %4070 = vmatmul.mubr.f32.gmra.mrb[0].mxu0 %v3773
    %v4071 = vpop.f32.mrb[0].mxu0
    %v4072 = vadd.f32 0.0, %v4071
    %v4073 = vpop.f32.mrb[0].mxu0
    %4074 = vmatprep.mubr.f32.mxu0 0.0
    %4075 = vmatmul.mubr.f32.gmra.mrb[0].mxu0 %v3776
    %v4076 = vpop.f32.mrb[0].mxu0
    %v4077 = vadd.f32 0.0, %v4076
    %v4078 = vpop.f32.mrb[0].mxu0
    %4079 = vmatprep.mubr.f32.mxu0 0.0
    %4080 = vmatmul.mubr.f32.gmra.mrb[0].mxu0 %v3779
    %v4081 = vpop.f32.mrb[0].mxu0
    %v4082 = vadd.f32 0.0, %v4081
    %v4083 = vpop.f32.mrb[0].mxu0
    %4084 = vmatprep.mubr.f32.mxu0 0.0
    %4085 = vmatmul.mubr.f32.gmra.mrb[0].mxu0 %v3782
    %v4086 = vpop.f32.mrb[0].mxu0
    %v4087 = vadd.f32 0.0, %v4086
    %v4088 = vpop.f32.mrb[0].mxu0
    %4089 = vmatprep.mubr.f32.mxu0 0.0
    %4090 = vmatmul.mubr.f32.gmra.mrb[0].mxu0 %v3785
    %v4091 = vpop.f32.mrb[0].mxu0
    %v4092 = vadd.f32 0.0, %v4091
    %v4093 = vpop.f32.mrb[0].mxu0
    %4094 = vdwg.mxu0
    %v4095 = vld [vmem:[%s3] sm:$0xff]
    %v4096 = vld [vmem:[%s3 + $0x8] sm:$0xff]
    %v4097 = vld [vmem:[%s3 + $0x10] sm:$0xff]
    %v4098 = vld [vmem:[%s3 + $0x18] sm:$0xff]
    %v4099 = vld [vmem:[%s3 + $0x20] sm:$0xff]
    %v4100 = vld [vmem:[%s3 + $0x28] sm:$0xff]
    %v4101 = vld [vmem:[%s3 + $0x30] sm:$0xff]
    %v4102 = vld [vmem:[%s3 + $0x38] sm:$0xff]
    %v4103 = vld [vmem:[%s3 + $0x40] sm:$0xff]
    %v4104 = vld [vmem:[%s3 + $0x48] sm:$0xff]
    %v4105 = vld [vmem:[%s3 + $0x50] sm:$0xff]
    %v4106 = vld [vmem:[%s3 + $0x58] sm:$0xff]
    %v4107 = vld [vmem:[%s3 + $0x60] sm:$0xff]
    %v4108 = vld [vmem:[%s3 + $0x68] sm:$0xff]
    %v4109 = vld [vmem:[%s3 + $0x70] sm:$0xff]
    %v4110 = vld [vmem:[%s3 + $0x78] sm:$0xff]
    %v4111 = vld [vmem:[#allocation16] sm:$0x1]
    %v4113 = vlaneseq
    %v4114 = vshrl.u32 %v4113, 7
    %v4115 = vsub.s32 0, %v4114
    %v4116 = vrot.slane %v4111, %v4115
    %4118 = vmatprep.subr.mxu0 0.0
    %4119 = vmatpush1.msra.mxu0 %v4017
    %4120 = vmatprep.subr.mxu0 0.0
    %4121 = vmatpush1.msra.mxu0 %v4022
    %4122 = vmatprep.subr.mxu0 0.0
    %4123 = vmatpush1.msra.mxu0 %v4027
    %4124 = vmatprep.subr.mxu0 0.0
    %4125 = vmatpush1.msra.mxu0 %v4032
    %4126 = vmatprep.subr.mxu0 0.0
    %4127 = vmatpush1.msra.mxu0 %v4037
    %4128 = vmatprep.subr.mxu0 0.0
    %4129 = vmatpush1.msra.mxu0 %v4042
    %4130 = vmatprep.subr.mxu0 0.0
    %4131 = vmatpush1.msra.mxu0 %v4047
    %4132 = vmatprep.subr.mxu0 0.0
    %4133 = vmatpush1.msra.mxu0 %v4052
    %4134 = vmatprep.subr.mxu0 0.0
    %4135 = vmatpush1.msra.mxu0 %v4057
    %4136 = vmatprep.subr.mxu0 0.0
    %4137 = vmatpush1.msra.mxu0 %v4062
    %4138 = vmatprep.subr.mxu0 0.0
    %4139 = vmatpush1.msra.mxu0 %v4067
    %4140 = vmatprep.subr.mxu0 0.0
    %4141 = vmatpush1.msra.mxu0 %v4072
    %4142 = vmatprep.subr.mxu0 0.0
    %4143 = vmatpush1.msra.mxu0 %v4077
    %4144 = vmatprep.subr.mxu0 0.0
    %4145 = vmatpush1.msra.mxu0 %v4082
    %4146 = vmatprep.subr.mxu0 0.0
    %4147 = vmatpush1.msra.mxu0 %v4087
    %4148 = vmatprep.subr.mxu0 0.0
    %4149 = vmatpush1.msra.mxu0 %v4092
    %4150 = vmatprep.subr.mxu0 0.0
    %4151 = vmatpush1.msra.mxu0 0.0
    %4152 = vmatprep.subr.mxu0 0.0
    %4153 = vmatpush1.msra.mxu0 0.0
    %4154 = vmatprep.subr.mxu0 0.0
    %4155 = vmatpush1.msra.mxu0 0.0
    %4156 = vmatprep.subr.mxu0 0.0
    %4157 = vmatpush1.msra.mxu0 0.0
    %4158 = vmatprep.subr.mxu0 0.0
    %4159 = vmatpush1.msra.mxu0 0.0
    %4160 = vmatprep.subr.mxu0 0.0
    %4161 = vmatpush1.msra.mxu0 0.0
    %4162 = vmatprep.subr.mxu0 0.0
    %4163 = vmatpush1.msra.mxu0 0.0
    %4164 = vmatprep.subr.mxu0 0.0
    %4165 = vmatpush1.msra.mxu0 0.0
    %4166 = vmatprep.subr.mxu0 0.0
    %4167 = vmatpush1.msra.mxu0 0.0
    %4168 = vmatprep.subr.mxu0 0.0
    %4169 = vmatpush1.msra.mxu0 0.0
    %4170 = vmatprep.subr.mxu0 0.0
    %4171 = vmatpush1.msra.mxu0 0.0
    %4172 = vmatprep.subr.mxu0 0.0
    %4173 = vmatpush1.msra.mxu0 0.0
    %4174 = vmatprep.subr.mxu0 0.0
    %4175 = vmatpush1.msra.mxu0 0.0
    %4176 = vmatprep.subr.mxu0 0.0
    %4177 = vmatpush1.msra.mxu0 0.0
    %4178 = vmatprep.subr.mxu0 0.0
    %4179 = vmatpush1.msra.mxu0 0.0
    %4180 = vmatprep.subr.mxu0 0.0
    %4181 = vmatpush1.msra.mxu0 0.0
    %4182 = vmatprep.mubr.f32.mxu0 0.0
    %4183 = vmatmul.mubr.f32.gmra.mrb[0].mxu0 %v4095
    %v4184 = vpop.f32.mrb[0].mxu0
    %v4185 = vadd.f32 %v4116, %v4184
    %v4186 = vpop.f32.mrb[0].mxu0
    %4187 = vmatprep.mubr.f32.mxu0 0.0
    %4188 = vmatmul.mubr.f32.gmra.mrb[0].mxu0 %v4096
    %v4189 = vpop.f32.mrb[0].mxu0
    %v4190 = vadd.f32 %v4116, %v4189
    %v4191 = vpop.f32.mrb[0].mxu0
    %4192 = vmatprep.mubr.f32.mxu0 0.0
    %4193 = vmatmul.mubr.f32.gmra.mrb[0].mxu0 %v4097
    %v4194 = vpop.f32.mrb[0].mxu0
    %v4195 = vadd.f32 %v4116, %v4194
    %v4196 = vpop.f32.mrb[0].mxu0
    %4197 = vmatprep.mubr.f32.mxu0 0.0
    %4198 = vmatmul.mubr.f32.gmra.mrb[0].mxu0 %v4098
    %v4199 = vpop.f32.mrb[0].mxu0
    %v4200 = vadd.f32 %v4116, %v4199
    %v4201 = vpop.f32.mrb[0].mxu0
    %4202 = vmatprep.mubr.f32.mxu0 0.0
    %4203 = vmatmul.mubr.f32.gmra.mrb[0].mxu0 %v4099
    %v4204 = vpop.f32.mrb[0].mxu0
    %v4205 = vadd.f32 %v4116, %v4204
    %v4206 = vpop.f32.mrb[0].mxu0
    %4207 = vmatprep.mubr.f32.mxu0 0.0
    %4208 = vmatmul.mubr.f32.gmra.mrb[0].mxu0 %v4100
    %v4209 = vpop.f32.mrb[0].mxu0
    %v4210 = vadd.f32 %v4116, %v4209
    %v4211 = vpop.f32.mrb[0].mxu0
    %4212 = vmatprep.mubr.f32.mxu0 0.0
    %4213 = vmatmul.mubr.f32.gmra.mrb[0].mxu0 %v4101
    %v4214 = vpop.f32.mrb[0].mxu0
    %v4215 = vadd.f32 %v4116, %v4214
    %v4216 = vpop.f32.mrb[0].mxu0
    %4217 = vmatprep.mubr.f32.mxu0 0.0
    %4218 = vmatmul.mubr.f32.gmra.mrb[0].mxu0 %v4102
    %v4219 = vpop.f32.mrb[0].mxu0
    %v4220 = vadd.f32 %v4116, %v4219
    %v4221 = vpop.f32.mrb[0].mxu0
    %4222 = vmatprep.mubr.f32.mxu0 0.0
    %4223 = vmatmul.mubr.f32.gmra.mrb[0].mxu0 %v4103
    %v4224 = vpop.f32.mrb[0].mxu0
    %v4225 = vadd.f32 %v4116, %v4224
    %v4226 = vpop.f32.mrb[0].mxu0
    %4227 = vmatprep.mubr.f32.mxu0 0.0
    %4228 = vmatmul.mubr.f32.gmra.mrb[0].mxu0 %v4104
    %v4229 = vpop.f32.mrb[0].mxu0
    %v4230 = vadd.f32 %v4116, %v4229
    %v4231 = vpop.f32.mrb[0].mxu0
    %4232 = vmatprep.mubr.f32.mxu0 0.0
    %4233 = vmatmul.mubr.f32.gmra.mrb[0].mxu0 %v4105
    %v4234 = vpop.f32.mrb[0].mxu0
    %v4235 = vadd.f32 %v4116, %v4234
    %v4236 = vpop.f32.mrb[0].mxu0
    %4237 = vmatprep.mubr.f32.mxu0 0.0
    %4238 = vmatmul.mubr.f32.gmra.mrb[0].mxu0 %v4106
    %v4239 = vpop.f32.mrb[0].mxu0
    %v4240 = vadd.f32 %v4116, %v4239
    %v4241 = vpop.f32.mrb[0].mxu0
    %4242 = vmatprep.mubr.f32.mxu0 0.0
    %4243 = vmatmul.mubr.f32.gmra.mrb[0].mxu0 %v4107
    %v4244 = vpop.f32.mrb[0].mxu0
    %v4245 = vadd.f32 %v4116, %v4244
    %v4246 = vpop.f32.mrb[0].mxu0
    %4247 = vmatprep.mubr.f32.mxu0 0.0
    %4248 = vmatmul.mubr.f32.gmra.mrb[0].mxu0 %v4108
    %v4249 = vpop.f32.mrb[0].mxu0
    %v4250 = vadd.f32 %v4116, %v4249
    %v4251 = vpop.f32.mrb[0].mxu0
    %4252 = vmatprep.mubr.f32.mxu0 0.0
    %4253 = vmatmul.mubr.f32.gmra.mrb[0].mxu0 %v4109
    %v4254 = vpop.f32.mrb[0].mxu0
    %v4255 = vadd.f32 %v4116, %v4254
    %v4256 = vpop.f32.mrb[0].mxu0
    %4257 = vmatprep.mubr.f32.mxu0 0.0
    %4258 = vmatmul.mubr.f32.gmra.mrb[0].mxu0 %v4110
    %v4259 = vpop.f32.mrb[0].mxu0
    %v4260 = vadd.f32 %v4116, %v4259
    %v4261 = vpop.f32.mrb[0].mxu0
    %4262 = vdwg.mxu0
    %v4263 = vld [vmem:[%s14 + $0x28] sm:$0xff]
    %v4264 = vld [vmem:[%s14 + $0x30] sm:$0xff]
    %v4266 = vsel %vm2009, %v4185, 0
    %v4269 = vsel %vm2009, %v4190, 0
    %v4272 = vsel %vm2009, %v4195, 0
    %v4275 = vsel %vm2009, %v4200, 0
    %v4278 = vsel %vm2009, %v4205, 0
    %v4281 = vsel %vm2009, %v4210, 0
    %v4284 = vsel %vm2009, %v4215, 0
    %v4287 = vsel %vm2009, %v4220, 0
    %v4290 = vsel %vm2009, %v4225, 0
    %v4293 = vsel %vm2009, %v4230, 0
    %v4296 = vsel %vm2009, %v4235, 0
    %v4299 = vsel %vm2009, %v4240, 0
    %v4302 = vsel %vm2009, %v4245, 0
    %v4305 = vsel %vm2009, %v4250, 0
    %v4308 = vsel %vm2009, %v4255, 0
    %v4311 = vsel %vm2009, %v4260, 0
    %4313 = vmatprep.subr.mxu0 0.0
    %4314 = vmatpush1.msra.mxu0 %v4263
    %4315 = vmatprep.subr.mxu0 0.0
    %4316 = vmatpush1.msra.mxu0 %v4264
    %4317 = vmatprep.subr.mxu0 0.0
    %4318 = vmatpush1.msra.mxu0 0.0
    %4319 = vmatprep.subr.mxu0 0.0
    %4320 = vmatpush1.msra.mxu0 0.0
    %4321 = vmatprep.subr.mxu0 0.0
    %4322 = vmatpush1.msra.mxu0 0.0
    %4323 = vmatprep.subr.mxu0 0.0
    %4324 = vmatpush1.msra.mxu0 0.0
    %4325 = vmatprep.subr.mxu0 0.0
    %4326 = vmatpush1.msra.mxu0 0.0
    %4327 = vmatprep.subr.mxu0 0.0
    %4328 = vmatpush1.msra.mxu0 0.0
    %4329 = vmatprep.subr.mxu0 0.0
    %4330 = vmatpush1.msra.mxu0 0.0
    %4331 = vmatprep.subr.mxu0 0.0
    %4332 = vmatpush1.msra.mxu0 0.0
    %4333 = vmatprep.subr.mxu0 0.0
    %4334 = vmatpush1.msra.mxu0 0.0
    %4335 = vmatprep.subr.mxu0 0.0
    %4336 = vmatpush1.msra.mxu0 0.0
    %4337 = vmatprep.subr.mxu0 0.0
    %4338 = vmatpush1.msra.mxu0 0.0
    %4339 = vmatprep.subr.mxu0 0.0
    %4340 = vmatpush1.msra.mxu0 0.0
    %4341 = vmatprep.subr.mxu0 0.0
    %4342 = vmatpush1.msra.mxu0 0.0
    %4343 = vmatprep.subr.mxu0 0.0
    %4344 = vmatpush1.msra.mxu0 0.0
    %4345 = vmatprep.subr.mxu0 0.0
    %4346 = vmatpush1.msra.mxu0 0.0
    %4347 = vmatprep.subr.mxu0 0.0
    %4348 = vmatpush1.msra.mxu0 0.0
    %4349 = vmatprep.subr.mxu0 0.0
    %4350 = vmatpush1.msra.mxu0 0.0
    %4351 = vmatprep.subr.mxu0 0.0
    %4352 = vmatpush1.msra.mxu0 0.0
    %4353 = vmatprep.subr.mxu0 0.0
    %4354 = vmatpush1.msra.mxu0 0.0
    %4355 = vmatprep.subr.mxu0 0.0
    %4356 = vmatpush1.msra.mxu0 0.0
    %4357 = vmatprep.subr.mxu0 0.0
    %4358 = vmatpush1.msra.mxu0 0.0
    %4359 = vmatprep.subr.mxu0 0.0
    %4360 = vmatpush1.msra.mxu0 0.0
    %4361 = vmatprep.subr.mxu0 0.0
    %4362 = vmatpush1.msra.mxu0 0.0
    %4363 = vmatprep.subr.mxu0 0.0
    %4364 = vmatpush1.msra.mxu0 0.0
    %4365 = vmatprep.subr.mxu0 0.0
    %4366 = vmatpush1.msra.mxu0 0.0
    %4367 = vmatprep.subr.mxu0 0.0
    %4368 = vmatpush1.msra.mxu0 0.0
    %4369 = vmatprep.subr.mxu0 0.0
    %4370 = vmatpush1.msra.mxu0 0.0
    %4371 = vmatprep.subr.mxu0 0.0
    %4372 = vmatpush1.msra.mxu0 0.0
    %4373 = vmatprep.subr.mxu0 0.0
    %4374 = vmatpush1.msra.mxu0 0.0
    %4375 = vmatprep.subr.mxu0 0.0
    %4376 = vmatpush1.msra.mxu0 0.0
    %4377 = vmatprep.mubr.f32.mxu0 0.0
    %4378 = vmatmul.mubr.f32.gmra.mrb[0].mxu0 %v4266
    %v4379 = vpop.f32.mrb[0].mxu0
    %v4380 = vadd.f32 0.0, %v4379
    %v4381 = vpop.f32.mrb[0].mxu0
    %4382 = vmatprep.mubr.f32.mxu0 0.0
    %4383 = vmatmul.mubr.f32.gmra.mrb[0].mxu0 %v4269
    %v4384 = vpop.f32.mrb[0].mxu0
    %v4385 = vadd.f32 0.0, %v4384
    %v4386 = vpop.f32.mrb[0].mxu0
    %4387 = vmatprep.mubr.f32.mxu0 0.0
    %4388 = vmatmul.mubr.f32.gmra.mrb[0].mxu0 %v4272
    %v4389 = vpop.f32.mrb[0].mxu0
    %v4390 = vadd.f32 0.0, %v4389
    %v4391 = vpop.f32.mrb[0].mxu0
    %4392 = vmatprep.mubr.f32.mxu0 0.0
    %4393 = vmatmul.mubr.f32.gmra.mrb[0].mxu0 %v4275
    %v4394 = vpop.f32.mrb[0].mxu0
    %v4395 = vadd.f32 0.0, %v4394
    %v4396 = vpop.f32.mrb[0].mxu0
    %4397 = vmatprep.mubr.f32.mxu0 0.0
    %4398 = vmatmul.mubr.f32.gmra.mrb[0].mxu0 %v4278
    %v4399 = vpop.f32.mrb[0].mxu0
    %v4400 = vadd.f32 0.0, %v4399
    %v4401 = vpop.f32.mrb[0].mxu0
    %4402 = vmatprep.mubr.f32.mxu0 0.0
    %4403 = vmatmul.mubr.f32.gmra.mrb[0].mxu0 %v4281
    %v4404 = vpop.f32.mrb[0].mxu0
    %v4405 = vadd.f32 0.0, %v4404
    %v4406 = vpop.f32.mrb[0].mxu0
    %4407 = vmatprep.mubr.f32.mxu0 0.0
    %4408 = vmatmul.mubr.f32.gmra.mrb[0].mxu0 %v4284
    %v4409 = vpop.f32.mrb[0].mxu0
    %v4410 = vadd.f32 0.0, %v4409
    %v4411 = vpop.f32.mrb[0].mxu0
    %4412 = vmatprep.mubr.f32.mxu0 0.0
    %4413 = vmatmul.mubr.f32.gmra.mrb[0].mxu0 %v4287
    %v4414 = vpop.f32.mrb[0].mxu0
    %v4415 = vadd.f32 0.0, %v4414
    %v4416 = vpop.f32.mrb[0].mxu0
    %4417 = vmatprep.mubr.f32.mxu0 0.0
    %4418 = vmatmul.mubr.f32.gmra.mrb[0].mxu0 %v4290
    %v4419 = vpop.f32.mrb[0].mxu0
    %v4420 = vadd.f32 0.0, %v4419
    %v4421 = vpop.f32.mrb[0].mxu0
    %4422 = vmatprep.mubr.f32.mxu0 0.0
    %4423 = vmatmul.mubr.f32.gmra.mrb[0].mxu0 %v4293
    %v4424 = vpop.f32.mrb[0].mxu0
    %v4425 = vadd.f32 0.0, %v4424
    %v4426 = vpop.f32.mrb[0].mxu0
    %4427 = vmatprep.mubr.f32.mxu0 0.0
    %4428 = vmatmul.mubr.f32.gmra.mrb[0].mxu0 %v4296
    %v4429 = vpop.f32.mrb[0].mxu0
    %v4430 = vadd.f32 0.0, %v4429
    %v4431 = vpop.f32.mrb[0].mxu0
    %4432 = vmatprep.mubr.f32.mxu0 0.0
    %4433 = vmatmul.mubr.f32.gmra.mrb[0].mxu0 %v4299
    %v4434 = vpop.f32.mrb[0].mxu0
    %v4435 = vadd.f32 0.0, %v4434
    %v4436 = vpop.f32.mrb[0].mxu0
    %4437 = vmatprep.mubr.f32.mxu0 0.0
    %4438 = vmatmul.mubr.f32.gmra.mrb[0].mxu0 %v4302
    %v4439 = vpop.f32.mrb[0].mxu0
    %v4440 = vadd.f32 0.0, %v4439
    %v4441 = vpop.f32.mrb[0].mxu0
    %4442 = vmatprep.mubr.f32.mxu0 0.0
    %4443 = vmatmul.mubr.f32.gmra.mrb[0].mxu0 %v4305
    %v4444 = vpop.f32.mrb[0].mxu0
    %v4445 = vadd.f32 0.0, %v4444
    %v4446 = vpop.f32.mrb[0].mxu0
    %4447 = vmatprep.mubr.f32.mxu0 0.0
    %4448 = vmatmul.mubr.f32.gmra.mrb[0].mxu0 %v4308
    %v4449 = vpop.f32.mrb[0].mxu0
    %v4450 = vadd.f32 0.0, %v4449
    %v4451 = vpop.f32.mrb[0].mxu0
    %4452 = vmatprep.mubr.f32.mxu0 0.0
    %4453 = vmatmul.mubr.f32.gmra.mrb[0].mxu0 %v4311
    %v4454 = vpop.f32.mrb[0].mxu0
    %v4455 = vadd.f32 0.0, %v4454
    %v4456 = vpop.f32.mrb[0].mxu0
    %4457 = vdwg.mxu0
    %v4458 = vadd.f32 %v3932, %v4380
    %v4459 = vadd.f32 %v3933, %v4385
    %v4460 = vadd.f32 %v3934, %v4390
    %v4461 = vadd.f32 %v3935, %v4395
    %v4462 = vadd.f32 %v3936, %v4400
    %v4463 = vadd.f32 %v3937, %v4405
    %v4464 = vadd.f32 %v3938, %v4410
    %v4465 = vadd.f32 %v3939, %v4415
    %v4466 = vadd.f32 %v3940, %v4420
    %v4467 = vadd.f32 %v3941, %v4425
    %v4468 = vadd.f32 %v3942, %v4430
    %v4469 = vadd.f32 %v3943, %v4435
    %v4470 = vadd.f32 %v3944, %v4440
    %v4471 = vadd.f32 %v3945, %v4445
    %v4472 = vadd.f32 %v3946, %v4450
    %v4473 = vadd.f32 %v3947, %v4455
    %v4474 = vmax.f32 %v4458, 0.0
    %v4475 = vmax.f32 %v4459, 0.0
    %v4476 = vmax.f32 %v4460, 0.0
    %v4477 = vmax.f32 %v4461, 0.0
    %v4478 = vmax.f32 %v4462, 0.0
    %v4479 = vmax.f32 %v4463, 0.0
    %v4480 = vmax.f32 %v4464, 0.0
    %v4481 = vmax.f32 %v4465, 0.0
    %v4482 = vmax.f32 %v4466, 0.0
    %v4483 = vmax.f32 %v4467, 0.0
    %v4484 = vmax.f32 %v4468, 0.0
    %v4485 = vmax.f32 %v4469, 0.0
    %v4486 = vmax.f32 %v4470, 0.0
    %v4487 = vmax.f32 %v4471, 0.0
    %v4488 = vmax.f32 %v4472, 0.0
    %v4489 = vmax.f32 %v4473, 0.0
    %v4490 = vsel %vm620, %v4474, 0.0
    %v4491 = vsel %vm620, %v4475, 0.0
    %v4492 = vadd.f32 %v4490, %v4491
    %v4493 = vsel %vm620, %v4476, 0.0
    %v4494 = vadd.f32 %v4492, %v4493
    %v4495 = vsel %vm620, %v4477, 0.0
    %v4496 = vadd.f32 %v4494, %v4495
    %v4497 = vsel %vm620, %v4478, 0.0
    %v4498 = vadd.f32 %v4496, %v4497
    %v4499 = vsel %vm620, %v4479, 0.0
    %v4500 = vadd.f32 %v4498, %v4499
    %v4501 = vsel %vm620, %v4480, 0.0
    %v4502 = vadd.f32 %v4500, %v4501
    %v4503 = vsel %vm620, %v4481, 0.0
    %v4504 = vadd.f32 %v4502, %v4503
    %v4505 = vsel %vm620, %v4482, 0.0
    %v4506 = vadd.f32 %v4504, %v4505
    %v4507 = vsel %vm620, %v4483, 0.0
    %v4508 = vadd.f32 %v4506, %v4507
    %v4509 = vsel %vm620, %v4484, 0.0
    %v4510 = vadd.f32 %v4508, %v4509
    %v4511 = vsel %vm620, %v4485, 0.0
    %v4512 = vadd.f32 %v4510, %v4511
    %v4513 = vsel %vm620, %v4486, 0.0
    %v4514 = vadd.f32 %v4512, %v4513
    %v4515 = vsel %vm620, %v4487, 0.0
    %v4516 = vadd.f32 %v4514, %v4515
    %v4517 = vsel %vm620, %v4488, 0.0
    %v4518 = vadd.f32 %v4516, %v4517
    %v4519 = vsel %vm620, %v4489, 0.0
    %v4520 = vadd.f32 %v4518, %v4519
    %v4521 = vrot.slane %v4520, 4
    %v4522 = vadd.f32 %v4520, %v4521
    %v4523 = vrot.slane %v4522, 2
    %v4524 = vadd.f32 %v4522, %v4523
    %v4525 = vrot.slane %v4524, 1
    %v4526 = vadd.f32 %v4524, %v4525
    %v4527 = vrcp.pop 128.0
    %v4528 = vmul.f32 %v4526, %v4527
    %v4529 = vsub.f32 %v4474, %v4528
    %v4530 = vsub.f32 %v4475, %v4528
    %v4531 = vsub.f32 %v4476, %v4528
    %v4532 = vsub.f32 %v4477, %v4528
    %v4533 = vsub.f32 %v4478, %v4528
    %v4534 = vsub.f32 %v4479, %v4528
    %v4535 = vsub.f32 %v4480, %v4528
    %v4536 = vsub.f32 %v4481, %v4528
    %v4537 = vsub.f32 %v4482, %v4528
    %v4538 = vsub.f32 %v4483, %v4528
    %v4539 = vsub.f32 %v4484, %v4528
    %v4540 = vsub.f32 %v4485, %v4528
    %v4541 = vsub.f32 %v4486, %v4528
    %v4542 = vsub.f32 %v4487, %v4528
    %v4543 = vsub.f32 %v4488, %v4528
    %v4544 = vsub.f32 %v4489, %v4528
    %v4545 = vmul.f32 %v4529, %v4529
    %v4546 = vmul.f32 %v4530, %v4530
    %v4547 = vmul.f32 %v4531, %v4531
    %v4548 = vmul.f32 %v4532, %v4532
    %v4549 = vmul.f32 %v4533, %v4533
    %v4550 = vmul.f32 %v4534, %v4534
    %v4551 = vmul.f32 %v4535, %v4535
    %v4552 = vmul.f32 %v4536, %v4536
    %v4553 = vmul.f32 %v4537, %v4537
    %v4554 = vmul.f32 %v4538, %v4538
    %v4555 = vmul.f32 %v4539, %v4539
    %v4556 = vmul.f32 %v4540, %v4540
    %v4557 = vmul.f32 %v4541, %v4541
    %v4558 = vmul.f32 %v4542, %v4542
    %v4559 = vmul.f32 %v4543, %v4543
    %v4560 = vmul.f32 %v4544, %v4544
    %v4561 = vsel %vm620, %v4545, 0.0
    %v4562 = vsel %vm620, %v4546, 0.0
    %v4563 = vadd.f32 %v4561, %v4562
    %v4564 = vsel %vm620, %v4547, 0.0
    %v4565 = vadd.f32 %v4563, %v4564
    %v4566 = vsel %vm620, %v4548, 0.0
    %v4567 = vadd.f32 %v4565, %v4566
    %v4568 = vsel %vm620, %v4549, 0.0
    %v4569 = vadd.f32 %v4567, %v4568
    %v4570 = vsel %vm620, %v4550, 0.0
    %v4571 = vadd.f32 %v4569, %v4570
    %v4572 = vsel %vm620, %v4551, 0.0
    %v4573 = vadd.f32 %v4571, %v4572
    %v4574 = vsel %vm620, %v4552, 0.0
    %v4575 = vadd.f32 %v4573, %v4574
    %v4576 = vsel %vm620, %v4553, 0.0
    %v4577 = vadd.f32 %v4575, %v4576
    %v4578 = vsel %vm620, %v4554, 0.0
    %v4579 = vadd.f32 %v4577, %v4578
    %v4580 = vsel %vm620, %v4555, 0.0
    %v4581 = vadd.f32 %v4579, %v4580
    %v4582 = vsel %vm620, %v4556, 0.0
    %v4583 = vadd.f32 %v4581, %v4582
    %v4584 = vsel %vm620, %v4557, 0.0
    %v4585 = vadd.f32 %v4583, %v4584
    %v4586 = vsel %vm620, %v4558, 0.0
    %v4587 = vadd.f32 %v4585, %v4586
    %v4588 = vsel %vm620, %v4559, 0.0
    %v4589 = vadd.f32 %v4587, %v4588
    %v4590 = vsel %vm620, %v4560, 0.0
    %v4591 = vadd.f32 %v4589, %v4590
    %v4592 = vrot.slane %v4591, 4
    %v4593 = vadd.f32 %v4591, %v4592
    %v4594 = vrot.slane %v4593, 2
    %v4595 = vadd.f32 %v4593, %v4594
    %v4596 = vrot.slane %v4595, 1
    %v4597 = vadd.f32 %v4595, %v4596
    %v4598 = vmul.f32 %v4597, %v4527
    %v4599 = vadd.f32 %v4598, 1e-05
    %v4600 = vrsqrt.pop %v4599
    %v4601 = vmul.f32 %v4529, %v4600
    %v4602 = vmul.f32 %v4530, %v4600
    %v4603 = vmul.f32 %v4531, %v4600
    %v4604 = vmul.f32 %v4532, %v4600
    %v4605 = vmul.f32 %v4533, %v4600
    %v4606 = vmul.f32 %v4534, %v4600
    %v4607 = vmul.f32 %v4535, %v4600
    %v4608 = vmul.f32 %v4536, %v4600
    %v4609 = vmul.f32 %v4537, %v4600
    %v4610 = vmul.f32 %v4538, %v4600
    %v4611 = vmul.f32 %v4539, %v4600
    %v4612 = vmul.f32 %v4540, %v4600
    %v4613 = vmul.f32 %v4541, %v4600
    %v4614 = vmul.f32 %v4542, %v4600
    %v4615 = vmul.f32 %v4543, %v4600
    %v4616 = vmul.f32 %v4544, %v4600
    %v4617 = vlaneseq
    %v4618 = vshrl.u32 %v4617, 7
    %v4619 = vsub.s32 1, %v4618
    %v4620 = vrot.slane %v273, %v4619
    %v4621 = vmul.f32 %v4601, %v4620
    %v4622 = vmul.f32 %v4602, %v4620
    %v4623 = vmul.f32 %v4603, %v4620
    %v4624 = vmul.f32 %v4604, %v4620
    %v4625 = vmul.f32 %v4605, %v4620
    %v4626 = vmul.f32 %v4606, %v4620
    %v4627 = vmul.f32 %v4607, %v4620
    %v4628 = vmul.f32 %v4608, %v4620
    %v4629 = vmul.f32 %v4609, %v4620
    %v4630 = vmul.f32 %v4610, %v4620
    %v4631 = vmul.f32 %v4611, %v4620
    %v4632 = vmul.f32 %v4612, %v4620
    %v4633 = vmul.f32 %v4613, %v4620
    %v4634 = vmul.f32 %v4614, %v4620
    %v4635 = vmul.f32 %v4615, %v4620
    %v4636 = vmul.f32 %v4616, %v4620
    %v4637 = vlaneseq
    %v4638 = vshrl.u32 %v4637, 7
    %v4639 = vsub.s32 2, %v4638
    %v4640 = vrot.slane %v273, %v4639
    %v4641 = vadd.f32 %v4621, %v4640
    %v4642 = vadd.f32 %v4622, %v4640
    %v4643 = vadd.f32 %v4623, %v4640
    %v4644 = vadd.f32 %v4624, %v4640
    %v4645 = vadd.f32 %v4625, %v4640
    %v4646 = vadd.f32 %v4626, %v4640
    %v4647 = vadd.f32 %v4627, %v4640
    %v4648 = vadd.f32 %v4628, %v4640
    %v4649 = vadd.f32 %v4629, %v4640
    %v4650 = vadd.f32 %v4630, %v4640
    %v4651 = vadd.f32 %v4631, %v4640
    %v4652 = vadd.f32 %v4632, %v4640
    %v4653 = vadd.f32 %v4633, %v4640
    %v4654 = vadd.f32 %v4634, %v4640
    %v4655 = vadd.f32 %v4635, %v4640
    %v4656 = vadd.f32 %v4636, %v4640
    %v4657 = vld [vmem:[%s16] sm:$0xff]
    %v4658 = vld [vmem:[%s16 + $0x8] sm:$0xff]
    %v4659 = vld [vmem:[%s16 + $0x10] sm:$0xff]
    %v4660 = vld [vmem:[%s16 + $0x18] sm:$0xff]
    %v4661 = vld [vmem:[%s17] sm:$0x1]
    %v4663 = vlaneseq
    %v4664 = vshrl.u32 %v4663, 7
    %v4665 = vsub.s32 0, %v4664
    %v4666 = vrot.slane %v4661, %v4665
    %v4669 = vsel %vm620, %v4641, 0
    %v4672 = vsel %vm620, %v4642, 0
    %v4675 = vsel %vm620, %v4643, 0
    %v4678 = vsel %vm620, %v4644, 0
    %v4681 = vsel %vm620, %v4645, 0
    %v4684 = vsel %vm620, %v4646, 0
    %v4687 = vsel %vm620, %v4647, 0
    %v4690 = vsel %vm620, %v4648, 0
    %v4693 = vsel %vm620, %v4649, 0
    %v4696 = vsel %vm620, %v4650, 0
    %v4699 = vsel %vm620, %v4651, 0
    %v4702 = vsel %vm620, %v4652, 0
    %v4705 = vsel %vm620, %v4653, 0
    %v4708 = vsel %vm620, %v4654, 0
    %v4711 = vsel %vm620, %v4655, 0
    %v4714 = vsel %vm620, %v4656, 0
    %4716 = vmatprep.subr.mxu0 0.0
    %4717 = vmatpush1.msra.mxu0 %v4657
    %4718 = vmatprep.subr.mxu0 0.0
    %4719 = vmatpush1.msra.mxu0 %v4658
    %4720 = vmatprep.subr.mxu0 0.0
    %4721 = vmatpush1.msra.mxu0 %v4659
    %4722 = vmatprep.subr.mxu0 0.0
    %4723 = vmatpush1.msra.mxu0 %v4660
    %4724 = vmatprep.subr.mxu0 0.0
    %4725 = vmatpush1.msra.mxu0 0.0
    %4726 = vmatprep.subr.mxu0 0.0
    %4727 = vmatpush1.msra.mxu0 0.0
    %4728 = vmatprep.subr.mxu0 0.0
    %4729 = vmatpush1.msra.mxu0 0.0
    %4730 = vmatprep.subr.mxu0 0.0
    %4731 = vmatpush1.msra.mxu0 0.0
    %4732 = vmatprep.subr.mxu0 0.0
    %4733 = vmatpush1.msra.mxu0 0.0
    %4734 = vmatprep.subr.mxu0 0.0
    %4735 = vmatpush1.msra.mxu0 0.0
    %4736 = vmatprep.subr.mxu0 0.0
    %4737 = vmatpush1.msra.mxu0 0.0
    %4738 = vmatprep.subr.mxu0 0.0
    %4739 = vmatpush1.msra.mxu0 0.0
    %4740 = vmatprep.subr.mxu0 0.0
    %4741 = vmatpush1.msra.mxu0 0.0
    %4742 = vmatprep.subr.mxu0 0.0
    %4743 = vmatpush1.msra.mxu0 0.0
    %4744 = vmatprep.subr.mxu0 0.0
    %4745 = vmatpush1.msra.mxu0 0.0
    %4746 = vmatprep.subr.mxu0 0.0
    %4747 = vmatpush1.msra.mxu0 0.0
    %4748 = vmatprep.subr.mxu0 0.0
    %4749 = vmatpush1.msra.mxu0 0.0
    %4750 = vmatprep.subr.mxu0 0.0
    %4751 = vmatpush1.msra.mxu0 0.0
    %4752 = vmatprep.subr.mxu0 0.0
    %4753 = vmatpush1.msra.mxu0 0.0
    %4754 = vmatprep.subr.mxu0 0.0
    %4755 = vmatpush1.msra.mxu0 0.0
    %4756 = vmatprep.subr.mxu0 0.0
    %4757 = vmatpush1.msra.mxu0 0.0
    %4758 = vmatprep.subr.mxu0 0.0
    %4759 = vmatpush1.msra.mxu0 0.0
    %4760 = vmatprep.subr.mxu0 0.0
    %4761 = vmatpush1.msra.mxu0 0.0
    %4762 = vmatprep.subr.mxu0 0.0
    %4763 = vmatpush1.msra.mxu0 0.0
    %4764 = vmatprep.subr.mxu0 0.0
    %4765 = vmatpush1.msra.mxu0 0.0
    %4766 = vmatprep.subr.mxu0 0.0
    %4767 = vmatpush1.msra.mxu0 0.0
    %4768 = vmatprep.subr.mxu0 0.0
    %4769 = vmatpush1.msra.mxu0 0.0
    %4770 = vmatprep.subr.mxu0 0.0
    %4771 = vmatpush1.msra.mxu0 0.0
    %4772 = vmatprep.subr.mxu0 0.0
    %4773 = vmatpush1.msra.mxu0 0.0
    %4774 = vmatprep.subr.mxu0 0.0
    %4775 = vmatpush1.msra.mxu0 0.0
    %4776 = vmatprep.subr.mxu0 0.0
    %4777 = vmatpush1.msra.mxu0 0.0
    %4778 = vmatprep.subr.mxu0 0.0
    %4779 = vmatpush1.msra.mxu0 0.0
    %4780 = vmatprep.mubr.f32.mxu0 0.0
    %4781 = vmatmul.mubr.f32.gmra.mrb[0].mxu0 %v4669
    %v4782 = vpop.f32.mrb[0].mxu0
    %v4783 = vadd.f32 %v4666, %v4782
    %v4784 = vpop.f32.mrb[0].mxu0
    %4785 = vmatprep.mubr.f32.mxu0 0.0
    %4786 = vmatmul.mubr.f32.gmra.mrb[0].mxu0 %v4672
    %v4787 = vpop.f32.mrb[0].mxu0
    %v4788 = vadd.f32 %v4666, %v4787
    %v4789 = vpop.f32.mrb[0].mxu0
    %4790 = vmatprep.mubr.f32.mxu0 0.0
    %4791 = vmatmul.mubr.f32.gmra.mrb[0].mxu0 %v4675
    %v4792 = vpop.f32.mrb[0].mxu0
    %v4793 = vadd.f32 %v4666, %v4792
    %v4794 = vpop.f32.mrb[0].mxu0
    %4795 = vmatprep.mubr.f32.mxu0 0.0
    %4796 = vmatmul.mubr.f32.gmra.mrb[0].mxu0 %v4678
    %v4797 = vpop.f32.mrb[0].mxu0
    %v4798 = vadd.f32 %v4666, %v4797
    %v4799 = vpop.f32.mrb[0].mxu0
    %4800 = vmatprep.mubr.f32.mxu0 0.0
    %4801 = vmatmul.mubr.f32.gmra.mrb[0].mxu0 %v4681
    %v4802 = vpop.f32.mrb[0].mxu0
    %v4803 = vadd.f32 %v4666, %v4802
    %v4804 = vpop.f32.mrb[0].mxu0
    %4805 = vmatprep.mubr.f32.mxu0 0.0
    %4806 = vmatmul.mubr.f32.gmra.mrb[0].mxu0 %v4684
    %v4807 = vpop.f32.mrb[0].mxu0
    %v4808 = vadd.f32 %v4666, %v4807
    %v4809 = vpop.f32.mrb[0].mxu0
    %4810 = vmatprep.mubr.f32.mxu0 0.0
    %4811 = vmatmul.mubr.f32.gmra.mrb[0].mxu0 %v4687
    %v4812 = vpop.f32.mrb[0].mxu0
    %v4813 = vadd.f32 %v4666, %v4812
    %v4814 = vpop.f32.mrb[0].mxu0
    %4815 = vmatprep.mubr.f32.mxu0 0.0
    %4816 = vmatmul.mubr.f32.gmra.mrb[0].mxu0 %v4690
    %v4817 = vpop.f32.mrb[0].mxu0
    %v4818 = vadd.f32 %v4666, %v4817
    %v4819 = vpop.f32.mrb[0].mxu0
    %4820 = vmatprep.mubr.f32.mxu0 0.0
    %4821 = vmatmul.mubr.f32.gmra.mrb[0].mxu0 %v4693
    %v4822 = vpop.f32.mrb[0].mxu0
    %v4823 = vadd.f32 %v4666, %v4822
    %v4824 = vpop.f32.mrb[0].mxu0
    %4825 = vmatprep.mubr.f32.mxu0 0.0
    %4826 = vmatmul.mubr.f32.gmra.mrb[0].mxu0 %v4696
    %v4827 = vpop.f32.mrb[0].mxu0
    %v4828 = vadd.f32 %v4666, %v4827
    %v4829 = vpop.f32.mrb[0].mxu0
    %4830 = vmatprep.mubr.f32.mxu0 0.0
    %4831 = vmatmul.mubr.f32.gmra.mrb[0].mxu0 %v4699
    %v4832 = vpop.f32.mrb[0].mxu0
    %v4833 = vadd.f32 %v4666, %v4832
    %v4834 = vpop.f32.mrb[0].mxu0
    %4835 = vmatprep.mubr.f32.mxu0 0.0
    %4836 = vmatmul.mubr.f32.gmra.mrb[0].mxu0 %v4702
    %v4837 = vpop.f32.mrb[0].mxu0
    %v4838 = vadd.f32 %v4666, %v4837
    %v4839 = vpop.f32.mrb[0].mxu0
    %4840 = vmatprep.mubr.f32.mxu0 0.0
    %4841 = vmatmul.mubr.f32.gmra.mrb[0].mxu0 %v4705
    %v4842 = vpop.f32.mrb[0].mxu0
    %v4843 = vadd.f32 %v4666, %v4842
    %v4844 = vpop.f32.mrb[0].mxu0
    %4845 = vmatprep.mubr.f32.mxu0 0.0
    %4846 = vmatmul.mubr.f32.gmra.mrb[0].mxu0 %v4708
    %v4847 = vpop.f32.mrb[0].mxu0
    %v4848 = vadd.f32 %v4666, %v4847
    %v4849 = vpop.f32.mrb[0].mxu0
    %4850 = vmatprep.mubr.f32.mxu0 0.0
    %4851 = vmatmul.mubr.f32.gmra.mrb[0].mxu0 %v4711
    %v4852 = vpop.f32.mrb[0].mxu0
    %v4853 = vadd.f32 %v4666, %v4852
    %v4854 = vpop.f32.mrb[0].mxu0
    %4855 = vmatprep.mubr.f32.mxu0 0.0
    %4856 = vmatmul.mubr.f32.gmra.mrb[0].mxu0 %v4714
    %v4857 = vpop.f32.mrb[0].mxu0
    %v4858 = vadd.f32 %v4666, %v4857
    %v4859 = vpop.f32.mrb[0].mxu0
    %4860 = vdwg.mxu0
    %v4861 = vmax.f32 %v4783, 0.0
    %v4862 = vmax.f32 %v4788, 0.0
    %v4863 = vmax.f32 %v4793, 0.0
    %v4864 = vmax.f32 %v4798, 0.0
    %v4865 = vmax.f32 %v4803, 0.0
    %v4866 = vmax.f32 %v4808, 0.0
    %v4867 = vmax.f32 %v4813, 0.0
    %v4868 = vmax.f32 %v4818, 0.0
    %v4869 = vmax.f32 %v4823, 0.0
    %v4870 = vmax.f32 %v4828, 0.0
    %v4871 = vmax.f32 %v4833, 0.0
    %v4872 = vmax.f32 %v4838, 0.0
    %v4873 = vmax.f32 %v4843, 0.0
    %v4874 = vmax.f32 %v4848, 0.0
    %v4875 = vmax.f32 %v4853, 0.0
    %v4876 = vmax.f32 %v4858, 0.0
    %v4877 = vld [vmem:[#allocation6] sm:$0x3]
    %4878 = vmatprep.subr.mxu0 0.0
    %4879 = vmatpush1.msra.mxu0 %v4861
    %4880 = vmatprep.subr.mxu0 0.0
    %4881 = vmatpush1.msra.mxu0 %v4862
    %4882 = vmatprep.subr.mxu0 0.0
    %4883 = vmatpush1.msra.mxu0 %v4863
    %4884 = vmatprep.subr.mxu0 0.0
    %4885 = vmatpush1.msra.mxu0 %v4864
    %4886 = vmatprep.subr.mxu0 0.0
    %4887 = vmatpush1.msra.mxu0 %v4865
    %4888 = vmatprep.subr.mxu0 0.0
    %4889 = vmatpush1.msra.mxu0 %v4866
    %4890 = vmatprep.subr.mxu0 0.0
    %4891 = vmatpush1.msra.mxu0 %v4867
    %4892 = vmatprep.subr.mxu0 0.0
    %4893 = vmatpush1.msra.mxu0 %v4868
    %4894 = vmatprep.subr.mxu0 0.0
    %4895 = vmatpush1.msra.mxu0 %v4869
    %4896 = vmatprep.subr.mxu0 0.0
    %4897 = vmatpush1.msra.mxu0 %v4870
    %4898 = vmatprep.subr.mxu0 0.0
    %4899 = vmatpush1.msra.mxu0 %v4871
    %4900 = vmatprep.subr.mxu0 0.0
    %4901 = vmatpush1.msra.mxu0 %v4872
    %4902 = vmatprep.subr.mxu0 0.0
    %4903 = vmatpush1.msra.mxu0 %v4873
    %4904 = vmatprep.subr.mxu0 0.0
    %4905 = vmatpush1.msra.mxu0 %v4874
    %4906 = vmatprep.subr.mxu0 0.0
    %4907 = vmatpush1.msra.mxu0 %v4875
    %4908 = vmatprep.subr.mxu0 0.0
    %4909 = vmatpush1.msra.mxu0 %v4876
    %4910 = vmatprep.subr.mxu0 0.0
    %4911 = vmatpush1.msra.mxu0 0.0
    %4912 = vmatprep.subr.mxu0 0.0
    %4913 = vmatpush1.msra.mxu0 0.0
    %4914 = vmatprep.subr.mxu0 0.0
    %4915 = vmatpush1.msra.mxu0 0.0
    %4916 = vmatprep.subr.mxu0 0.0
    %4917 = vmatpush1.msra.mxu0 0.0
    %4918 = vmatprep.subr.mxu0 0.0
    %4919 = vmatpush1.msra.mxu0 0.0
    %4920 = vmatprep.subr.mxu0 0.0
    %4921 = vmatpush1.msra.mxu0 0.0
    %4922 = vmatprep.subr.mxu0 0.0
    %4923 = vmatpush1.msra.mxu0 0.0
    %4924 = vmatprep.subr.mxu0 0.0
    %4925 = vmatpush1.msra.mxu0 0.0
    %4926 = vmatprep.subr.mxu0 0.0
    %4927 = vmatpush1.msra.mxu0 0.0
    %4928 = vmatprep.subr.mxu0 0.0
    %4929 = vmatpush1.msra.mxu0 0.0
    %4930 = vmatprep.subr.mxu0 0.0
    %4931 = vmatpush1.msra.mxu0 0.0
    %4932 = vmatprep.subr.mxu0 0.0
    %4933 = vmatpush1.msra.mxu0 0.0
    %4934 = vmatprep.subr.mxu0 0.0
    %4935 = vmatpush1.msra.mxu0 0.0
    %4936 = vmatprep.subr.mxu0 0.0
    %4937 = vmatpush1.msra.mxu0 0.0
    %4938 = vmatprep.subr.mxu0 0.0
    %4939 = vmatpush1.msra.mxu0 0.0
    %4940 = vmatprep.subr.mxu0 0.0
    %4941 = vmatpush1.msra.mxu0 0.0
    %4942 = vmatprep.mubr.f32.mxu0 0.0
    %4943 = vmatmul.mubr.f32.gmra.mrb[0].mxu0 %v4877
    %v4944 = vpop.f32.mrb[0].mxu0
    %v4945 = vadd.f32 0.0, %v4944
    %v4946 = vpop.f32.mrb[0].mxu0
    %4947 = vdwg.mxu0
    %v4948 = vld [vmem:[%s18] sm:$0xff]
    %v4949 = vld [vmem:[%s18 + $0x8] sm:$0xff]
    %v4950 = vld [vmem:[%s19] sm:$0x1]
    %v4952 = vlaneseq
    %v4953 = vshrl.u32 %v4952, 7
    %v4954 = vsub.s32 0, %v4953
    %v4955 = vrot.slane %v4950, %v4954
    %v4958 = vsel %vm2009, %v4945, 0
    %4960 = vmatprep.subr.mxu0 0.0
    %4961 = vmatpush1.msra.mxu0 %v4948
    %4962 = vmatprep.subr.mxu0 0.0
    %4963 = vmatpush1.msra.mxu0 %v4949
    %4964 = vmatprep.subr.mxu0 0.0
    %4965 = vmatpush1.msra.mxu0 0.0
    %4966 = vmatprep.subr.mxu0 0.0
    %4967 = vmatpush1.msra.mxu0 0.0
    %4968 = vmatprep.subr.mxu0 0.0
    %4969 = vmatpush1.msra.mxu0 0.0
    %4970 = vmatprep.subr.mxu0 0.0
    %4971 = vmatpush1.msra.mxu0 0.0
    %4972 = vmatprep.subr.mxu0 0.0
    %4973 = vmatpush1.msra.mxu0 0.0
    %4974 = vmatprep.subr.mxu0 0.0
    %4975 = vmatpush1.msra.mxu0 0.0
    %4976 = vmatprep.subr.mxu0 0.0
    %4977 = vmatpush1.msra.mxu0 0.0
    %4978 = vmatprep.subr.mxu0 0.0
    %4979 = vmatpush1.msra.mxu0 0.0
    %4980 = vmatprep.subr.mxu0 0.0
    %4981 = vmatpush1.msra.mxu0 0.0
    %4982 = vmatprep.subr.mxu0 0.0
    %4983 = vmatpush1.msra.mxu0 0.0
    %4984 = vmatprep.subr.mxu0 0.0
    %4985 = vmatpush1.msra.mxu0 0.0
    %4986 = vmatprep.subr.mxu0 0.0
    %4987 = vmatpush1.msra.mxu0 0.0
    %4988 = vmatprep.subr.mxu0 0.0
    %4989 = vmatpush1.msra.mxu0 0.0
    %4990 = vmatprep.subr.mxu0 0.0
    %4991 = vmatpush1.msra.mxu0 0.0
    %4992 = vmatprep.subr.mxu0 0.0
    %4993 = vmatpush1.msra.mxu0 0.0
    %4994 = vmatprep.subr.mxu0 0.0
    %4995 = vmatpush1.msra.mxu0 0.0
    %4996 = vmatprep.subr.mxu0 0.0
    %4997 = vmatpush1.msra.mxu0 0.0
    %4998 = vmatprep.subr.mxu0 0.0
    %4999 = vmatpush1.msra.mxu0 0.0
    %5000 = vmatprep.subr.mxu0 0.0
    %5001 = vmatpush1.msra.mxu0 0.0
    %5002 = vmatprep.subr.mxu0 0.0
    %5003 = vmatpush1.msra.mxu0 0.0
    %5004 = vmatprep.subr.mxu0 0.0
    %5005 = vmatpush1.msra.mxu0 0.0
    %5006 = vmatprep.subr.mxu0 0.0
    %5007 = vmatpush1.msra.mxu0 0.0
    %5008 = vmatprep.subr.mxu0 0.0
    %5009 = vmatpush1.msra.mxu0 0.0
    %5010 = vmatprep.subr.mxu0 0.0
    %5011 = vmatpush1.msra.mxu0 0.0
    %5012 = vmatprep.subr.mxu0 0.0
    %5013 = vmatpush1.msra.mxu0 0.0
    %5014 = vmatprep.subr.mxu0 0.0
    %5015 = vmatpush1.msra.mxu0 0.0
    %5016 = vmatprep.subr.mxu0 0.0
    %5017 = vmatpush1.msra.mxu0 0.0
    %5018 = vmatprep.subr.mxu0 0.0
    %5019 = vmatpush1.msra.mxu0 0.0
    %5020 = vmatprep.subr.mxu0 0.0
    %5021 = vmatpush1.msra.mxu0 0.0
    %5022 = vmatprep.subr.mxu0 0.0
    %5023 = vmatpush1.msra.mxu0 0.0
    %5024 = vmatprep.mubr.f32.mxu0 0.0
    %5025 = vmatmul.mubr.f32.gmra.mrb[0].mxu0 %v4958
    %v5026 = vpop.f32.mrb[0].mxu0
    %v5027 = vadd.f32 %v4955, %v5026
    %v5028 = vpop.f32.mrb[0].mxu0
    %5029 = vdwg.mxu0
    %vm5030 = vcmask 17408
    %5031 = vst.msk [vmem:[#allocation18] sm:$0x3] %vm5030, %v5027
    // Predicated region
    $region118: #{tpu_custom_call.1} parent=1 // pred_check
      _
    $region119: #{tpu_custom_call.1} parent=1 // pred_check_branch
      %5033 = sbr.rel (0) target = $region121
    $region120: #{tpu_custom_call.1} parent=1 // pred_region
      %s5035 = ssub.s32 32, 32
      %5036 = vsyncadd [#allocation4], %s5035
      %s5038 = sshll.u32 [#allocation18], 4
      %s5039 = int_to_ptr.vmem [resolvable:$true] %s5038
      %5041 = dma.vmem_to_hbm [thread:$0]  %s5039, 32, %s20, [#allocation4]
    $region121: #{tpu_custom_call.1} parent=1 // pred_fallthru
      _
    // Predicated region
    $region122: #{tpu_custom_call.1} parent=1 // pred_check
      _
    $region123: #{tpu_custom_call.1} parent=1 // pred_check_branch
      %5043 = sbr.rel (0) target = $region125
    $region124: #{tpu_custom_call.1} parent=1 // pred_region
      %5044 = dma.done [#allocation4], 32
    $region125: #{tpu_custom_call.1} parent=1 // pred_fallthru
      _
    %5045 = vsyncpa [#allocation3], 1
    %5046 = vsyncpa [#allocation8], 1
    %5047 = vsyncpa [#allocation11], 1
    %5048 = vsyncpa [#allocation14], 1
    %5049 = vsyncpa [#allocation17], 1
    %5050 = vsyncpa [#allocation4], 1
    %5051 = vsyncpa [#allocation5], 1

</llo_original>
